<compile_context>
chip_gen: v7x
topology: tpu7x:2x2x1
jax: 0.10.0
libtpu: 0.0.40
codegen_flags: <defaults>
</compile_context>

<pallas_src>
import functools

import jax
import jax.numpy as jnp
import numpy as np
from jax import lax
from jax.experimental import pallas as pl
from jax.experimental.pallas import tpu as pltpu

LANES = 128  # lane width of every conv/BN/skip slab in this layout


# ----------------------------------------------------------- lane layouts

def _natural_map(W, C):
    """lane(w, c) = w*C + c."""
    return (np.arange(W)[:, None] * C + np.arange(C)[None, :]).astype(np.int32)


def _swizzled_map(W, C):
    """lane(w, c) = (w%2)*(W/2*C) + (w//2)*C + c.

    Even-w pixels occupy lanes [0, 64), odd-w pixels lanes [64, 128), so the
    2x2 maxpool's horizontal compaction is a 64-lane roll + prefix slice and
    the pooled result lands in the *natural* (wo*C + c) order automatically.
    """
    w = np.arange(W)[:, None]
    c = np.arange(C)[None, :]
    return ((w % 2) * ((W // 2) * C) + (w // 2) * C + c).astype(np.int32)


# ------------------------------------------------------ weight repacking

def _pack_conv(w_hwio, b, W, in_map, out_map):
    """Pack a 3x3 HWIO conv into a banded (3*128, 128) matmul weight.

    Row space: three 128-lane chunks (dy = -1, 0, +1 row shifts of the input
    slab).  Column space: the output lane map.  The dx taps, the horizontal
    zero padding and any unused / junk input lanes are all encoded as the
    band structure / zero rows of this matrix.
    """
    w_np = np.asarray(w_hwio, np.float32)          # (3, 3, Cin, Cout)
    b_np = np.asarray(b, np.float32)
    cout = w_np.shape[3]
    wb = np.zeros((3 * LANES, LANES), np.float32)
    for ky in range(3):                            # dy = ky - 1 -> col chunk ky
        for kx in range(3):                        # dx = kx - 1
            dx = kx - 1
            for wo in range(W):
                wi = wo + dx
                if wi < 0 or wi >= W:
                    continue                       # horizontal zero padding
                rows = ky * LANES + in_map[wi]     # (Cin,)
                cols = out_map[wo]                 # (Cout,)
                wb[np.ix_(rows, cols)] = w_np[ky, kx]
    b_l = np.zeros((1, LANES), np.float32)
    b_l[0, out_map] = np.broadcast_to(b_np, (W, cout))
    return wb, b_l


def pack_encoder_params(params, in_channels, cplx, W0):
    """Repack HWIO conv weights / BN params into the kernel's lane layout."""
    assert LANES % W0 == 0 and in_channels <= LANES // W0, \
        "block-1 input must fit into 128 lanes as (W, Cin_pad)"
    packed = []
    w_sp = W0
    cin = in_channels
    for b, p in enumerate(params):
        cout = p["w1"].shape[-1]
        assert w_sp * cout == LANES, "layout requires W*Cout == 128 per block"
        if b == 0:
            # input padded host-side to Cin_pad = 128 // W channels
            in_map = _natural_map(w_sp, LANES // w_sp)[:, :cin]
        else:
            # previous block's pooled slab: valid lanes [0, W*Cin) natural;
            # lanes [64, 128) are junk and get zero weight rows here.
            in_map = _natural_map(w_sp, cin)
        mid_map = _natural_map(w_sp, cout)         # conv1 out / conv2 in
        out_map = _swizzled_map(w_sp, cout)        # conv2 out (pool-friendly)

        w1, b1 = _pack_conv(p["w1"], p["b1"], w_sp, in_map, mid_map)
        w2, b2 = _pack_conv(p["w2"], p["b2"], w_sp, mid_map, out_map)
        g = np.zeros((1, LANES), np.float32)
        be = np.zeros((1, LANES), np.float32)
        g[0, out_map] = np.broadcast_to(np.asarray(p["gamma"], np.float32),
                                        (w_sp, cout))
        be[0, out_map] = np.broadcast_to(np.asarray(p["beta"], np.float32),
                                         (w_sp, cout))
        packed.append(dict(
            w1=jnp.asarray(w1, jnp.bfloat16),      # weights at rest in bf16
            b1=jnp.asarray(b1),
            w2=jnp.asarray(w2, jnp.bfloat16),
            b2=jnp.asarray(b2),
            gamma=jnp.asarray(g),
            beta=jnp.asarray(be)))
        cin = cout
        w_sp //= 2
    return packed


# ------------------------------------------------------------------ kernel

def _make_encoder_kernel(N, dims):
    """Fused conv->conv->BN->pool for all blocks; dims = [(H, W, Cout), ...]."""
    n_blocks = len(dims)

    def kernel(*refs):
        x_ref = refs[0]
        prm = refs[1:1 + 6 * n_blocks]
        outs = refs[1 + 6 * n_blocks:]             # skip1..skipN, mp_last

        cur = x_ref[...].astype(jnp.float32)       # (N*H0, 128)

        for b, (H, W, C) in enumerate(dims):
            w1, b1, w2, b2, g, be = prm[6 * b:6 * b + 6]
            NH = N * H

            # per-row (sublane) validity masks for the dy = -1 / +1 taps;
            # they also kill any wrap across image boundaries.
            row = lax.broadcasted_iota(jnp.int32, (NH, 1), 0)
            h = row % H
            up_ok = (h >= 1).astype(jnp.float32)
            dn_ok = (h <= H - 2).astype(jnp.float32)

            def conv(v, w_ref, b_ref):
                # Three 128-lane aligned chunks (dy = -1, 0, +1); dx and the
                # horizontal padding live in the banded weight.  jnp.roll by
                # +/-1 row = a single small sublane rotation on dense vregs.
                up = jnp.roll(v, 1, axis=0) * up_ok
                dn = jnp.roll(v, -1, axis=0) * dn_ok
                col = jnp.concatenate([up, v, dn], axis=1).astype(jnp.bfloat16)
                return jnp.dot(col, w_ref[...],
                               preferred_element_type=jnp.float32) + b_ref[...]

            y = conv(cur, w1, b1)                  # conv1: natural lanes
            y = conv(y, w2, b2)                    # conv2: swizzled lanes

            # ---- BatchNorm2d (training-mode batch stats, eps=1e-5).
            # Per-channel sums: row reduction + log2(W) lane-roll tree
            # (lanes with equal index mod C hold the same channel).
            cnt = float(N * H * W)
            s = jnp.sum(y, axis=0, keepdims=True)
            k = C
            while k < LANES:
                s = s + jnp.roll(s, k, axis=1)
                k *= 2
            mean = s * (1.0 / cnt)
            xc = y - mean
            s2 = jnp.sum(xc * xc, axis=0, keepdims=True)
            k = C
            while k < LANES:
                s2 = s2 + jnp.roll(s2, k, axis=1)
                k *= 2
            var = s2 * (1.0 / cnt)
            yn = xc * lax.rsqrt(var + 1e-5) * g[...] + be[...]

            skip_ref = outs[b]
            skip_ref[...] = yn.astype(skip_ref.dtype)

            # ---- MaxPool2d(2), bit-exact (no MXU):
            # rows: strided copy-gather of even/odd rows from the skip ref;
            # lanes: 64-lane roll pairs even-w with odd-w (swizzled layout),
            #        valid pooled values land in lanes [0, 64) natural order.
            NHo = NH // 2
            even = skip_ref[pl.ds(0, NHo, stride=2), :]
            odd = skip_ref[pl.ds(1, NHo, stride=2), :]
            rowmax = jnp.maximum(even, odd)
            cur = jnp.maximum(rowmax, jnp.roll(rowmax, -(LANES // 2), axis=1))
            # lanes [64, 128) of `cur` are junk; the next block's banded
            # weight has zero rows there (or they are sliced off for mp4).

        outs[n_blocks][...] = cur[:, :LANES // 2].astype(outs[n_blocks].dtype)

    return kernel


# ----------------------------------------------------------------- wrapper

def encoder_forward(packed, x_nhwc, *, cplx):
    """Reproduces Encoder.forward: returns (mp4, [block1..block4] skips), NHWC."""
    N, H, W, cin = x_nhwc.shape
    n_blocks = len(packed)
    dims = [(H >> b, W >> b, cplx << b) for b in range(n_blocks)]

    # block-1 input: pad channels so W * Cin_pad == 128 lanes, flatten rows.
    cin_pad = LANES // W
    x_pad = jnp.pad(x_nhwc, ((0, 0), (0, 0), (0, 0), (0, cin_pad - cin)))
    x_flat = x_pad.reshape(N * H, W * cin_pad).astype(jnp.float32)

    inputs = [x_flat]
    in_specs = [pl.BlockSpec(x_flat.shape, lambda i: (0, 0))]
    for pk in packed:
        for name in ("w1", "b1", "w2", "b2", "gamma", "beta"):
            arr = pk[name]
            inputs.append(arr)
            in_specs.append(pl.BlockSpec(arr.shape, lambda i: (0, 0)))

    h_l, w_l, c_l = dims[-1]
    out_shape = tuple(
        [jax.ShapeDtypeStruct((N * h, LANES), jnp.float32) for (h, w, c) in dims]
        + [jax.ShapeDtypeStruct((N * (h_l // 2), LANES // 2), jnp.float32)])
    out_specs = tuple(pl.BlockSpec(s.shape, lambda i: (0, 0)) for s in out_shape)

    kernel = _make_encoder_kernel(N, dims)
    results = pl.pallas_call(
        kernel,
        out_shape=out_shape,
        grid=(1,),
        in_specs=in_specs,
        out_specs=out_specs,
        compiler_params=pltpu.CompilerParams(
            dimension_semantics=("arbitrary",)),
    )(*inputs)

    # un-swizzle the skips back to NHWC (cheap XLA-side layout plumbing).
    skips = []
    for (h, w, c), raw in zip(dims, results[:n_blocks]):
        s = raw.reshape(N, h, 2, w // 2, c).transpose(0, 1, 3, 2, 4)
        skips.append(s.reshape(N, h, w, c))
    mp4 = results[n_blocks].reshape(N, h_l // 2, w_l // 2, c_l)
    return mp4, skips


# ----------------------------------------------------------------- params

def init_encoder_params(key, in_channels, cplx, dtype=jnp.float32):
    """Deterministic synthetic parameters (shapes match the PyTorch module)."""
    chans = [(in_channels, cplx), (cplx, cplx * 2),
             (cplx * 2, cplx * 4), (cplx * 4, cplx * 8)]
    params = []
    for cin, cout in chans:
        key, k1, k2, k3, k4, k5, k6 = jax.random.split(key, 7)
        params.append(dict(
            w1=jax.random.normal(k1, (3, 3, cin, cout), dtype) * 0.1,   # HWIO
            b1=jax.random.normal(k2, (cout,), dtype) * 0.1,
            w2=jax.random.normal(k3, (3, 3, cout, cout), dtype) * 0.1,  # HWIO
            b2=jax.random.normal(k4, (cout,), dtype) * 0.1,
            gamma=1.0 + jax.random.normal(k5, (cout,), dtype) * 0.1,
            beta=jax.random.normal(k6, (cout,), dtype) * 0.1,
        ))
    return params


def encoder_reference(params, x_nhwc):
    """Pure-JAX (XLA) reference with identical semantics, for validation."""
    dn = ("NHWC", "HWIO", "NHWC")
    skips = []
    x = x_nhwc
    for p in params:
        y = lax.conv_general_dilated(x, p["w1"], (1, 1), [(1, 1), (1, 1)],
                                     dimension_numbers=dn) + p["b1"]
        y = lax.conv_general_dilated(y, p["w2"], (1, 1), [(1, 1), (1, 1)],
                                     dimension_numbers=dn) + p["b2"]
        mean = jnp.mean(y, axis=(0, 1, 2))
        var = jnp.mean((y - mean) ** 2, axis=(0, 1, 2))
        y = (y - mean) * lax.rsqrt(var + 1e-5) * p["gamma"] + p["beta"]
        skips.append(y)
        n, hh, ww, c = y.shape
        x = jnp.max(y.reshape(n, hh // 2, 2, ww // 2, 2, c), axis=(2, 4))
    return x, skips


# --------------------------------------------------------------------- main

if __name__ == "__main__":
    in_channels = 4
    cplx = 8                       # "complex" arg of the PyTorch module
    N, H, W = 2, 16, 16

    key = jax.random.PRNGKey(0)
    key, kx = jax.random.split(key)
    # PyTorch-convention input (NCHW), moved to the kernel layout (NHWC).
    x_nchw = jax.random.normal(kx, (N, in_channels, H, W), jnp.float32)
    x_nhwc = jnp.transpose(x_nchw, (0, 2, 3, 1))

    params = init_encoder_params(key, in_channels, cplx)
    packed = pack_encoder_params(params, in_channels, cplx, W)

    fwd = jax.jit(functools.partial(encoder_forward, cplx=cplx))
    mp4, skips = fwd(packed, x_nhwc)
    mp4 = jax.block_until_ready(mp4)
    skips = [jax.block_until_ready(s) for s in skips]

    # Shape checks (NHWC): mp4 (2,1,1,64); skips (2,16,16,8), (2,8,8,16), ...
    assert mp4.shape == (N, H // 16, W // 16, cplx * 8)
    expected = [(N, H, W, cplx), (N, H // 2, W // 2, cplx * 2),
                (N, H // 4, W // 4, cplx * 4), (N, H // 8, W // 8, cplx * 8)]
    assert [s.shape for s in skips] == expected

    # Numerics vs a pure-JAX f32 reference.  Loose tolerance: the conv
    # matmuls deliberately feed the MXU bf16 (f32 accumulation).
    mp4_ref, skips_ref = jax.jit(encoder_reference)(params, x_nhwc)
    np.testing.assert_allclose(np.asarray(mp4), np.asarray(mp4_ref),
                               rtol=1e-1, atol=1e-1)
    for got, ref in zip(skips, skips_ref):
        np.testing.assert_allclose(np.asarray(got), np.asarray(ref),
                                   rtol=1e-1, atol=1e-1)

    print("KERNEL_OK")
</pallas_src>

<mosaic_0001>
module attributes {stable_mosaic.version = 11 : i64} {
  func.func @kernel(%arg0: i32, %arg1: memref<32x128xf32, #tpu.memory_space<vmem>>, %arg2: memref<384x128xbf16, #tpu.memory_space<vmem>>, %arg3: memref<1x128xf32, #tpu.memory_space<vmem>>, %arg4: memref<384x128xbf16, #tpu.memory_space<vmem>>, %arg5: memref<1x128xf32, #tpu.memory_space<vmem>>, %arg6: memref<1x128xf32, #tpu.memory_space<vmem>>, %arg7: memref<1x128xf32, #tpu.memory_space<vmem>>, %arg8: memref<384x128xbf16, #tpu.memory_space<vmem>>, %arg9: memref<1x128xf32, #tpu.memory_space<vmem>>, %arg10: memref<384x128xbf16, #tpu.memory_space<vmem>>, %arg11: memref<1x128xf32, #tpu.memory_space<vmem>>, %arg12: memref<1x128xf32, #tpu.memory_space<vmem>>, %arg13: memref<1x128xf32, #tpu.memory_space<vmem>>, %arg14: memref<384x128xbf16, #tpu.memory_space<vmem>>, %arg15: memref<1x128xf32, #tpu.memory_space<vmem>>, %arg16: memref<384x128xbf16, #tpu.memory_space<vmem>>, %arg17: memref<1x128xf32, #tpu.memory_space<vmem>>, %arg18: memref<1x128xf32, #tpu.memory_space<vmem>>, %arg19: memref<1x128xf32, #tpu.memory_space<vmem>>, %arg20: memref<384x128xbf16, #tpu.memory_space<vmem>>, %arg21: memref<1x128xf32, #tpu.memory_space<vmem>>, %arg22: memref<384x128xbf16, #tpu.memory_space<vmem>>, %arg23: memref<1x128xf32, #tpu.memory_space<vmem>>, %arg24: memref<1x128xf32, #tpu.memory_space<vmem>>, %arg25: memref<1x128xf32, #tpu.memory_space<vmem>>, %arg26: memref<32x128xf32, #tpu.memory_space<vmem>>, %arg27: memref<16x128xf32, #tpu.memory_space<vmem>>, %arg28: memref<8x128xf32, #tpu.memory_space<vmem>>, %arg29: memref<4x128xf32, #tpu.memory_space<vmem>>, %arg30: memref<2x64xf32, #tpu.memory_space<vmem>>) attributes {dimension_semantics = [#tpu.dimension_semantics<arbitrary>], iteration_bounds = array<i64: 1>, scalar_prefetch = 0 : i64, scratch_operands = 0 : i64, tpu.core_type = #tpu.core_type<tc>, window_params = [{pipeline_mode = #tpu.pipeline_mode<synchronous>, transform_indices = @transform_0, window_bounds = array<i64: 32, 128>}, {pipeline_mode = #tpu.pipeline_mode<synchronous>, transform_indices = @transform_1, window_bounds = array<i64: 384, 128>}, {pipeline_mode = #tpu.pipeline_mode<synchronous>, transform_indices = @transform_2, window_bounds = array<i64: 1, 128>}, {pipeline_mode = #tpu.pipeline_mode<synchronous>, transform_indices = @transform_3, window_bounds = array<i64: 384, 128>}, {pipeline_mode = #tpu.pipeline_mode<synchronous>, transform_indices = @transform_4, window_bounds = array<i64: 1, 128>}, {pipeline_mode = #tpu.pipeline_mode<synchronous>, transform_indices = @transform_5, window_bounds = array<i64: 1, 128>}, {pipeline_mode = #tpu.pipeline_mode<synchronous>, transform_indices = @transform_6, window_bounds = array<i64: 1, 128>}, {pipeline_mode = #tpu.pipeline_mode<synchronous>, transform_indices = @transform_7, window_bounds = array<i64: 384, 128>}, {pipeline_mode = #tpu.pipeline_mode<synchronous>, transform_indices = @transform_8, window_bounds = array<i64: 1, 128>}, {pipeline_mode = #tpu.pipeline_mode<synchronous>, transform_indices = @transform_9, window_bounds = array<i64: 384, 128>}, {pipeline_mode = #tpu.pipeline_mode<synchronous>, transform_indices = @transform_10, window_bounds = array<i64: 1, 128>}, {pipeline_mode = #tpu.pipeline_mode<synchronous>, transform_indices = @transform_11, window_bounds = array<i64: 1, 128>}, {pipeline_mode = #tpu.pipeline_mode<synchronous>, transform_indices = @transform_12, window_bounds = array<i64: 1, 128>}, {pipeline_mode = #tpu.pipeline_mode<synchronous>, transform_indices = @transform_13, window_bounds = array<i64: 384, 128>}, {pipeline_mode = #tpu.pipeline_mode<synchronous>, transform_indices = @transform_14, window_bounds = array<i64: 1, 128>}, {pipeline_mode = #tpu.pipeline_mode<synchronous>, transform_indices = @transform_15, window_bounds = array<i64: 384, 128>}, {pipeline_mode = #tpu.pipeline_mode<synchronous>, transform_indices = @transform_16, window_bounds = array<i64: 1, 128>}, {pipeline_mode = #tpu.pipeline_mode<synchronous>, transform_indices = @transform_17, window_bounds = array<i64: 1, 128>}, {pipeline_mode = #tpu.pipeline_mode<synchronous>, transform_indices = @transform_18, window_bounds = array<i64: 1, 128>}, {pipeline_mode = #tpu.pipeline_mode<synchronous>, transform_indices = @transform_19, window_bounds = array<i64: 384, 128>}, {pipeline_mode = #tpu.pipeline_mode<synchronous>, transform_indices = @transform_20, window_bounds = array<i64: 1, 128>}, {pipeline_mode = #tpu.pipeline_mode<synchronous>, transform_indices = @transform_21, window_bounds = array<i64: 384, 128>}, {pipeline_mode = #tpu.pipeline_mode<synchronous>, transform_indices = @transform_22, window_bounds = array<i64: 1, 128>}, {pipeline_mode = #tpu.pipeline_mode<synchronous>, transform_indices = @transform_23, window_bounds = array<i64: 1, 128>}, {pipeline_mode = #tpu.pipeline_mode<synchronous>, transform_indices = @transform_24, window_bounds = array<i64: 1, 128>}, {pipeline_mode = #tpu.pipeline_mode<synchronous>, transform_indices = @transform_25, window_bounds = array<i64: 32, 128>}, {pipeline_mode = #tpu.pipeline_mode<synchronous>, transform_indices = @transform_26, window_bounds = array<i64: 16, 128>}, {pipeline_mode = #tpu.pipeline_mode<synchronous>, transform_indices = @transform_27, window_bounds = array<i64: 8, 128>}, {pipeline_mode = #tpu.pipeline_mode<synchronous>, transform_indices = @transform_28, window_bounds = array<i64: 4, 128>}, {pipeline_mode = #tpu.pipeline_mode<synchronous>, transform_indices = @transform_29, window_bounds = array<i64: 2, 64>}]} {
    %c0 = arith.constant 0 : index
    %c0_0 = arith.constant 0 : index
    %0 = vector.load %arg1[%c0, %c0_0] : memref<32x128xf32, #tpu.memory_space<vmem>>, vector<32x128xf32>
    %1 = tpu.iota {dimensions = array<i32: 0>} : vector<32x1xi32>
    %c16_i32 = arith.constant 16 : i32
    %c0_i32 = arith.constant 0 : i32
    %2 = arith.cmpi eq, %c16_i32, %c0_i32 : i32
    %c1_i32 = arith.constant 1 : i32
    %3 = arith.select %2, %c1_i32, %c16_i32 : i32
    %4 = vector.broadcast %3 : i32 to vector<32x1xi32>
    %5 = arith.remsi %1, %4 : vector<32x1xi32>
    %c0_i32_1 = arith.constant 0 : i32
    %6 = vector.broadcast %c0_i32_1 : i32 to vector<32x1xi32>
    %7 = arith.cmpi ne, %5, %6 : vector<32x1xi32>
    %c0_i32_2 = arith.constant 0 : i32
    %8 = vector.broadcast %c0_i32_2 : i32 to vector<32x1xi32>
    %9 = arith.cmpi slt, %5, %8 : vector<32x1xi32>
    %c0_i32_3 = arith.constant 0 : i32
    %10 = arith.cmpi slt, %3, %c0_i32_3 : i32
    %11 = vector.broadcast %10 : i1 to vector<32x1xi1>
    %12 = vector.broadcast %11 : vector<32x1xi1> to vector<32x1xi1>
    %13 = arith.xori %9, %12 : vector<32x1xi1>
    %14 = arith.andi %13, %7 : vector<32x1xi1>
    %15 = vector.broadcast %3 : i32 to vector<32x1xi32>
    %16 = arith.addi %5, %15 : vector<32x1xi32>
    %17 = arith.select %14, %16, %5 : vector<32x1xi1>, vector<32x1xi32>
    %c1_i32_4 = arith.constant 1 : i32
    %18 = vector.broadcast %c1_i32_4 : i32 to vector<32x1xi32>
    %19 = arith.cmpi sge, %17, %18 : vector<32x1xi32>
    %20 = arith.extui %19 : vector<32x1xi1> to vector<32x1xi32>
    %21 = arith.sitofp %20 : vector<32x1xi32> to vector<32x1xf32>
    %c14_i32 = arith.constant 14 : i32
    %22 = vector.broadcast %c14_i32 : i32 to vector<32x1xi32>
    %23 = arith.cmpi sle, %17, %22 : vector<32x1xi32>
    %24 = arith.extui %23 : vector<32x1xi1> to vector<32x1xi32>
    %25 = arith.sitofp %24 : vector<32x1xi32> to vector<32x1xf32>
    %26 = vector.extract_strided_slice %0 {offsets = [31, 0], sizes = [1, 128], strides = [1, 1]} : vector<32x128xf32> to vector<1x128xf32>
    %27 = vector.extract_strided_slice %0 {offsets = [0, 0], sizes = [31, 128], strides = [1, 1]} : vector<32x128xf32> to vector<31x128xf32>
    %28 = tpu.concatenate %26, %27 in 0 : vector<1x128xf32>, vector<31x128xf32> -> vector<32x128xf32>
    %29 = vector.broadcast %21 : vector<32x1xf32> to vector<32x128xf32>
    %30 = arith.mulf %28, %29 : vector<32x128xf32>
    %31 = vector.extract_strided_slice %0 {offsets = [1, 0], sizes = [31, 128], strides = [1, 1]} : vector<32x128xf32> to vector<31x128xf32>
    %32 = vector.extract_strided_slice %0 {offsets = [0, 0], sizes = [1, 128], strides = [1, 1]} : vector<32x128xf32> to vector<1x128xf32>
    %33 = tpu.concatenate %31, %32 in 0 : vector<31x128xf32>, vector<1x128xf32> -> vector<32x128xf32>
    %34 = vector.broadcast %25 : vector<32x1xf32> to vector<32x128xf32>
    %35 = arith.mulf %33, %34 : vector<32x128xf32>
    %36 = tpu.concatenate %30, %0, %35 in 1 : vector<32x128xf32>, vector<32x128xf32>, vector<32x128xf32> -> vector<32x384xf32>
    %37 = arith.truncf %36 : vector<32x384xf32> to vector<32x384xbf16>
    %c0_5 = arith.constant 0 : index
    %c0_6 = arith.constant 0 : index
    %38 = vector.load %arg2[%c0_5, %c0_6] : memref<384x128xbf16, #tpu.memory_space<vmem>>, vector<384x128xbf16>
    %cst = arith.constant dense<0.000000e+00> : vector<32x128xf32>
    %39 = tpu.matmul %37, %38, %cst {dimension_numbers = #tpu.dot_dimension_numbers<[1], [0], [0], [1], [0, 0, 1, 1], [], []>} : vector<32x384xbf16>, vector<384x128xbf16>, vector<32x128xf32> -> vector<32x128xf32>
    %c0_7 = arith.constant 0 : index
    %c0_8 = arith.constant 0 : index
    %40 = vector.load %arg3[%c0_7, %c0_8] : memref<1x128xf32, #tpu.memory_space<vmem>>, vector<1x128xf32>
    %41 = vector.broadcast %40 : vector<1x128xf32> to vector<32x128xf32>
    %42 = arith.addf %39, %41 : vector<32x128xf32>
    %43 = vector.extract_strided_slice %42 {offsets = [31, 0], sizes = [1, 128], strides = [1, 1]} : vector<32x128xf32> to vector<1x128xf32>
    %44 = vector.extract_strided_slice %42 {offsets = [0, 0], sizes = [31, 128], strides = [1, 1]} : vector<32x128xf32> to vector<31x128xf32>
    %45 = tpu.concatenate %43, %44 in 0 : vector<1x128xf32>, vector<31x128xf32> -> vector<32x128xf32>
    %46 = vector.broadcast %21 : vector<32x1xf32> to vector<32x128xf32>
    %47 = arith.mulf %45, %46 : vector<32x128xf32>
    %48 = vector.extract_strided_slice %42 {offsets = [1, 0], sizes = [31, 128], strides = [1, 1]} : vector<32x128xf32> to vector<31x128xf32>
    %49 = vector.extract_strided_slice %42 {offsets = [0, 0], sizes = [1, 128], strides = [1, 1]} : vector<32x128xf32> to vector<1x128xf32>
    %50 = tpu.concatenate %48, %49 in 0 : vector<31x128xf32>, vector<1x128xf32> -> vector<32x128xf32>
    %51 = vector.broadcast %25 : vector<32x1xf32> to vector<32x128xf32>
    %52 = arith.mulf %50, %51 : vector<32x128xf32>
    %53 = tpu.concatenate %47, %42, %52 in 1 : vector<32x128xf32>, vector<32x128xf32>, vector<32x128xf32> -> vector<32x384xf32>
    %54 = arith.truncf %53 : vector<32x384xf32> to vector<32x384xbf16>
    %c0_9 = arith.constant 0 : index
    %c0_10 = arith.constant 0 : index
    %55 = vector.load %arg4[%c0_9, %c0_10] : memref<384x128xbf16, #tpu.memory_space<vmem>>, vector<384x128xbf16>
    %cst_11 = arith.constant dense<0.000000e+00> : vector<32x128xf32>
    %56 = tpu.matmul %54, %55, %cst_11 {dimension_numbers = #tpu.dot_dimension_numbers<[1], [0], [0], [1], [0, 0, 1, 1], [], []>} : vector<32x384xbf16>, vector<384x128xbf16>, vector<32x128xf32> -> vector<32x128xf32>
    %c0_12 = arith.constant 0 : index
    %c0_13 = arith.constant 0 : index
    %57 = vector.load %arg5[%c0_12, %c0_13] : memref<1x128xf32, #tpu.memory_space<vmem>>, vector<1x128xf32>
    %58 = vector.broadcast %57 : vector<1x128xf32> to vector<32x128xf32>
    %59 = arith.addf %56, %58 : vector<32x128xf32>
    %cst_14 = arith.constant dense<0.000000e+00> : vector<128xf32>
    %60 = vector.multi_reduction <add>, %59, %cst_14 [0] : vector<32x128xf32> to vector<128xf32>
    %61 = vector.shape_cast %60 : vector<128xf32> to vector<1x128xf32>
    %62 = vector.extract_strided_slice %61 {offsets = [0, 120], sizes = [1, 8], strides = [1, 1]} : vector<1x128xf32> to vector<1x8xf32>
    %63 = vector.extract_strided_slice %61 {offsets = [0, 0], sizes = [1, 120], strides = [1, 1]} : vector<1x128xf32> to vector<1x120xf32>
    %64 = tpu.concatenate %62, %63 in 1 : vector<1x8xf32>, vector<1x120xf32> -> vector<1x128xf32>
    %65 = arith.addf %61, %64 : vector<1x128xf32>
    %66 = vector.extract_strided_slice %65 {offsets = [0, 112], sizes = [1, 16], strides = [1, 1]} : vector<1x128xf32> to vector<1x16xf32>
    %67 = vector.extract_strided_slice %65 {offsets = [0, 0], sizes = [1, 112], strides = [1, 1]} : vector<1x128xf32> to vector<1x112xf32>
    %68 = tpu.concatenate %66, %67 in 1 : vector<1x16xf32>, vector<1x112xf32> -> vector<1x128xf32>
    %69 = arith.addf %65, %68 : vector<1x128xf32>
    %70 = vector.extract_strided_slice %69 {offsets = [0, 96], sizes = [1, 32], strides = [1, 1]} : vector<1x128xf32> to vector<1x32xf32>
    %71 = vector.extract_strided_slice %69 {offsets = [0, 0], sizes = [1, 96], strides = [1, 1]} : vector<1x128xf32> to vector<1x96xf32>
    %72 = tpu.concatenate %70, %71 in 1 : vector<1x32xf32>, vector<1x96xf32> -> vector<1x128xf32>
    %73 = arith.addf %69, %72 : vector<1x128xf32>
    %74 = vector.extract_strided_slice %73 {offsets = [0, 64], sizes = [1, 64], strides = [1, 1]} : vector<1x128xf32> to vector<1x64xf32>
    %75 = vector.extract_strided_slice %73 {offsets = [0, 0], sizes = [1, 64], strides = [1, 1]} : vector<1x128xf32> to vector<1x64xf32>
    %76 = tpu.concatenate %74, %75 in 1 : vector<1x64xf32>, vector<1x64xf32> -> vector<1x128xf32>
    %77 = arith.addf %73, %76 : vector<1x128xf32>
    %cst_15 = arith.constant 0.001953125 : f32
    %78 = vector.broadcast %cst_15 : f32 to vector<1x128xf32>
    %79 = arith.mulf %77, %78 : vector<1x128xf32>
    %80 = vector.broadcast %79 : vector<1x128xf32> to vector<32x128xf32>
    %81 = arith.subf %59, %80 : vector<32x128xf32>
    %82 = arith.mulf %81, %81 : vector<32x128xf32>
    %cst_16 = arith.constant dense<0.000000e+00> : vector<128xf32>
    %83 = vector.multi_reduction <add>, %82, %cst_16 [0] : vector<32x128xf32> to vector<128xf32>
    %84 = vector.shape_cast %83 : vector<128xf32> to vector<1x128xf32>
    %85 = vector.extract_strided_slice %84 {offsets = [0, 120], sizes = [1, 8], strides = [1, 1]} : vector<1x128xf32> to vector<1x8xf32>
    %86 = vector.extract_strided_slice %84 {offsets = [0, 0], sizes = [1, 120], strides = [1, 1]} : vector<1x128xf32> to vector<1x120xf32>
    %87 = tpu.concatenate %85, %86 in 1 : vector<1x8xf32>, vector<1x120xf32> -> vector<1x128xf32>
    %88 = arith.addf %84, %87 : vector<1x128xf32>
    %89 = vector.extract_strided_slice %88 {offsets = [0, 112], sizes = [1, 16], strides = [1, 1]} : vector<1x128xf32> to vector<1x16xf32>
    %90 = vector.extract_strided_slice %88 {offsets = [0, 0], sizes = [1, 112], strides = [1, 1]} : vector<1x128xf32> to vector<1x112xf32>
    %91 = tpu.concatenate %89, %90 in 1 : vector<1x16xf32>, vector<1x112xf32> -> vector<1x128xf32>
    %92 = arith.addf %88, %91 : vector<1x128xf32>
    %93 = vector.extract_strided_slice %92 {offsets = [0, 96], sizes = [1, 32], strides = [1, 1]} : vector<1x128xf32> to vector<1x32xf32>
    %94 = vector.extract_strided_slice %92 {offsets = [0, 0], sizes = [1, 96], strides = [1, 1]} : vector<1x128xf32> to vector<1x96xf32>
    %95 = tpu.concatenate %93, %94 in 1 : vector<1x32xf32>, vector<1x96xf32> -> vector<1x128xf32>
    %96 = arith.addf %92, %95 : vector<1x128xf32>
    %97 = vector.extract_strided_slice %96 {offsets = [0, 64], sizes = [1, 64], strides = [1, 1]} : vector<1x128xf32> to vector<1x64xf32>
    %98 = vector.extract_strided_slice %96 {offsets = [0, 0], sizes = [1, 64], strides = [1, 1]} : vector<1x128xf32> to vector<1x64xf32>
    %99 = tpu.concatenate %97, %98 in 1 : vector<1x64xf32>, vector<1x64xf32> -> vector<1x128xf32>
    %100 = arith.addf %96, %99 : vector<1x128xf32>
    %cst_17 = arith.constant 0.001953125 : f32
    %101 = vector.broadcast %cst_17 : f32 to vector<1x128xf32>
    %102 = arith.mulf %100, %101 : vector<1x128xf32>
    %cst_18 = arith.constant 9.99999974E-6 : f32
    %103 = vector.broadcast %cst_18 : f32 to vector<1x128xf32>
    %104 = arith.addf %102, %103 : vector<1x128xf32>
    %105 = math.rsqrt %104 : vector<1x128xf32>
    %106 = vector.broadcast %105 : vector<1x128xf32> to vector<32x128xf32>
    %107 = arith.mulf %81, %106 : vector<32x128xf32>
    %c0_19 = arith.constant 0 : index
    %c0_20 = arith.constant 0 : index
    %108 = vector.load %arg6[%c0_19, %c0_20] : memref<1x128xf32, #tpu.memory_space<vmem>>, vector<1x128xf32>
    %109 = vector.broadcast %108 : vector<1x128xf32> to vector<32x128xf32>
    %110 = arith.mulf %107, %109 : vector<32x128xf32>
    %c0_21 = arith.constant 0 : index
    %c0_22 = arith.constant 0 : index
    %111 = vector.load %arg7[%c0_21, %c0_22] : memref<1x128xf32, #tpu.memory_space<vmem>>, vector<1x128xf32>
    %112 = vector.broadcast %111 : vector<1x128xf32> to vector<32x128xf32>
    %113 = arith.addf %110, %112 : vector<32x128xf32>
    %c0_23 = arith.constant 0 : index
    %c0_24 = arith.constant 0 : index
    %114 = vector.load %arg26[%c0_23, %c0_24] : memref<32x128xf32, #tpu.memory_space<vmem>>, vector<32x128xf32>
    tpu.vector_store %arg26[%c0_23, %c0_24], %113 {strides = array<i32>} : memref<32x128xf32, #tpu.memory_space<vmem>>, vector<32x128xf32>,
    %c0_25 = arith.constant 0 : index
    %c0_26 = arith.constant 0 : index
    %115 = tpu.strided_load %arg26[%c0_25, %c0_26] {strides = array<i32: 2, 1>} : memref<32x128xf32, #tpu.memory_space<vmem>>, vector<16x128xf32>
    %c1 = arith.constant 1 : index
    %c0_27 = arith.constant 0 : index
    %116 = tpu.strided_load %arg26[%c1, %c0_27] {strides = array<i32: 2, 1>} : memref<32x128xf32, #tpu.memory_space<vmem>>, vector<16x128xf32>
    %117 = arith.maximumf %115, %116 : vector<16x128xf32>
    %118 = vector.extract_strided_slice %117 {offsets = [0, 64], sizes = [16, 64], strides = [1, 1]} : vector<16x128xf32> to vector<16x64xf32>
    %119 = vector.extract_strided_slice %117 {offsets = [0, 0], sizes = [16, 64], strides = [1, 1]} : vector<16x128xf32> to vector<16x64xf32>
    %120 = tpu.concatenate %118, %119 in 1 : vector<16x64xf32>, vector<16x64xf32> -> vector<16x128xf32>
    %121 = arith.maximumf %117, %120 : vector<16x128xf32>
    %122 = tpu.iota {dimensions = array<i32: 0>} : vector<16x1xi32>
    %c8_i32 = arith.constant 8 : i32
    %c0_i32_28 = arith.constant 0 : i32
    %123 = arith.cmpi eq, %c8_i32, %c0_i32_28 : i32
    %c1_i32_29 = arith.constant 1 : i32
    %124 = arith.select %123, %c1_i32_29, %c8_i32 : i32
    %125 = vector.broadcast %124 : i32 to vector<16x1xi32>
    %126 = arith.remsi %122, %125 : vector<16x1xi32>
    %c0_i32_30 = arith.constant 0 : i32
    %127 = vector.broadcast %c0_i32_30 : i32 to vector<16x1xi32>
    %128 = arith.cmpi ne, %126, %127 : vector<16x1xi32>
    %c0_i32_31 = arith.constant 0 : i32
    %129 = vector.broadcast %c0_i32_31 : i32 to vector<16x1xi32>
    %130 = arith.cmpi slt, %126, %129 : vector<16x1xi32>
    %c0_i32_32 = arith.constant 0 : i32
    %131 = arith.cmpi slt, %124, %c0_i32_32 : i32
    %132 = vector.broadcast %131 : i1 to vector<16x1xi1>
    %133 = vector.broadcast %132 : vector<16x1xi1> to vector<16x1xi1>
    %134 = arith.xori %130, %133 : vector<16x1xi1>
    %135 = arith.andi %134, %128 : vector<16x1xi1>
    %136 = vector.broadcast %124 : i32 to vector<16x1xi32>
    %137 = arith.addi %126, %136 : vector<16x1xi32>
    %138 = arith.select %135, %137, %126 : vector<16x1xi1>, vector<16x1xi32>
    %c1_i32_33 = arith.constant 1 : i32
    %139 = vector.broadcast %c1_i32_33 : i32 to vector<16x1xi32>
    %140 = arith.cmpi sge, %138, %139 : vector<16x1xi32>
    %141 = arith.extui %140 : vector<16x1xi1> to vector<16x1xi32>
    %142 = arith.sitofp %141 : vector<16x1xi32> to vector<16x1xf32>
    %c6_i32 = arith.constant 6 : i32
    %143 = vector.broadcast %c6_i32 : i32 to vector<16x1xi32>
    %144 = arith.cmpi sle, %138, %143 : vector<16x1xi32>
    %145 = arith.extui %144 : vector<16x1xi1> to vector<16x1xi32>
    %146 = arith.sitofp %145 : vector<16x1xi32> to vector<16x1xf32>
    %147 = vector.extract_strided_slice %121 {offsets = [15, 0], sizes = [1, 128], strides = [1, 1]} : vector<16x128xf32> to vector<1x128xf32>
    %148 = vector.extract_strided_slice %121 {offsets = [0, 0], sizes = [15, 128], strides = [1, 1]} : vector<16x128xf32> to vector<15x128xf32>
    %149 = tpu.concatenate %147, %148 in 0 : vector<1x128xf32>, vector<15x128xf32> -> vector<16x128xf32>
    %150 = vector.broadcast %142 : vector<16x1xf32> to vector<16x128xf32>
    %151 = arith.mulf %149, %150 : vector<16x128xf32>
    %152 = vector.extract_strided_slice %121 {offsets = [1, 0], sizes = [15, 128], strides = [1, 1]} : vector<16x128xf32> to vector<15x128xf32>
    %153 = vector.extract_strided_slice %121 {offsets = [0, 0], sizes = [1, 128], strides = [1, 1]} : vector<16x128xf32> to vector<1x128xf32>
    %154 = tpu.concatenate %152, %153 in 0 : vector<15x128xf32>, vector<1x128xf32> -> vector<16x128xf32>
    %155 = vector.broadcast %146 : vector<16x1xf32> to vector<16x128xf32>
    %156 = arith.mulf %154, %155 : vector<16x128xf32>
    %157 = tpu.concatenate %151, %121, %156 in 1 : vector<16x128xf32>, vector<16x128xf32>, vector<16x128xf32> -> vector<16x384xf32>
    %158 = arith.truncf %157 : vector<16x384xf32> to vector<16x384xbf16>
    %c0_34 = arith.constant 0 : index
    %c0_35 = arith.constant 0 : index
    %159 = vector.load %arg8[%c0_34, %c0_35] : memref<384x128xbf16, #tpu.memory_space<vmem>>, vector<384x128xbf16>
    %cst_36 = arith.constant dense<0.000000e+00> : vector<16x128xf32>
    %160 = tpu.matmul %158, %159, %cst_36 {dimension_numbers = #tpu.dot_dimension_numbers<[1], [0], [0], [1], [0, 0, 1, 1], [], []>} : vector<16x384xbf16>, vector<384x128xbf16>, vector<16x128xf32> -> vector<16x128xf32>
    %c0_37 = arith.constant 0 : index
    %c0_38 = arith.constant 0 : index
    %161 = vector.load %arg9[%c0_37, %c0_38] : memref<1x128xf32, #tpu.memory_space<vmem>>, vector<1x128xf32>
    %162 = vector.broadcast %161 : vector<1x128xf32> to vector<16x128xf32>
    %163 = arith.addf %160, %162 : vector<16x128xf32>
    %164 = vector.extract_strided_slice %163 {offsets = [15, 0], sizes = [1, 128], strides = [1, 1]} : vector<16x128xf32> to vector<1x128xf32>
    %165 = vector.extract_strided_slice %163 {offsets = [0, 0], sizes = [15, 128], strides = [1, 1]} : vector<16x128xf32> to vector<15x128xf32>
    %166 = tpu.concatenate %164, %165 in 0 : vector<1x128xf32>, vector<15x128xf32> -> vector<16x128xf32>
    %167 = vector.broadcast %142 : vector<16x1xf32> to vector<16x128xf32>
    %168 = arith.mulf %166, %167 : vector<16x128xf32>
    %169 = vector.extract_strided_slice %163 {offsets = [1, 0], sizes = [15, 128], strides = [1, 1]} : vector<16x128xf32> to vector<15x128xf32>
    %170 = vector.extract_strided_slice %163 {offsets = [0, 0], sizes = [1, 128], strides = [1, 1]} : vector<16x128xf32> to vector<1x128xf32>
    %171 = tpu.concatenate %169, %170 in 0 : vector<15x128xf32>, vector<1x128xf32> -> vector<16x128xf32>
    %172 = vector.broadcast %146 : vector<16x1xf32> to vector<16x128xf32>
    %173 = arith.mulf %171, %172 : vector<16x128xf32>
    %174 = tpu.concatenate %168, %163, %173 in 1 : vector<16x128xf32>, vector<16x128xf32>, vector<16x128xf32> -> vector<16x384xf32>
    %175 = arith.truncf %174 : vector<16x384xf32> to vector<16x384xbf16>
    %c0_39 = arith.constant 0 : index
    %c0_40 = arith.constant 0 : index
    %176 = vector.load %arg10[%c0_39, %c0_40] : memref<384x128xbf16, #tpu.memory_space<vmem>>, vector<384x128xbf16>
    %cst_41 = arith.constant dense<0.000000e+00> : vector<16x128xf32>
    %177 = tpu.matmul %175, %176, %cst_41 {dimension_numbers = #tpu.dot_dimension_numbers<[1], [0], [0], [1], [0, 0, 1, 1], [], []>} : vector<16x384xbf16>, vector<384x128xbf16>, vector<16x128xf32> -> vector<16x128xf32>
    %c0_42 = arith.constant 0 : index
    %c0_43 = arith.constant 0 : index
    %178 = vector.load %arg11[%c0_42, %c0_43] : memref<1x128xf32, #tpu.memory_space<vmem>>, vector<1x128xf32>
    %179 = vector.broadcast %178 : vector<1x128xf32> to vector<16x128xf32>
    %180 = arith.addf %177, %179 : vector<16x128xf32>
    %cst_44 = arith.constant dense<0.000000e+00> : vector<128xf32>
    %181 = vector.multi_reduction <add>, %180, %cst_44 [0] : vector<16x128xf32> to vector<128xf32>
    %182 = vector.shape_cast %181 : vector<128xf32> to vector<1x128xf32>
    %183 = vector.extract_strided_slice %182 {offsets = [0, 112], sizes = [1, 16], strides = [1, 1]} : vector<1x128xf32> to vector<1x16xf32>
    %184 = vector.extract_strided_slice %182 {offsets = [0, 0], sizes = [1, 112], strides = [1, 1]} : vector<1x128xf32> to vector<1x112xf32>
    %185 = tpu.concatenate %183, %184 in 1 : vector<1x16xf32>, vector<1x112xf32> -> vector<1x128xf32>
    %186 = arith.addf %182, %185 : vector<1x128xf32>
    %187 = vector.extract_strided_slice %186 {offsets = [0, 96], sizes = [1, 32], strides = [1, 1]} : vector<1x128xf32> to vector<1x32xf32>
    %188 = vector.extract_strided_slice %186 {offsets = [0, 0], sizes = [1, 96], strides = [1, 1]} : vector<1x128xf32> to vector<1x96xf32>
    %189 = tpu.concatenate %187, %188 in 1 : vector<1x32xf32>, vector<1x96xf32> -> vector<1x128xf32>
    %190 = arith.addf %186, %189 : vector<1x128xf32>
    %191 = vector.extract_strided_slice %190 {offsets = [0, 64], sizes = [1, 64], strides = [1, 1]} : vector<1x128xf32> to vector<1x64xf32>
    %192 = vector.extract_strided_slice %190 {offsets = [0, 0], sizes = [1, 64], strides = [1, 1]} : vector<1x128xf32> to vector<1x64xf32>
    %193 = tpu.concatenate %191, %192 in 1 : vector<1x64xf32>, vector<1x64xf32> -> vector<1x128xf32>
    %194 = arith.addf %190, %193 : vector<1x128xf32>
    %cst_45 = arith.constant 7.812500e-03 : f32
    %195 = vector.broadcast %cst_45 : f32 to vector<1x128xf32>
    %196 = arith.mulf %194, %195 : vector<1x128xf32>
    %197 = vector.broadcast %196 : vector<1x128xf32> to vector<16x128xf32>
    %198 = arith.subf %180, %197 : vector<16x128xf32>
    %199 = arith.mulf %198, %198 : vector<16x128xf32>
    %cst_46 = arith.constant dense<0.000000e+00> : vector<128xf32>
    %200 = vector.multi_reduction <add>, %199, %cst_46 [0] : vector<16x128xf32> to vector<128xf32>
    %201 = vector.shape_cast %200 : vector<128xf32> to vector<1x128xf32>
    %202 = vector.extract_strided_slice %201 {offsets = [0, 112], sizes = [1, 16], strides = [1, 1]} : vector<1x128xf32> to vector<1x16xf32>
    %203 = vector.extract_strided_slice %201 {offsets = [0, 0], sizes = [1, 112], strides = [1, 1]} : vector<1x128xf32> to vector<1x112xf32>
    %204 = tpu.concatenate %202, %203 in 1 : vector<1x16xf32>, vector<1x112xf32> -> vector<1x128xf32>
    %205 = arith.addf %201, %204 : vector<1x128xf32>
    %206 = vector.extract_strided_slice %205 {offsets = [0, 96], sizes = [1, 32], strides = [1, 1]} : vector<1x128xf32> to vector<1x32xf32>
    %207 = vector.extract_strided_slice %205 {offsets = [0, 0], sizes = [1, 96], strides = [1, 1]} : vector<1x128xf32> to vector<1x96xf32>
    %208 = tpu.concatenate %206, %207 in 1 : vector<1x32xf32>, vector<1x96xf32> -> vector<1x128xf32>
    %209 = arith.addf %205, %208 : vector<1x128xf32>
    %210 = vector.extract_strided_slice %209 {offsets = [0, 64], sizes = [1, 64], strides = [1, 1]} : vector<1x128xf32> to vector<1x64xf32>
    %211 = vector.extract_strided_slice %209 {offsets = [0, 0], sizes = [1, 64], strides = [1, 1]} : vector<1x128xf32> to vector<1x64xf32>
    %212 = tpu.concatenate %210, %211 in 1 : vector<1x64xf32>, vector<1x64xf32> -> vector<1x128xf32>
    %213 = arith.addf %209, %212 : vector<1x128xf32>
    %cst_47 = arith.constant 7.812500e-03 : f32
    %214 = vector.broadcast %cst_47 : f32 to vector<1x128xf32>
    %215 = arith.mulf %213, %214 : vector<1x128xf32>
    %cst_48 = arith.constant 9.99999974E-6 : f32
    %216 = vector.broadcast %cst_48 : f32 to vector<1x128xf32>
    %217 = arith.addf %215, %216 : vector<1x128xf32>
    %218 = math.rsqrt %217 : vector<1x128xf32>
    %219 = vector.broadcast %218 : vector<1x128xf32> to vector<16x128xf32>
    %220 = arith.mulf %198, %219 : vector<16x128xf32>
    %c0_49 = arith.constant 0 : index
    %c0_50 = arith.constant 0 : index
    %221 = vector.load %arg12[%c0_49, %c0_50] : memref<1x128xf32, #tpu.memory_space<vmem>>, vector<1x128xf32>
    %222 = vector.broadcast %221 : vector<1x128xf32> to vector<16x128xf32>
    %223 = arith.mulf %220, %222 : vector<16x128xf32>
    %c0_51 = arith.constant 0 : index
    %c0_52 = arith.constant 0 : index
    %224 = vector.load %arg13[%c0_51, %c0_52] : memref<1x128xf32, #tpu.memory_space<vmem>>, vector<1x128xf32>
    %225 = vector.broadcast %224 : vector<1x128xf32> to vector<16x128xf32>
    %226 = arith.addf %223, %225 : vector<16x128xf32>
    %c0_53 = arith.constant 0 : index
    %c0_54 = arith.constant 0 : index
    %227 = vector.load %arg27[%c0_53, %c0_54] : memref<16x128xf32, #tpu.memory_space<vmem>>, vector<16x128xf32>
    tpu.vector_store %arg27[%c0_53, %c0_54], %226 {strides = array<i32>} : memref<16x128xf32, #tpu.memory_space<vmem>>, vector<16x128xf32>,
    %c0_55 = arith.constant 0 : index
    %c0_56 = arith.constant 0 : index
    %228 = tpu.strided_load %arg27[%c0_55, %c0_56] {strides = array<i32: 2, 1>} : memref<16x128xf32, #tpu.memory_space<vmem>>, vector<8x128xf32>
    %c1_57 = arith.constant 1 : index
    %c0_58 = arith.constant 0 : index
    %229 = tpu.strided_load %arg27[%c1_57, %c0_58] {strides = array<i32: 2, 1>} : memref<16x128xf32, #tpu.memory_space<vmem>>, vector<8x128xf32>
    %230 = arith.maximumf %228, %229 : vector<8x128xf32>
    %231 = vector.extract_strided_slice %230 {offsets = [0, 64], sizes = [8, 64], strides = [1, 1]} : vector<8x128xf32> to vector<8x64xf32>
    %232 = vector.extract_strided_slice %230 {offsets = [0, 0], sizes = [8, 64], strides = [1, 1]} : vector<8x128xf32> to vector<8x64xf32>
    %233 = tpu.concatenate %231, %232 in 1 : vector<8x64xf32>, vector<8x64xf32> -> vector<8x128xf32>
    %234 = arith.maximumf %230, %233 : vector<8x128xf32>
    %235 = tpu.iota {dimensions = array<i32: 0>} : vector<8x1xi32>
    %c4_i32 = arith.constant 4 : i32
    %c0_i32_59 = arith.constant 0 : i32
    %236 = arith.cmpi eq, %c4_i32, %c0_i32_59 : i32
    %c1_i32_60 = arith.constant 1 : i32
    %237 = arith.select %236, %c1_i32_60, %c4_i32 : i32
    %238 = vector.broadcast %237 : i32 to vector<8x1xi32>
    %239 = arith.remsi %235, %238 : vector<8x1xi32>
    %c0_i32_61 = arith.constant 0 : i32
    %240 = vector.broadcast %c0_i32_61 : i32 to vector<8x1xi32>
    %241 = arith.cmpi ne, %239, %240 : vector<8x1xi32>
    %c0_i32_62 = arith.constant 0 : i32
    %242 = vector.broadcast %c0_i32_62 : i32 to vector<8x1xi32>
    %243 = arith.cmpi slt, %239, %242 : vector<8x1xi32>
    %c0_i32_63 = arith.constant 0 : i32
    %244 = arith.cmpi slt, %237, %c0_i32_63 : i32
    %245 = vector.broadcast %244 : i1 to vector<8x1xi1>
    %246 = vector.broadcast %245 : vector<8x1xi1> to vector<8x1xi1>
    %247 = arith.xori %243, %246 : vector<8x1xi1>
    %248 = arith.andi %247, %241 : vector<8x1xi1>
    %249 = vector.broadcast %237 : i32 to vector<8x1xi32>
    %250 = arith.addi %239, %249 : vector<8x1xi32>
    %251 = arith.select %248, %250, %239 : vector<8x1xi1>, vector<8x1xi32>
    %c1_i32_64 = arith.constant 1 : i32
    %252 = vector.broadcast %c1_i32_64 : i32 to vector<8x1xi32>
    %253 = arith.cmpi sge, %251, %252 : vector<8x1xi32>
    %254 = arith.extui %253 : vector<8x1xi1> to vector<8x1xi32>
    %255 = arith.sitofp %254 : vector<8x1xi32> to vector<8x1xf32>
    %c2_i32 = arith.constant 2 : i32
    %256 = vector.broadcast %c2_i32 : i32 to vector<8x1xi32>
    %257 = arith.cmpi sle, %251, %256 : vector<8x1xi32>
    %258 = arith.extui %257 : vector<8x1xi1> to vector<8x1xi32>
    %259 = arith.sitofp %258 : vector<8x1xi32> to vector<8x1xf32>
    %260 = vector.extract_strided_slice %234 {offsets = [7, 0], sizes = [1, 128], strides = [1, 1]} : vector<8x128xf32> to vector<1x128xf32>
    %261 = vector.extract_strided_slice %234 {offsets = [0, 0], sizes = [7, 128], strides = [1, 1]} : vector<8x128xf32> to vector<7x128xf32>
    %262 = tpu.concatenate %260, %261 in 0 : vector<1x128xf32>, vector<7x128xf32> -> vector<8x128xf32>
    %263 = vector.broadcast %255 : vector<8x1xf32> to vector<8x128xf32>
    %264 = arith.mulf %262, %263 : vector<8x128xf32>
    %265 = vector.extract_strided_slice %234 {offsets = [1, 0], sizes = [7, 128], strides = [1, 1]} : vector<8x128xf32> to vector<7x128xf32>
    %266 = vector.extract_strided_slice %234 {offsets = [0, 0], sizes = [1, 128], strides = [1, 1]} : vector<8x128xf32> to vector<1x128xf32>
    %267 = tpu.concatenate %265, %266 in 0 : vector<7x128xf32>, vector<1x128xf32> -> vector<8x128xf32>
    %268 = vector.broadcast %259 : vector<8x1xf32> to vector<8x128xf32>
    %269 = arith.mulf %267, %268 : vector<8x128xf32>
    %270 = tpu.concatenate %264, %234, %269 in 1 : vector<8x128xf32>, vector<8x128xf32>, vector<8x128xf32> -> vector<8x384xf32>
    %271 = arith.truncf %270 : vector<8x384xf32> to vector<8x384xbf16>
    %c0_65 = arith.constant 0 : index
    %c0_66 = arith.constant 0 : index
    %272 = vector.load %arg14[%c0_65, %c0_66] : memref<384x128xbf16, #tpu.memory_space<vmem>>, vector<384x128xbf16>
    %cst_67 = arith.constant dense<0.000000e+00> : vector<8x128xf32>
    %273 = tpu.matmul %271, %272, %cst_67 {dimension_numbers = #tpu.dot_dimension_numbers<[1], [0], [0], [1], [0, 0, 1, 1], [], []>} : vector<8x384xbf16>, vector<384x128xbf16>, vector<8x128xf32> -> vector<8x128xf32>
    %c0_68 = arith.constant 0 : index
    %c0_69 = arith.constant 0 : index
    %274 = vector.load %arg15[%c0_68, %c0_69] : memref<1x128xf32, #tpu.memory_space<vmem>>, vector<1x128xf32>
    %275 = vector.broadcast %274 : vector<1x128xf32> to vector<8x128xf32>
    %276 = arith.addf %273, %275 : vector<8x128xf32>
    %277 = vector.extract_strided_slice %276 {offsets = [7, 0], sizes = [1, 128], strides = [1, 1]} : vector<8x128xf32> to vector<1x128xf32>
    %278 = vector.extract_strided_slice %276 {offsets = [0, 0], sizes = [7, 128], strides = [1, 1]} : vector<8x128xf32> to vector<7x128xf32>
    %279 = tpu.concatenate %277, %278 in 0 : vector<1x128xf32>, vector<7x128xf32> -> vector<8x128xf32>
    %280 = vector.broadcast %255 : vector<8x1xf32> to vector<8x128xf32>
    %281 = arith.mulf %279, %280 : vector<8x128xf32>
    %282 = vector.extract_strided_slice %276 {offsets = [1, 0], sizes = [7, 128], strides = [1, 1]} : vector<8x128xf32> to vector<7x128xf32>
    %283 = vector.extract_strided_slice %276 {offsets = [0, 0], sizes = [1, 128], strides = [1, 1]} : vector<8x128xf32> to vector<1x128xf32>
    %284 = tpu.concatenate %282, %283 in 0 : vector<7x128xf32>, vector<1x128xf32> -> vector<8x128xf32>
    %285 = vector.broadcast %259 : vector<8x1xf32> to vector<8x128xf32>
    %286 = arith.mulf %284, %285 : vector<8x128xf32>
    %287 = tpu.concatenate %281, %276, %286 in 1 : vector<8x128xf32>, vector<8x128xf32>, vector<8x128xf32> -> vector<8x384xf32>
    %288 = arith.truncf %287 : vector<8x384xf32> to vector<8x384xbf16>
    %c0_70 = arith.constant 0 : index
    %c0_71 = arith.constant 0 : index
    %289 = vector.load %arg16[%c0_70, %c0_71] : memref<384x128xbf16, #tpu.memory_space<vmem>>, vector<384x128xbf16>
    %cst_72 = arith.constant dense<0.000000e+00> : vector<8x128xf32>
    %290 = tpu.matmul %288, %289, %cst_72 {dimension_numbers = #tpu.dot_dimension_numbers<[1], [0], [0], [1], [0, 0, 1, 1], [], []>} : vector<8x384xbf16>, vector<384x128xbf16>, vector<8x128xf32> -> vector<8x128xf32>
    %c0_73 = arith.constant 0 : index
    %c0_74 = arith.constant 0 : index
    %291 = vector.load %arg17[%c0_73, %c0_74] : memref<1x128xf32, #tpu.memory_space<vmem>>, vector<1x128xf32>
    %292 = vector.broadcast %291 : vector<1x128xf32> to vector<8x128xf32>
    %293 = arith.addf %290, %292 : vector<8x128xf32>
    %cst_75 = arith.constant dense<0.000000e+00> : vector<128xf32>
    %294 = vector.multi_reduction <add>, %293, %cst_75 [0] : vector<8x128xf32> to vector<128xf32>
    %295 = vector.shape_cast %294 : vector<128xf32> to vector<1x128xf32>
    %296 = vector.extract_strided_slice %295 {offsets = [0, 96], sizes = [1, 32], strides = [1, 1]} : vector<1x128xf32> to vector<1x32xf32>
    %297 = vector.extract_strided_slice %295 {offsets = [0, 0], sizes = [1, 96], strides = [1, 1]} : vector<1x128xf32> to vector<1x96xf32>
    %298 = tpu.concatenate %296, %297 in 1 : vector<1x32xf32>, vector<1x96xf32> -> vector<1x128xf32>
    %299 = arith.addf %295, %298 : vector<1x128xf32>
    %300 = vector.extract_strided_slice %299 {offsets = [0, 64], sizes = [1, 64], strides = [1, 1]} : vector<1x128xf32> to vector<1x64xf32>
    %301 = vector.extract_strided_slice %299 {offsets = [0, 0], sizes = [1, 64], strides = [1, 1]} : vector<1x128xf32> to vector<1x64xf32>
    %302 = tpu.concatenate %300, %301 in 1 : vector<1x64xf32>, vector<1x64xf32> -> vector<1x128xf32>
    %303 = arith.addf %299, %302 : vector<1x128xf32>
    %cst_76 = arith.constant 3.125000e-02 : f32
    %304 = vector.broadcast %cst_76 : f32 to vector<1x128xf32>
    %305 = arith.mulf %303, %304 : vector<1x128xf32>
    %306 = vector.broadcast %305 : vector<1x128xf32> to vector<8x128xf32>
    %307 = arith.subf %293, %306 : vector<8x128xf32>
    %308 = arith.mulf %307, %307 : vector<8x128xf32>
    %cst_77 = arith.constant dense<0.000000e+00> : vector<128xf32>
    %309 = vector.multi_reduction <add>, %308, %cst_77 [0] : vector<8x128xf32> to vector<128xf32>
    %310 = vector.shape_cast %309 : vector<128xf32> to vector<1x128xf32>
    %311 = vector.extract_strided_slice %310 {offsets = [0, 96], sizes = [1, 32], strides = [1, 1]} : vector<1x128xf32> to vector<1x32xf32>
    %312 = vector.extract_strided_slice %310 {offsets = [0, 0], sizes = [1, 96], strides = [1, 1]} : vector<1x128xf32> to vector<1x96xf32>
    %313 = tpu.concatenate %311, %312 in 1 : vector<1x32xf32>, vector<1x96xf32> -> vector<1x128xf32>
    %314 = arith.addf %310, %313 : vector<1x128xf32>
    %315 = vector.extract_strided_slice %314 {offsets = [0, 64], sizes = [1, 64], strides = [1, 1]} : vector<1x128xf32> to vector<1x64xf32>
    %316 = vector.extract_strided_slice %314 {offsets = [0, 0], sizes = [1, 64], strides = [1, 1]} : vector<1x128xf32> to vector<1x64xf32>
    %317 = tpu.concatenate %315, %316 in 1 : vector<1x64xf32>, vector<1x64xf32> -> vector<1x128xf32>
    %318 = arith.addf %314, %317 : vector<1x128xf32>
    %cst_78 = arith.constant 3.125000e-02 : f32
    %319 = vector.broadcast %cst_78 : f32 to vector<1x128xf32>
    %320 = arith.mulf %318, %319 : vector<1x128xf32>
    %cst_79 = arith.constant 9.99999974E-6 : f32
    %321 = vector.broadcast %cst_79 : f32 to vector<1x128xf32>
    %322 = arith.addf %320, %321 : vector<1x128xf32>
    %323 = math.rsqrt %322 : vector<1x128xf32>
    %324 = vector.broadcast %323 : vector<1x128xf32> to vector<8x128xf32>
    %325 = arith.mulf %307, %324 : vector<8x128xf32>
    %c0_80 = arith.constant 0 : index
    %c0_81 = arith.constant 0 : index
    %326 = vector.load %arg18[%c0_80, %c0_81] : memref<1x128xf32, #tpu.memory_space<vmem>>, vector<1x128xf32>
    %327 = vector.broadcast %326 : vector<1x128xf32> to vector<8x128xf32>
    %328 = arith.mulf %325, %327 : vector<8x128xf32>
    %c0_82 = arith.constant 0 : index
    %c0_83 = arith.constant 0 : index
    %329 = vector.load %arg19[%c0_82, %c0_83] : memref<1x128xf32, #tpu.memory_space<vmem>>, vector<1x128xf32>
    %330 = vector.broadcast %329 : vector<1x128xf32> to vector<8x128xf32>
    %331 = arith.addf %328, %330 : vector<8x128xf32>
    %c0_84 = arith.constant 0 : index
    %c0_85 = arith.constant 0 : index
    %332 = vector.load %arg28[%c0_84, %c0_85] : memref<8x128xf32, #tpu.memory_space<vmem>>, vector<8x128xf32>
    tpu.vector_store %arg28[%c0_84, %c0_85], %331 {strides = array<i32>} : memref<8x128xf32, #tpu.memory_space<vmem>>, vector<8x128xf32>,
    %c0_86 = arith.constant 0 : index
    %c0_87 = arith.constant 0 : index
    %333 = tpu.strided_load %arg28[%c0_86, %c0_87] {strides = array<i32: 2, 1>} : memref<8x128xf32, #tpu.memory_space<vmem>>, vector<4x128xf32>
    %c1_88 = arith.constant 1 : index
    %c0_89 = arith.constant 0 : index
    %334 = tpu.strided_load %arg28[%c1_88, %c0_89] {strides = array<i32: 2, 1>} : memref<8x128xf32, #tpu.memory_space<vmem>>, vector<4x128xf32>
    %335 = arith.maximumf %333, %334 : vector<4x128xf32>
    %336 = vector.extract_strided_slice %335 {offsets = [0, 64], sizes = [4, 64], strides = [1, 1]} : vector<4x128xf32> to vector<4x64xf32>
    %337 = vector.extract_strided_slice %335 {offsets = [0, 0], sizes = [4, 64], strides = [1, 1]} : vector<4x128xf32> to vector<4x64xf32>
    %338 = tpu.concatenate %336, %337 in 1 : vector<4x64xf32>, vector<4x64xf32> -> vector<4x128xf32>
    %339 = arith.maximumf %335, %338 : vector<4x128xf32>
    %340 = tpu.iota {dimensions = array<i32: 0>} : vector<4x1xi32>
    %c2_i32_90 = arith.constant 2 : i32
    %c0_i32_91 = arith.constant 0 : i32
    %341 = arith.cmpi eq, %c2_i32_90, %c0_i32_91 : i32
    %c1_i32_92 = arith.constant 1 : i32
    %342 = arith.select %341, %c1_i32_92, %c2_i32_90 : i32
    %343 = vector.broadcast %342 : i32 to vector<4x1xi32>
    %344 = arith.remsi %340, %343 : vector<4x1xi32>
    %c0_i32_93 = arith.constant 0 : i32
    %345 = vector.broadcast %c0_i32_93 : i32 to vector<4x1xi32>
    %346 = arith.cmpi ne, %344, %345 : vector<4x1xi32>
    %c0_i32_94 = arith.constant 0 : i32
    %347 = vector.broadcast %c0_i32_94 : i32 to vector<4x1xi32>
    %348 = arith.cmpi slt, %344, %347 : vector<4x1xi32>
    %c0_i32_95 = arith.constant 0 : i32
    %349 = arith.cmpi slt, %342, %c0_i32_95 : i32
    %350 = vector.broadcast %349 : i1 to vector<4x1xi1>
    %351 = vector.broadcast %350 : vector<4x1xi1> to vector<4x1xi1>
    %352 = arith.xori %348, %351 : vector<4x1xi1>
    %353 = arith.andi %352, %346 : vector<4x1xi1>
    %354 = vector.broadcast %342 : i32 to vector<4x1xi32>
    %355 = arith.addi %344, %354 : vector<4x1xi32>
    %356 = arith.select %353, %355, %344 : vector<4x1xi1>, vector<4x1xi32>
    %c1_i32_96 = arith.constant 1 : i32
    %357 = vector.broadcast %c1_i32_96 : i32 to vector<4x1xi32>
    %358 = arith.cmpi sge, %356, %357 : vector<4x1xi32>
    %359 = arith.extui %358 : vector<4x1xi1> to vector<4x1xi32>
    %360 = arith.sitofp %359 : vector<4x1xi32> to vector<4x1xf32>
    %c0_i32_97 = arith.constant 0 : i32
    %361 = vector.broadcast %c0_i32_97 : i32 to vector<4x1xi32>
    %362 = arith.cmpi sle, %356, %361 : vector<4x1xi32>
    %363 = arith.extui %362 : vector<4x1xi1> to vector<4x1xi32>
    %364 = arith.sitofp %363 : vector<4x1xi32> to vector<4x1xf32>
    %365 = vector.extract_strided_slice %339 {offsets = [3, 0], sizes = [1, 128], strides = [1, 1]} : vector<4x128xf32> to vector<1x128xf32>
    %366 = vector.extract_strided_slice %339 {offsets = [0, 0], sizes = [3, 128], strides = [1, 1]} : vector<4x128xf32> to vector<3x128xf32>
    %367 = tpu.concatenate %365, %366 in 0 : vector<1x128xf32>, vector<3x128xf32> -> vector<4x128xf32>
    %368 = vector.broadcast %360 : vector<4x1xf32> to vector<4x128xf32>
    %369 = arith.mulf %367, %368 : vector<4x128xf32>
    %370 = vector.extract_strided_slice %339 {offsets = [1, 0], sizes = [3, 128], strides = [1, 1]} : vector<4x128xf32> to vector<3x128xf32>
    %371 = vector.extract_strided_slice %339 {offsets = [0, 0], sizes = [1, 128], strides = [1, 1]} : vector<4x128xf32> to vector<1x128xf32>
    %372 = tpu.concatenate %370, %371 in 0 : vector<3x128xf32>, vector<1x128xf32> -> vector<4x128xf32>
    %373 = vector.broadcast %364 : vector<4x1xf32> to vector<4x128xf32>
    %374 = arith.mulf %372, %373 : vector<4x128xf32>
    %375 = tpu.concatenate %369, %339, %374 in 1 : vector<4x128xf32>, vector<4x128xf32>, vector<4x128xf32> -> vector<4x384xf32>
    %376 = arith.truncf %375 : vector<4x384xf32> to vector<4x384xbf16>
    %c0_98 = arith.constant 0 : index
    %c0_99 = arith.constant 0 : index
    %377 = vector.load %arg20[%c0_98, %c0_99] : memref<384x128xbf16, #tpu.memory_space<vmem>>, vector<384x128xbf16>
    %cst_100 = arith.constant dense<0.000000e+00> : vector<4x128xf32>
    %378 = tpu.matmul %376, %377, %cst_100 {dimension_numbers = #tpu.dot_dimension_numbers<[1], [0], [0], [1], [0, 0, 1, 1], [], []>} : vector<4x384xbf16>, vector<384x128xbf16>, vector<4x128xf32> -> vector<4x128xf32>
    %c0_101 = arith.constant 0 : index
    %c0_102 = arith.constant 0 : index
    %379 = vector.load %arg21[%c0_101, %c0_102] : memref<1x128xf32, #tpu.memory_space<vmem>>, vector<1x128xf32>
    %380 = vector.broadcast %379 : vector<1x128xf32> to vector<4x128xf32>
    %381 = arith.addf %378, %380 : vector<4x128xf32>
    %382 = vector.extract_strided_slice %381 {offsets = [3, 0], sizes = [1, 128], strides = [1, 1]} : vector<4x128xf32> to vector<1x128xf32>
    %383 = vector.extract_strided_slice %381 {offsets = [0, 0], sizes = [3, 128], strides = [1, 1]} : vector<4x128xf32> to vector<3x128xf32>
    %384 = tpu.concatenate %382, %383 in 0 : vector<1x128xf32>, vector<3x128xf32> -> vector<4x128xf32>
    %385 = vector.broadcast %360 : vector<4x1xf32> to vector<4x128xf32>
    %386 = arith.mulf %384, %385 : vector<4x128xf32>
    %387 = vector.extract_strided_slice %381 {offsets = [1, 0], sizes = [3, 128], strides = [1, 1]} : vector<4x128xf32> to vector<3x128xf32>
    %388 = vector.extract_strided_slice %381 {offsets = [0, 0], sizes = [1, 128], strides = [1, 1]} : vector<4x128xf32> to vector<1x128xf32>
    %389 = tpu.concatenate %387, %388 in 0 : vector<3x128xf32>, vector<1x128xf32> -> vector<4x128xf32>
    %390 = vector.broadcast %364 : vector<4x1xf32> to vector<4x128xf32>
    %391 = arith.mulf %389, %390 : vector<4x128xf32>
    %392 = tpu.concatenate %386, %381, %391 in 1 : vector<4x128xf32>, vector<4x128xf32>, vector<4x128xf32> -> vector<4x384xf32>
    %393 = arith.truncf %392 : vector<4x384xf32> to vector<4x384xbf16>
    %c0_103 = arith.constant 0 : index
    %c0_104 = arith.constant 0 : index
    %394 = vector.load %arg22[%c0_103, %c0_104] : memref<384x128xbf16, #tpu.memory_space<vmem>>, vector<384x128xbf16>
    %cst_105 = arith.constant dense<0.000000e+00> : vector<4x128xf32>
    %395 = tpu.matmul %393, %394, %cst_105 {dimension_numbers = #tpu.dot_dimension_numbers<[1], [0], [0], [1], [0, 0, 1, 1], [], []>} : vector<4x384xbf16>, vector<384x128xbf16>, vector<4x128xf32> -> vector<4x128xf32>
    %c0_106 = arith.constant 0 : index
    %c0_107 = arith.constant 0 : index
    %396 = vector.load %arg23[%c0_106, %c0_107] : memref<1x128xf32, #tpu.memory_space<vmem>>, vector<1x128xf32>
    %397 = vector.broadcast %396 : vector<1x128xf32> to vector<4x128xf32>
    %398 = arith.addf %395, %397 : vector<4x128xf32>
    %cst_108 = arith.constant dense<0.000000e+00> : vector<128xf32>
    %399 = vector.multi_reduction <add>, %398, %cst_108 [0] : vector<4x128xf32> to vector<128xf32>
    %400 = vector.shape_cast %399 : vector<128xf32> to vector<1x128xf32>
    %401 = vector.extract_strided_slice %400 {offsets = [0, 64], sizes = [1, 64], strides = [1, 1]} : vector<1x128xf32> to vector<1x64xf32>
    %402 = vector.extract_strided_slice %400 {offsets = [0, 0], sizes = [1, 64], strides = [1, 1]} : vector<1x128xf32> to vector<1x64xf32>
    %403 = tpu.concatenate %401, %402 in 1 : vector<1x64xf32>, vector<1x64xf32> -> vector<1x128xf32>
    %404 = arith.addf %400, %403 : vector<1x128xf32>
    %cst_109 = arith.constant 1.250000e-01 : f32
    %405 = vector.broadcast %cst_109 : f32 to vector<1x128xf32>
    %406 = arith.mulf %404, %405 : vector<1x128xf32>
    %407 = vector.broadcast %406 : vector<1x128xf32> to vector<4x128xf32>
    %408 = arith.subf %398, %407 : vector<4x128xf32>
    %409 = arith.mulf %408, %408 : vector<4x128xf32>
    %cst_110 = arith.constant dense<0.000000e+00> : vector<128xf32>
    %410 = vector.multi_reduction <add>, %409, %cst_110 [0] : vector<4x128xf32> to vector<128xf32>
    %411 = vector.shape_cast %410 : vector<128xf32> to vector<1x128xf32>
    %412 = vector.extract_strided_slice %411 {offsets = [0, 64], sizes = [1, 64], strides = [1, 1]} : vector<1x128xf32> to vector<1x64xf32>
    %413 = vector.extract_strided_slice %411 {offsets = [0, 0], sizes = [1, 64], strides = [1, 1]} : vector<1x128xf32> to vector<1x64xf32>
    %414 = tpu.concatenate %412, %413 in 1 : vector<1x64xf32>, vector<1x64xf32> -> vector<1x128xf32>
    %415 = arith.addf %411, %414 : vector<1x128xf32>
    %cst_111 = arith.constant 1.250000e-01 : f32
    %416 = vector.broadcast %cst_111 : f32 to vector<1x128xf32>
    %417 = arith.mulf %415, %416 : vector<1x128xf32>
    %cst_112 = arith.constant 9.99999974E-6 : f32
    %418 = vector.broadcast %cst_112 : f32 to vector<1x128xf32>
    %419 = arith.addf %417, %418 : vector<1x128xf32>
    %420 = math.rsqrt %419 : vector<1x128xf32>
    %421 = vector.broadcast %420 : vector<1x128xf32> to vector<4x128xf32>
    %422 = arith.mulf %408, %421 : vector<4x128xf32>
    %c0_113 = arith.constant 0 : index
    %c0_114 = arith.constant 0 : index
    %423 = vector.load %arg24[%c0_113, %c0_114] : memref<1x128xf32, #tpu.memory_space<vmem>>, vector<1x128xf32>
    %424 = vector.broadcast %423 : vector<1x128xf32> to vector<4x128xf32>
    %425 = arith.mulf %422, %424 : vector<4x128xf32>
    %c0_115 = arith.constant 0 : index
    %c0_116 = arith.constant 0 : index
    %426 = vector.load %arg25[%c0_115, %c0_116] : memref<1x128xf32, #tpu.memory_space<vmem>>, vector<1x128xf32>
    %427 = vector.broadcast %426 : vector<1x128xf32> to vector<4x128xf32>
    %428 = arith.addf %425, %427 : vector<4x128xf32>
    %c0_117 = arith.constant 0 : index
    %c0_118 = arith.constant 0 : index
    %429 = vector.load %arg29[%c0_117, %c0_118] : memref<4x128xf32, #tpu.memory_space<vmem>>, vector<4x128xf32>
    tpu.vector_store %arg29[%c0_117, %c0_118], %428 {strides = array<i32>} : memref<4x128xf32, #tpu.memory_space<vmem>>, vector<4x128xf32>,
    %c0_119 = arith.constant 0 : index
    %c0_120 = arith.constant 0 : index
    %430 = tpu.strided_load %arg29[%c0_119, %c0_120] {strides = array<i32: 2, 1>} : memref<4x128xf32, #tpu.memory_space<vmem>>, vector<2x128xf32>
    %c1_121 = arith.constant 1 : index
    %c0_122 = arith.constant 0 : index
    %431 = tpu.strided_load %arg29[%c1_121, %c0_122] {strides = array<i32: 2, 1>} : memref<4x128xf32, #tpu.memory_space<vmem>>, vector<2x128xf32>
    %432 = arith.maximumf %430, %431 : vector<2x128xf32>
    %433 = vector.extract_strided_slice %432 {offsets = [0, 64], sizes = [2, 64], strides = [1, 1]} : vector<2x128xf32> to vector<2x64xf32>
    %434 = vector.extract_strided_slice %432 {offsets = [0, 0], sizes = [2, 64], strides = [1, 1]} : vector<2x128xf32> to vector<2x64xf32>
    %435 = tpu.concatenate %433, %434 in 1 : vector<2x64xf32>, vector<2x64xf32> -> vector<2x128xf32>
    %436 = arith.maximumf %432, %435 : vector<2x128xf32>
    %437 = vector.extract_strided_slice %436 {offsets = [0, 0], sizes = [2, 64], strides = [1, 1]} : vector<2x128xf32> to vector<2x64xf32>
    %c0_123 = arith.constant 0 : index
    %c0_124 = arith.constant 0 : index
    %438 = vector.load %arg30[%c0_123, %c0_124] : memref<2x64xf32, #tpu.memory_space<vmem>>, vector<2x64xf32>
    tpu.vector_store %arg30[%c0_123, %c0_124], %437 {strides = array<i32>} : memref<2x64xf32, #tpu.memory_space<vmem>>, vector<2x64xf32>,
    return
  }
  func.func @transform_0(%arg0: i32) -> (i32, i32) {
    %c0_i32 = arith.constant 0 : i32
    %c0_i32_0 = arith.constant 0 : i32
    %c0_i32_1 = arith.constant 0 : i32
    return %c0_i32, %c0_i32_0 : i32, i32
  }
  func.func @transform_1(%arg0: i32) -> (i32, i32) {
    %c0_i32 = arith.constant 0 : i32
    %c0_i32_0 = arith.constant 0 : i32
    %c0_i32_1 = arith.constant 0 : i32
    return %c0_i32, %c0_i32_0 : i32, i32
  }
  func.func @transform_2(%arg0: i32) -> (i32, i32) {
    %c0_i32 = arith.constant 0 : i32
    %c0_i32_0 = arith.constant 0 : i32
    %c0_i32_1 = arith.constant 0 : i32
    return %c0_i32, %c0_i32_0 : i32, i32
  }
  func.func @transform_3(%arg0: i32) -> (i32, i32) {
    %c0_i32 = arith.constant 0 : i32
    %c0_i32_0 = arith.constant 0 : i32
    %c0_i32_1 = arith.constant 0 : i32
    return %c0_i32, %c0_i32_0 : i32, i32
  }
  func.func @transform_4(%arg0: i32) -> (i32, i32) {
    %c0_i32 = arith.constant 0 : i32
    %c0_i32_0 = arith.constant 0 : i32
    %c0_i32_1 = arith.constant 0 : i32
    return %c0_i32, %c0_i32_0 : i32, i32
  }
  func.func @transform_5(%arg0: i32) -> (i32, i32) {
    %c0_i32 = arith.constant 0 : i32
    %c0_i32_0 = arith.constant 0 : i32
    %c0_i32_1 = arith.constant 0 : i32
    return %c0_i32, %c0_i32_0 : i32, i32
  }
  func.func @transform_6(%arg0: i32) -> (i32, i32) {
    %c0_i32 = arith.constant 0 : i32
    %c0_i32_0 = arith.constant 0 : i32
    %c0_i32_1 = arith.constant 0 : i32
    return %c0_i32, %c0_i32_0 : i32, i32
  }
  func.func @transform_7(%arg0: i32) -> (i32, i32) {
    %c0_i32 = arith.constant 0 : i32
    %c0_i32_0 = arith.constant 0 : i32
    %c0_i32_1 = arith.constant 0 : i32
    return %c0_i32, %c0_i32_0 : i32, i32
  }
  func.func @transform_8(%arg0: i32) -> (i32, i32) {
    %c0_i32 = arith.constant 0 : i32
    %c0_i32_0 = arith.constant 0 : i32
    %c0_i32_1 = arith.constant 0 : i32
    return %c0_i32, %c0_i32_0 : i32, i32
  }
  func.func @transform_9(%arg0: i32) -> (i32, i32) {
    %c0_i32 = arith.constant 0 : i32
    %c0_i32_0 = arith.constant 0 : i32
    %c0_i32_1 = arith.constant 0 : i32
    return %c0_i32, %c0_i32_0 : i32, i32
  }
  func.func @transform_10(%arg0: i32) -> (i32, i32) {
    %c0_i32 = arith.constant 0 : i32
    %c0_i32_0 = arith.constant 0 : i32
    %c0_i32_1 = arith.constant 0 : i32
    return %c0_i32, %c0_i32_0 : i32, i32
  }
  func.func @transform_11(%arg0: i32) -> (i32, i32) {
    %c0_i32 = arith.constant 0 : i32
    %c0_i32_0 = arith.constant 0 : i32
    %c0_i32_1 = arith.constant 0 : i32
    return %c0_i32, %c0_i32_0 : i32, i32
  }
  func.func @transform_12(%arg0: i32) -> (i32, i32) {
    %c0_i32 = arith.constant 0 : i32
    %c0_i32_0 = arith.constant 0 : i32
    %c0_i32_1 = arith.constant 0 : i32
    return %c0_i32, %c0_i32_0 : i32, i32
  }
  func.func @transform_13(%arg0: i32) -> (i32, i32) {
    %c0_i32 = arith.constant 0 : i32
    %c0_i32_0 = arith.constant 0 : i32
    %c0_i32_1 = arith.constant 0 : i32
    return %c0_i32, %c0_i32_0 : i32, i32
  }
  func.func @transform_14(%arg0: i32) -> (i32, i32) {
    %c0_i32 = arith.constant 0 : i32
    %c0_i32_0 = arith.constant 0 : i32
    %c0_i32_1 = arith.constant 0 : i32
    return %c0_i32, %c0_i32_0 : i32, i32
  }
  func.func @transform_15(%arg0: i32) -> (i32, i32) {
    %c0_i32 = arith.constant 0 : i32
    %c0_i32_0 = arith.constant 0 : i32
    %c0_i32_1 = arith.constant 0 : i32
    return %c0_i32, %c0_i32_0 : i32, i32
  }
  func.func @transform_16(%arg0: i32) -> (i32, i32) {
    %c0_i32 = arith.constant 0 : i32
    %c0_i32_0 = arith.constant 0 : i32
    %c0_i32_1 = arith.constant 0 : i32
    return %c0_i32, %c0_i32_0 : i32, i32
  }
  func.func @transform_17(%arg0: i32) -> (i32, i32) {
    %c0_i32 = arith.constant 0 : i32
    %c0_i32_0 = arith.constant 0 : i32
    %c0_i32_1 = arith.constant 0 : i32
    return %c0_i32, %c0_i32_0 : i32, i32
  }
  func.func @transform_18(%arg0: i32) -> (i32, i32) {
    %c0_i32 = arith.constant 0 : i32
    %c0_i32_0 = arith.constant 0 : i32
    %c0_i32_1 = arith.constant 0 : i32
    return %c0_i32, %c0_i32_0 : i32, i32
  }
  func.func @transform_19(%arg0: i32) -> (i32, i32) {
    %c0_i32 = arith.constant 0 : i32
    %c0_i32_0 = arith.constant 0 : i32
    %c0_i32_1 = arith.constant 0 : i32
    return %c0_i32, %c0_i32_0 : i32, i32
  }
  func.func @transform_20(%arg0: i32) -> (i32, i32) {
    %c0_i32 = arith.constant 0 : i32
    %c0_i32_0 = arith.constant 0 : i32
    %c0_i32_1 = arith.constant 0 : i32
    return %c0_i32, %c0_i32_0 : i32, i32
  }
  func.func @transform_21(%arg0: i32) -> (i32, i32) {
    %c0_i32 = arith.constant 0 : i32
    %c0_i32_0 = arith.constant 0 : i32
    %c0_i32_1 = arith.constant 0 : i32
    return %c0_i32, %c0_i32_0 : i32, i32
  }
  func.func @transform_22(%arg0: i32) -> (i32, i32) {
    %c0_i32 = arith.constant 0 : i32
    %c0_i32_0 = arith.constant 0 : i32
    %c0_i32_1 = arith.constant 0 : i32
    return %c0_i32, %c0_i32_0 : i32, i32
  }
  func.func @transform_23(%arg0: i32) -> (i32, i32) {
    %c0_i32 = arith.constant 0 : i32
    %c0_i32_0 = arith.constant 0 : i32
    %c0_i32_1 = arith.constant 0 : i32
    return %c0_i32, %c0_i32_0 : i32, i32
  }
  func.func @transform_24(%arg0: i32) -> (i32, i32) {
    %c0_i32 = arith.constant 0 : i32
    %c0_i32_0 = arith.constant 0 : i32
    %c0_i32_1 = arith.constant 0 : i32
    return %c0_i32, %c0_i32_0 : i32, i32
  }
  func.func @transform_25(%arg0: i32) -> (i32, i32) {
    %c0_i32 = arith.constant 0 : i32
    %c0_i32_0 = arith.constant 0 : i32
    %c0_i32_1 = arith.constant 0 : i32
    return %c0_i32, %c0_i32_0 : i32, i32
  }
  func.func @transform_26(%arg0: i32) -> (i32, i32) {
    %c0_i32 = arith.constant 0 : i32
    %c0_i32_0 = arith.constant 0 : i32
    %c0_i32_1 = arith.constant 0 : i32
    return %c0_i32, %c0_i32_0 : i32, i32
  }
  func.func @transform_27(%arg0: i32) -> (i32, i32) {
    %c0_i32 = arith.constant 0 : i32
    %c0_i32_0 = arith.constant 0 : i32
    %c0_i32_1 = arith.constant 0 : i32
    return %c0_i32, %c0_i32_0 : i32, i32
  }
  func.func @transform_28(%arg0: i32) -> (i32, i32) {
    %c0_i32 = arith.constant 0 : i32
    %c0_i32_0 = arith.constant 0 : i32
    %c0_i32_1 = arith.constant 0 : i32
    return %c0_i32, %c0_i32_0 : i32, i32
  }
  func.func @transform_29(%arg0: i32) -> (i32, i32) {
    %c0_i32 = arith.constant 0 : i32
    %c0_i32_0 = arith.constant 0 : i32
    %c0_i32_1 = arith.constant 0 : i32
    return %c0_i32, %c0_i32_0 : i32, i32
  }
}

</mosaic_0001>

<llo_original>
// kernel: encoder_forward.1
$region0: #{encoder_forward.1}
  #allocation0 [shape = 'u32[]', space=smem, size = 0x4, offset = 0x4, fixed_abs, tag = 'smem constant byte address 0x4 - core index']
  #allocation1 [shape = 'u32[144,128]{1,0:T(1,128)}', space=vmem, size = 0x12000, scoped, tag = 'internal scratch']
  %s0 = inlined_call_operand.smem [shape: u32[30], index: -1, kind: input, shape index: {}]
  %s1 = sld [smem:[%s0]]
  %s2 = scalar_lea.smem %s0, 1
  %s3 = sld [smem:[%s2]]
  %s4 = scalar_lea.smem %s0, 2
  %s5 = sld [smem:[%s4]]
  %s6 = scalar_lea.smem %s0, 3
  %s7 = sld [smem:[%s6]]
  %s8 = scalar_lea.smem %s0, 4
  %s9 = sld [smem:[%s8]]
  %s10 = scalar_lea.smem %s0, 5
  %s11 = sld [smem:[%s10]]
  %s12 = scalar_lea.smem %s0, 6
  %s13 = sld [smem:[%s12]]
  %s14 = scalar_lea.smem %s0, 7
  %s15 = sld [smem:[%s14]]
  %s16 = scalar_lea.smem %s0, 8
  %s17 = sld [smem:[%s16]]
  %s18 = scalar_lea.smem %s0, 9
  %s19 = sld [smem:[%s18]]
  %s20 = scalar_lea.smem %s0, 10
  %s21 = sld [smem:[%s20]]
  %s22 = scalar_lea.smem %s0, 11
  %s23 = sld [smem:[%s22]]
  %s24 = scalar_lea.smem %s0, 12
  %s25 = sld [smem:[%s24]]
  %s26 = scalar_lea.smem %s0, 13
  %s27 = sld [smem:[%s26]]
  %s28 = scalar_lea.smem %s0, 14
  %s29 = sld [smem:[%s28]]
  %s30 = scalar_lea.smem %s0, 15
  %s31 = sld [smem:[%s30]]
  %s32 = scalar_lea.smem %s0, 16
  %s33 = sld [smem:[%s32]]
  %s34 = scalar_lea.smem %s0, 17
  %s35 = sld [smem:[%s34]]
  %s36 = scalar_lea.smem %s0, 18
  %s37 = sld [smem:[%s36]]
  %s38 = scalar_lea.smem %s0, 19
  %s39 = sld [smem:[%s38]]
  %s40 = scalar_lea.smem %s0, 20
  %s41 = sld [smem:[%s40]]
  %s42 = scalar_lea.smem %s0, 21
  %s43 = sld [smem:[%s42]]
  %s44 = scalar_lea.smem %s0, 22
  %s45 = sld [smem:[%s44]]
  %s46 = scalar_lea.smem %s0, 23
  %s47 = sld [smem:[%s46]]
  %s48 = scalar_lea.smem %s0, 24
  %s49 = sld [smem:[%s48]]
  %s50 = scalar_lea.smem %s0, 25
  %s51 = sld [smem:[%s50]]
  %s52 = scalar_lea.smem %s0, 26
  %s53 = sld [smem:[%s52]]
  %s54 = scalar_lea.smem %s0, 27
  %s55 = sld [smem:[%s54]]
  %s56 = scalar_lea.smem %s0, 28
  %s57 = sld [smem:[%s56]]
  %s58 = scalar_lea.smem %s0, 29
  %s59 = sld [smem:[%s58]]
  %60 = xla_tuple %s51, %s53, %s55, %s57, %s59
  %s61 = sld [smem:[#allocation0]]
  $region150: #{encoder_forward.1} parent=0
    _
  %s63 = ssub.s32 1, %s61
  %s64 = scalar_select 0, %s63, %s61
  $region1: #{encoder_forward.1} parent=0
    #allocation2 [shape = 'u8[98304]{0}', space=vmem, size = 0x18000, scoped, tag = 'input window, operand 19, single buffered']
    #allocation3 [shape = 's32[1]{0}', space=sflag, size = 0x4, scoped, tag = 'scoped memory for encoder_forward.1']
    #allocation4 [shape = 's32[1]{0}', space=sflag, size = 0x4, scoped, tag = 'scoped memory for encoder_forward.1']
    #allocation5 [shape = 'u8[98304]{0}', space=vmem, size = 0x18000, scoped, tag = 'input window, operand 21, single buffered']
    #allocation6 [shape = 's32[1]{0}', space=sflag, size = 0x4, scoped, tag = 'scoped memory for encoder_forward.1']
    #allocation7 [shape = 'u8[1024]{0}', space=vmem, size = 0x400, scoped, tag = 'output window, operand 4, single buffered']
    %65 = vsyncpa [#allocation3], 0
    %66 = vsyncpa [#allocation6], 0
    %67 = vsyncpa [#allocation4], 0
    // Predicated region
    $region2: #{encoder_forward.1} parent=1 // pred_check
      _
    $region3: #{encoder_forward.1} parent=1 // pred_check_branch
      %69 = sbr.rel (0) target = $region5
    $region4: #{encoder_forward.1} parent=1 // pred_region
      _
    $region5: #{encoder_forward.1} parent=1 // pred_fallthru
      _
    // Predicated region
    $region6: #{encoder_forward.1} parent=1 // pred_check
      _
    $region7: #{encoder_forward.1} parent=1 // pred_check_branch
      %71 = sbr.rel (0) target = $region9
    $region8: #{encoder_forward.1} parent=1 // pred_region
      _
    $region9: #{encoder_forward.1} parent=1 // pred_fallthru
      _
    // Predicated region
    $region10: #{encoder_forward.1} parent=1 // pred_check
      _
    $region11: #{encoder_forward.1} parent=1 // pred_check_branch
      %73 = sbr.rel (0) target = $region13
    $region12: #{encoder_forward.1} parent=1 // pred_region
      _
    $region13: #{encoder_forward.1} parent=1 // pred_fallthru
      _
    // Predicated region
    $region14: #{encoder_forward.1} parent=1 // pred_check
      _
    $region15: #{encoder_forward.1} parent=1 // pred_check_branch
      %75 = sbr.rel (0) target = $region17
    $region16: #{encoder_forward.1} parent=1 // pred_region
      _
    $region17: #{encoder_forward.1} parent=1 // pred_fallthru
      _
    // Predicated region
    $region18: #{encoder_forward.1} parent=1 // pred_check
      _
    $region19: #{encoder_forward.1} parent=1 // pred_check_branch
      %77 = sbr.rel (0) target = $region21
    $region20: #{encoder_forward.1} parent=1 // pred_region
      _
    $region21: #{encoder_forward.1} parent=1 // pred_fallthru
      _
    // Predicated region
    $region22: #{encoder_forward.1} parent=1 // pred_check
      _
    $region23: #{encoder_forward.1} parent=1 // pred_check_branch
      %79 = sbr.rel (0) target = $region25
    $region24: #{encoder_forward.1} parent=1 // pred_region
      _
    $region25: #{encoder_forward.1} parent=1 // pred_fallthru
      _
    // Predicated region
    $region26: #{encoder_forward.1} parent=1 // pred_check
      _
    $region27: #{encoder_forward.1} parent=1 // pred_check_branch
      %81 = sbr.rel (0) target = $region29
    $region28: #{encoder_forward.1} parent=1 // pred_region
      _
    $region29: #{encoder_forward.1} parent=1 // pred_fallthru
      _
    // Predicated region
    $region30: #{encoder_forward.1} parent=1 // pred_check
      _
    $region31: #{encoder_forward.1} parent=1 // pred_check_branch
      %83 = sbr.rel (0) target = $region33
    $region32: #{encoder_forward.1} parent=1 // pred_region
      _
    $region33: #{encoder_forward.1} parent=1 // pred_fallthru
      _
    // Predicated region
    $region34: #{encoder_forward.1} parent=1 // pred_check
      _
    $region35: #{encoder_forward.1} parent=1 // pred_check_branch
      %85 = sbr.rel (0) target = $region37
    $region36: #{encoder_forward.1} parent=1 // pred_region
      _
    $region37: #{encoder_forward.1} parent=1 // pred_fallthru
      _
    // Predicated region
    $region38: #{encoder_forward.1} parent=1 // pred_check
      _
    $region39: #{encoder_forward.1} parent=1 // pred_check_branch
      %87 = sbr.rel (0) target = $region41
    $region40: #{encoder_forward.1} parent=1 // pred_region
      _
    $region41: #{encoder_forward.1} parent=1 // pred_fallthru
      _
    // Predicated region
    $region42: #{encoder_forward.1} parent=1 // pred_check
      _
    $region43: #{encoder_forward.1} parent=1 // pred_check_branch
      %89 = sbr.rel (0) target = $region45
    $region44: #{encoder_forward.1} parent=1 // pred_region
      _
    $region45: #{encoder_forward.1} parent=1 // pred_fallthru
      _
    // Predicated region
    $region46: #{encoder_forward.1} parent=1 // pred_check
      _
    $region47: #{encoder_forward.1} parent=1 // pred_check_branch
      %91 = sbr.rel (0) target = $region49
    $region48: #{encoder_forward.1} parent=1 // pred_region
      _
    $region49: #{encoder_forward.1} parent=1 // pred_fallthru
      _
    // Predicated region
    $region50: #{encoder_forward.1} parent=1 // pred_check
      _
    $region51: #{encoder_forward.1} parent=1 // pred_check_branch
      %93 = sbr.rel (0) target = $region53
    $region52: #{encoder_forward.1} parent=1 // pred_region
      _
    $region53: #{encoder_forward.1} parent=1 // pred_fallthru
      _
    // Predicated region
    $region54: #{encoder_forward.1} parent=1 // pred_check
      _
    $region55: #{encoder_forward.1} parent=1 // pred_check_branch
      %95 = sbr.rel (0) target = $region57
    $region56: #{encoder_forward.1} parent=1 // pred_region
      _
    $region57: #{encoder_forward.1} parent=1 // pred_fallthru
      _
    // Predicated region
    $region58: #{encoder_forward.1} parent=1 // pred_check
      _
    $region59: #{encoder_forward.1} parent=1 // pred_check_branch
      %97 = sbr.rel (0) target = $region61
    $region60: #{encoder_forward.1} parent=1 // pred_region
      _
    $region61: #{encoder_forward.1} parent=1 // pred_fallthru
      _
    // Predicated region
    $region62: #{encoder_forward.1} parent=1 // pred_check
      _
    $region63: #{encoder_forward.1} parent=1 // pred_check_branch
      %99 = sbr.rel (0) target = $region65
    $region64: #{encoder_forward.1} parent=1 // pred_region
      _
    $region65: #{encoder_forward.1} parent=1 // pred_fallthru
      _
    // Predicated region
    $region66: #{encoder_forward.1} parent=1 // pred_check
      _
    $region67: #{encoder_forward.1} parent=1 // pred_check_branch
      %101 = sbr.rel (0) target = $region69
    $region68: #{encoder_forward.1} parent=1 // pred_region
      _
    $region69: #{encoder_forward.1} parent=1 // pred_fallthru
      _
    // Predicated region
    $region70: #{encoder_forward.1} parent=1 // pred_check
      _
    $region71: #{encoder_forward.1} parent=1 // pred_check_branch
      %103 = sbr.rel (0) target = $region73
    $region72: #{encoder_forward.1} parent=1 // pred_region
      _
    $region73: #{encoder_forward.1} parent=1 // pred_fallthru
      _
    // Predicated region
    $region74: #{encoder_forward.1} parent=1 // pred_check
      _
    $region75: #{encoder_forward.1} parent=1 // pred_check_branch
      %105 = sbr.rel (0) target = $region77
    $region76: #{encoder_forward.1} parent=1 // pred_region
      _
    $region77: #{encoder_forward.1} parent=1 // pred_fallthru
      _
    // Predicated region
    $region78: #{encoder_forward.1} parent=1 // pred_check
      _
    $region79: #{encoder_forward.1} parent=1 // pred_check_branch
      %107 = sbr.rel (0) target = $region81
    $region80: #{encoder_forward.1} parent=1 // pred_region
      %s109 = ssub.s32 3072, 3072
      %110 = vsyncadd [#allocation3], %s109
      %s111 = sshll.u32 [#allocation2], 4
      %s112 = int_to_ptr.vmem [resolvable:$true] %s111
      %117 = dma.hbm_to_vmem [thread:$0]  %s39, 3072, %s112, [#allocation3], 64, 64, 4
    $region81: #{encoder_forward.1} parent=1 // pred_fallthru
      _
    // Predicated region
    $region82: #{encoder_forward.1} parent=1 // pred_check
      _
    $region83: #{encoder_forward.1} parent=1 // pred_check_branch
      %119 = sbr.rel (0) target = $region85
    $region84: #{encoder_forward.1} parent=1 // pred_region
      _
    $region85: #{encoder_forward.1} parent=1 // pred_fallthru
      _
    // Predicated region
    $region86: #{encoder_forward.1} parent=1 // pred_check
      _
    $region87: #{encoder_forward.1} parent=1 // pred_check_branch
      %121 = sbr.rel (0) target = $region89
    $region88: #{encoder_forward.1} parent=1 // pred_region
      %s123 = ssub.s32 3072, 3072
      %124 = vsyncadd [#allocation6], %s123
      %s125 = sshll.u32 [#allocation5], 4
      %s126 = int_to_ptr.vmem [resolvable:$true] %s125
      %131 = dma.hbm_to_vmem [thread:$0]  %s43, 3072, %s126, [#allocation6], 64, 64, 4
    $region89: #{encoder_forward.1} parent=1 // pred_fallthru
      _
    // Predicated region
    $region90: #{encoder_forward.1} parent=1 // pred_check
      _
    $region91: #{encoder_forward.1} parent=1 // pred_check_branch
      %133 = sbr.rel (0) target = $region93
    $region92: #{encoder_forward.1} parent=1 // pred_region
      _
    $region93: #{encoder_forward.1} parent=1 // pred_fallthru
      _
    // Predicated region
    $region94: #{encoder_forward.1} parent=1 // pred_check
      _
    $region95: #{encoder_forward.1} parent=1 // pred_check_branch
      %135 = sbr.rel (0) target = $region97
    $region96: #{encoder_forward.1} parent=1 // pred_region
      _
    $region97: #{encoder_forward.1} parent=1 // pred_fallthru
      _
    // Predicated region
    $region98: #{encoder_forward.1} parent=1 // pred_check
      _
    $region99: #{encoder_forward.1} parent=1 // pred_check_branch
      %137 = sbr.rel (0) target = $region101
    $region100: #{encoder_forward.1} parent=1 // pred_region
      _
    $region101: #{encoder_forward.1} parent=1 // pred_fallthru
      _
    // Predicated region
    $region102: #{encoder_forward.1} parent=1 // pred_check
      _
    $region103: #{encoder_forward.1} parent=1 // pred_check_branch
      %139 = sbr.rel (0) target = $region105
    $region104: #{encoder_forward.1} parent=1 // pred_region
      %140 = dma.done [#allocation3], 3072
    $region105: #{encoder_forward.1} parent=1 // pred_fallthru
      _
    // Predicated region
    $region106: #{encoder_forward.1} parent=1 // pred_check
      _
    $region107: #{encoder_forward.1} parent=1 // pred_check_branch
      %142 = sbr.rel (0) target = $region109
    $region108: #{encoder_forward.1} parent=1 // pred_region
      %143 = dma.done [#allocation6], 3072
    $region109: #{encoder_forward.1} parent=1 // pred_fallthru
      _
    %v145 = vld [vmem:[%s1] sm:$0xff]
    %v146 = vld [vmem:[%s1 + $0x8] sm:$0xff]
    %v147 = vld [vmem:[%s1 + $0x10] sm:$0xff]
    %v148 = vld [vmem:[%s1 + $0x18] sm:$0xff]
    %v149 = vlaneseq
    %v150 = vshrl.u32 %v149, 7
    %v151 = vadd.s32 %v150, 8
    %v152 = vadd.s32 %v150, 16
    %v153 = vadd.s32 %v150, 24
    %vm154 = vcmp.lt.s32.totalorder %v150, 0
    %v155 = vsub.s32 0, %v150
    %v156 = vsel %vm154, %v155, %v150
    %v157 = vshrl.u32 %v156, 4
    %v158 = vand.u32 %v156, 15
    %v159 = vsub.s32 0, %v158
    %v160 = vsel %vm154, %v159, %v158
    %vm161 = vcmp.lt.s32.totalorder %v151, 0
    %v162 = vsub.s32 0, %v151
    %v163 = vsel %vm161, %v162, %v151
    %v164 = vshrl.u32 %v163, 4
    %v165 = vand.u32 %v163, 15
    %v166 = vsub.s32 0, %v165
    %v167 = vsel %vm161, %v166, %v165
    %vm168 = vcmp.lt.s32.totalorder %v152, 0
    %v169 = vsub.s32 0, %v152
    %v170 = vsel %vm168, %v169, %v152
    %v171 = vshrl.u32 %v170, 4
    %v172 = vand.u32 %v170, 15
    %v173 = vsub.s32 0, %v172
    %v174 = vsel %vm168, %v173, %v172
    %vm175 = vcmp.lt.s32.totalorder %v153, 0
    %v176 = vsub.s32 0, %v153
    %v177 = vsel %vm175, %v176, %v153
    %v178 = vshrl.u32 %v177, 4
    %v179 = vand.u32 %v177, 15
    %v180 = vsub.s32 0, %v179
    %v181 = vsel %vm175, %v180, %v179
    %vm182 = vcmp.ne.s32.totalorder %v160, 0
    %vm183 = vcmp.ne.s32.totalorder %v167, 0
    %vm184 = vcmp.ne.s32.totalorder %v174, 0
    %vm185 = vcmp.ne.s32.totalorder %v181, 0
    %vm186 = vcmp.lt.s32.totalorder %v160, 0
    %vm187 = vcmp.lt.s32.totalorder %v167, 0
    %vm188 = vcmp.lt.s32.totalorder %v174, 0
    %vm189 = vcmp.lt.s32.totalorder %v181, 0
    %vm190 = vmand %vm186, %vm182
    %vm191 = vmand %vm187, %vm183
    %vm192 = vmand %vm188, %vm184
    %vm193 = vmand %vm189, %vm185
    %v194 = vadd.s32 %v160, 16
    %v195 = vadd.s32 %v167, 16
    %v196 = vadd.s32 %v174, 16
    %v197 = vadd.s32 %v181, 16
    %v198 = vsel %vm190, %v194, %v160
    %v199 = vsel %vm191, %v195, %v167
    %v200 = vsel %vm192, %v196, %v174
    %v201 = vsel %vm193, %v197, %v181
    %vm202 = vcmp.ge.s32.totalorder %v198, 1
    %vm203 = vcmp.ge.s32.totalorder %v199, 1
    %vm204 = vcmp.ge.s32.totalorder %v200, 1
    %vm205 = vcmp.ge.s32.totalorder %v201, 1
    %v206 = vsel %vm202, 1, 0
    %v207 = vsel %vm203, 1, 0
    %v208 = vsel %vm204, 1, 0
    %v209 = vsel %vm205, 1, 0
    %v210 = vcvt.s32.f32 %v206
    %v211 = vcvt.s32.f32 %v207
    %v212 = vcvt.s32.f32 %v208
    %v213 = vcvt.s32.f32 %v209
    %vm214 = vcmp.le.s32.totalorder %v198, 14
    %vm215 = vcmp.le.s32.totalorder %v199, 14
    %vm216 = vcmp.le.s32.totalorder %v200, 14
    %vm217 = vcmp.le.s32.totalorder %v201, 14
    %v218 = vsel %vm214, 1, 0
    %v219 = vsel %vm215, 1, 0
    %v220 = vsel %vm216, 1, 0
    %v221 = vsel %vm217, 1, 0
    %v222 = vcvt.s32.f32 %v218
    %v223 = vcvt.s32.f32 %v219
    %v224 = vcvt.s32.f32 %v220
    %v225 = vcvt.s32.f32 %v221
    %v227 = vrot.slane %v148, 7
    %vm232 = vcmask 1040384
    %v233 = vrot.slane %v145, 7
    %v234 = vrot.slane %v146, 7
    %v235 = vsel %vm232, %v233, %v234
    %v236 = vrot.slane %v147, 7
    %v237 = vsel %vm232, %v234, %v236
    %v238 = vsel %vm232, %v236, %v227
    %v243 = vsel %vm232, %v227, %v233
    %v244 = vmul.f32 %v243, %v210
    %v245 = vmul.f32 %v235, %v211
    %v246 = vmul.f32 %v237, %v212
    %v247 = vmul.f32 %v238, %v213
    %vm248 = vcmask 1046528
    %v249 = vrot.slane %v145, 1
    %v250 = vrot.slane %v146, 1
    %v251 = vsel %vm248, %v249, %v250
    %v252 = vrot.slane %v147, 1
    %v253 = vsel %vm248, %v250, %v252
    %v254 = vrot.slane %v148, 1
    %v255 = vsel %vm248, %v252, %v254
    %v261 = vsel %vm248, %v254, %v249
    %v262 = vmul.f32 %v251, %v222
    %v263 = vmul.f32 %v253, %v223
    %v264 = vmul.f32 %v255, %v224
    %v265 = vmul.f32 %v261, %v225
    %v266 = vpack.c.bf16 %v245, %v244
    %v267 = vpack.c.bf16 %v146, %v145
    %v268 = vpack.c.bf16 %v263, %v262
    %v269 = vpack.c.bf16 %v247, %v246
    %v270 = vpack.c.bf16 %v148, %v147
    %v271 = vpack.c.bf16 %v265, %v264
    %v272 = vld [vmem:[%s3] sm:$0xf]
    %v273 = vld [vmem:[%s3 + $0x4] sm:$0xf]
    %v274 = vld [vmem:[%s3 + $0x8] sm:$0xf]
    %v275 = vld [vmem:[%s3 + $0xc] sm:$0xf]
    %v276 = vld [vmem:[%s3 + $0x10] sm:$0xf]
    %v277 = vld [vmem:[%s3 + $0x14] sm:$0xf]
    %v278 = vld [vmem:[%s3 + $0x18] sm:$0xf]
    %v279 = vld [vmem:[%s3 + $0x1c] sm:$0xf]
    %v280 = vld [vmem:[%s3 + $0x20] sm:$0xf]
    %v281 = vld [vmem:[%s3 + $0x24] sm:$0xf]
    %v282 = vld [vmem:[%s3 + $0x28] sm:$0xf]
    %v283 = vld [vmem:[%s3 + $0x2c] sm:$0xf]
    %v284 = vld [vmem:[%s3 + $0x30] sm:$0xf]
    %v285 = vld [vmem:[%s3 + $0x34] sm:$0xf]
    %v286 = vld [vmem:[%s3 + $0x38] sm:$0xf]
    %v287 = vld [vmem:[%s3 + $0x3c] sm:$0xf]
    %v288 = vld [vmem:[%s3 + $0x40] sm:$0xf]
    %v289 = vld [vmem:[%s3 + $0x44] sm:$0xf]
    %v290 = vld [vmem:[%s3 + $0x48] sm:$0xf]
    %v291 = vld [vmem:[%s3 + $0x4c] sm:$0xf]
    %v292 = vld [vmem:[%s3 + $0x50] sm:$0xf]
    %v293 = vld [vmem:[%s3 + $0x54] sm:$0xf]
    %v294 = vld [vmem:[%s3 + $0x58] sm:$0xf]
    %v295 = vld [vmem:[%s3 + $0x5c] sm:$0xf]
    %v296 = vld [vmem:[%s3 + $0x60] sm:$0xf]
    %v297 = vld [vmem:[%s3 + $0x64] sm:$0xf]
    %v298 = vld [vmem:[%s3 + $0x68] sm:$0xf]
    %v299 = vld [vmem:[%s3 + $0x6c] sm:$0xf]
    %v300 = vld [vmem:[%s3 + $0x70] sm:$0xf]
    %v301 = vld [vmem:[%s3 + $0x74] sm:$0xf]
    %v302 = vld [vmem:[%s3 + $0x78] sm:$0xf]
    %v303 = vld [vmem:[%s3 + $0x7c] sm:$0xf]
    %v304 = vld [vmem:[%s3 + $0x80] sm:$0xf]
    %v305 = vld [vmem:[%s3 + $0x84] sm:$0xf]
    %v306 = vld [vmem:[%s3 + $0x88] sm:$0xf]
    %v307 = vld [vmem:[%s3 + $0x8c] sm:$0xf]
    %v308 = vld [vmem:[%s3 + $0x90] sm:$0xf]
    %v309 = vld [vmem:[%s3 + $0x94] sm:$0xf]
    %v310 = vld [vmem:[%s3 + $0x98] sm:$0xf]
    %v311 = vld [vmem:[%s3 + $0x9c] sm:$0xf]
    %v312 = vld [vmem:[%s3 + $0xa0] sm:$0xf]
    %v313 = vld [vmem:[%s3 + $0xa4] sm:$0xf]
    %v314 = vld [vmem:[%s3 + $0xa8] sm:$0xf]
    %v315 = vld [vmem:[%s3 + $0xac] sm:$0xf]
    %v316 = vld [vmem:[%s3 + $0xb0] sm:$0xf]
    %v317 = vld [vmem:[%s3 + $0xb4] sm:$0xf]
    %v318 = vld [vmem:[%s3 + $0xb8] sm:$0xf]
    %v319 = vld [vmem:[%s3 + $0xbc] sm:$0xf]
    %v320 = vld [vmem:[%s5] sm:$0x1]
    %v322 = vlaneseq
    %v323 = vshrl.u32 %v322, 7
    %v324 = vsub.s32 0, %v323
    %v325 = vrot.slane %v320, %v324
    %v375 = vunpack.c.l.b16 %v272
    %v376 = vunpack.c.l.b16 %v273
    %v377 = vunpack.c.l.b16 %v274
    %v378 = vunpack.c.l.b16 %v275
    %v379 = vunpack.c.l.b16 %v276
    %v380 = vunpack.c.l.b16 %v277
    %v381 = vunpack.c.l.b16 %v278
    %v382 = vunpack.c.l.b16 %v279
    %v383 = vunpack.c.l.b16 %v280
    %v384 = vunpack.c.l.b16 %v281
    %v385 = vunpack.c.l.b16 %v282
    %v386 = vunpack.c.l.b16 %v283
    %v387 = vunpack.c.l.b16 %v284
    %v388 = vunpack.c.l.b16 %v285
    %v389 = vunpack.c.l.b16 %v286
    %v390 = vunpack.c.l.b16 %v287
    %v391 = vunpack.c.l.b16 %v288
    %v392 = vunpack.c.l.b16 %v289
    %v393 = vunpack.c.l.b16 %v290
    %v394 = vunpack.c.l.b16 %v291
    %v395 = vunpack.c.l.b16 %v292
    %v396 = vunpack.c.l.b16 %v293
    %v397 = vunpack.c.l.b16 %v294
    %v398 = vunpack.c.l.b16 %v295
    %v399 = vunpack.c.l.b16 %v296
    %v400 = vunpack.c.l.b16 %v297
    %v401 = vunpack.c.l.b16 %v298
    %v402 = vunpack.c.l.b16 %v299
    %v403 = vunpack.c.l.b16 %v300
    %v404 = vunpack.c.l.b16 %v301
    %v405 = vunpack.c.l.b16 %v302
    %v406 = vunpack.c.l.b16 %v303
    %v407 = vunpack.c.l.b16 %v304
    %v408 = vunpack.c.l.b16 %v305
    %v409 = vunpack.c.l.b16 %v306
    %v410 = vunpack.c.l.b16 %v307
    %v411 = vunpack.c.l.b16 %v308
    %v412 = vunpack.c.l.b16 %v309
    %v413 = vunpack.c.l.b16 %v310
    %v414 = vunpack.c.l.b16 %v311
    %v415 = vunpack.c.l.b16 %v312
    %v416 = vunpack.c.l.b16 %v313
    %v417 = vunpack.c.l.b16 %v314
    %v418 = vunpack.c.l.b16 %v315
    %v419 = vunpack.c.l.b16 %v316
    %v420 = vunpack.c.l.b16 %v317
    %v421 = vunpack.c.l.b16 %v318
    %v422 = vunpack.c.l.b16 %v319
    %v423 = vpack.c.b16 %v376, %v375
    %v424 = vpack.c.b16 %v378, %v377
    %v425 = vpack.c.b16 %v380, %v379
    %v426 = vpack.c.b16 %v382, %v381
    %v427 = vpack.c.b16 %v384, %v383
    %v428 = vpack.c.b16 %v386, %v385
    %v429 = vpack.c.b16 %v388, %v387
    %v430 = vpack.c.b16 %v390, %v389
    %v431 = vpack.c.b16 %v392, %v391
    %v432 = vpack.c.b16 %v394, %v393
    %v433 = vpack.c.b16 %v396, %v395
    %v434 = vpack.c.b16 %v398, %v397
    %v435 = vpack.c.b16 %v400, %v399
    %v436 = vpack.c.b16 %v402, %v401
    %v437 = vpack.c.b16 %v404, %v403
    %v438 = vpack.c.b16 %v406, %v405
    %v439 = vpack.c.b16 %v408, %v407
    %v440 = vpack.c.b16 %v410, %v409
    %v441 = vpack.c.b16 %v412, %v411
    %v442 = vpack.c.b16 %v414, %v413
    %v443 = vpack.c.b16 %v416, %v415
    %v444 = vpack.c.b16 %v418, %v417
    %v445 = vpack.c.b16 %v420, %v419
    %v446 = vpack.c.b16 %v422, %v421
    %471 = vmatprep.subr.bf16.mxu0 0
    %472 = vmatpush1.bf16.msra.mxu0 %v423
    %473 = vmatprep.subr.bf16.mxu0 0
    %474 = vmatpush1.bf16.msra.mxu0 %v424
    %475 = vmatprep.subr.bf16.mxu0 0
    %476 = vmatpush1.bf16.msra.mxu0 %v425
    %477 = vmatprep.subr.bf16.mxu0 0
    %478 = vmatpush1.bf16.msra.mxu0 %v426
    %479 = vmatprep.subr.bf16.mxu0 0
    %480 = vmatpush1.bf16.msra.mxu0 %v427
    %481 = vmatprep.subr.bf16.mxu0 0
    %482 = vmatpush1.bf16.msra.mxu0 %v428
    %483 = vmatprep.subr.bf16.mxu0 0
    %484 = vmatpush1.bf16.msra.mxu0 %v429
    %485 = vmatprep.subr.bf16.mxu0 0
    %486 = vmatpush1.bf16.msra.mxu0 %v430
    %487 = vmatprep.subr.bf16.mxu0 0
    %488 = vmatpush1.bf16.msra.mxu0 %v431
    %489 = vmatprep.subr.bf16.mxu0 0
    %490 = vmatpush1.bf16.msra.mxu0 %v432
    %491 = vmatprep.subr.bf16.mxu0 0
    %492 = vmatpush1.bf16.msra.mxu0 %v433
    %493 = vmatprep.subr.bf16.mxu0 0
    %494 = vmatpush1.bf16.msra.mxu0 %v434
    %495 = vmatprep.subr.bf16.mxu0 0
    %496 = vmatpush1.bf16.msra.mxu0 %v435
    %497 = vmatprep.subr.bf16.mxu0 0
    %498 = vmatpush1.bf16.msra.mxu0 %v436
    %499 = vmatprep.subr.bf16.mxu0 0
    %500 = vmatpush1.bf16.msra.mxu0 %v437
    %501 = vmatprep.subr.bf16.mxu0 0
    %502 = vmatpush1.bf16.msra.mxu0 %v438
    %503 = vmatprep.mubr.bf16.mxu0 %v267
    %504 = vmatmul.mubr.bf16.gmra.mrb[0].mxu0 %v266
    %v505 = vpop.f32.mrb[0].mxu0
    %v506 = vadd.f32 %v325, %v505
    %v507 = vpop.f32.mrb[0].mxu0
    %v508 = vpop.f32.mrb[0].mxu0
    %v509 = vadd.f32 %v325, %v508
    %v510 = vpop.f32.mrb[0].mxu0
    %511 = vmatprep.mubr.bf16.mxu0 %v270
    %512 = vmatmul.mubr.bf16.gmra.mrb[0].mxu0 %v269
    %v513 = vpop.f32.mrb[0].mxu0
    %v514 = vadd.f32 %v325, %v513
    %v515 = vpop.f32.mrb[0].mxu0
    %v516 = vpop.f32.mrb[0].mxu0
    %v517 = vadd.f32 %v325, %v516
    %v518 = vpop.f32.mrb[0].mxu0
    %519 = vdwg.mxu0
    %520 = vmatprep.subr.bf16.mxu0 0
    %521 = vmatpush1.bf16.msra.mxu0 %v439
    %522 = vmatprep.subr.bf16.mxu0 0
    %523 = vmatpush1.bf16.msra.mxu0 %v440
    %524 = vmatprep.subr.bf16.mxu0 0
    %525 = vmatpush1.bf16.msra.mxu0 %v441
    %526 = vmatprep.subr.bf16.mxu0 0
    %527 = vmatpush1.bf16.msra.mxu0 %v442
    %528 = vmatprep.subr.bf16.mxu0 0
    %529 = vmatpush1.bf16.msra.mxu0 %v443
    %530 = vmatprep.subr.bf16.mxu0 0
    %531 = vmatpush1.bf16.msra.mxu0 %v444
    %532 = vmatprep.subr.bf16.mxu0 0
    %533 = vmatpush1.bf16.msra.mxu0 %v445
    %534 = vmatprep.subr.bf16.mxu0 0
    %535 = vmatpush1.bf16.msra.mxu0 %v446
    %536 = vmatprep.subr.bf16.mxu0 0
    %537 = vmatpush1.bf16.msra.mxu0 0
    %538 = vmatprep.subr.bf16.mxu0 0
    %539 = vmatpush1.bf16.msra.mxu0 0
    %540 = vmatprep.subr.bf16.mxu0 0
    %541 = vmatpush1.bf16.msra.mxu0 0
    %542 = vmatprep.subr.bf16.mxu0 0
    %543 = vmatpush1.bf16.msra.mxu0 0
    %544 = vmatprep.subr.bf16.mxu0 0
    %545 = vmatpush1.bf16.msra.mxu0 0
    %546 = vmatprep.subr.bf16.mxu0 0
    %547 = vmatpush1.bf16.msra.mxu0 0
    %548 = vmatprep.subr.bf16.mxu0 0
    %549 = vmatpush1.bf16.msra.mxu0 0
    %550 = vmatprep.subr.bf16.mxu0 0
    %551 = vmatpush1.bf16.msra.mxu0 0
    %552 = vmatprep.mubr.bf16.mxu0 0
    %553 = vmatmul.mubr.bf16.gmra.mrb[0].mxu0 %v268
    %v554 = vpop.f32.mrb[0].mxu0
    %v555 = vadd.f32 %v506, %v554
    %v556 = vpop.f32.mrb[0].mxu0
    %v557 = vpop.f32.mrb[0].mxu0
    %v558 = vadd.f32 %v509, %v557
    %v559 = vpop.f32.mrb[0].mxu0
    %560 = vmatprep.mubr.bf16.mxu0 0
    %561 = vmatmul.mubr.bf16.gmra.mrb[0].mxu0 %v271
    %v562 = vpop.f32.mrb[0].mxu0
    %v563 = vadd.f32 %v514, %v562
    %v564 = vpop.f32.mrb[0].mxu0
    %v565 = vpop.f32.mrb[0].mxu0
    %v566 = vadd.f32 %v517, %v565
    %v567 = vpop.f32.mrb[0].mxu0
    %568 = vdwg.mxu0
    %v570 = vrot.slane %v566, 7
    %v575 = vrot.slane %v555, 7
    %v576 = vrot.slane %v558, 7
    %v577 = vsel %vm232, %v575, %v576
    %v578 = vrot.slane %v563, 7
    %v579 = vsel %vm232, %v576, %v578
    %v580 = vsel %vm232, %v578, %v570
    %v585 = vsel %vm232, %v570, %v575
    %v586 = vmul.f32 %v585, %v210
    %v587 = vmul.f32 %v577, %v211
    %v588 = vmul.f32 %v579, %v212
    %v589 = vmul.f32 %v580, %v213
    %v590 = vrot.slane %v555, 1
    %v591 = vrot.slane %v558, 1
    %v592 = vsel %vm248, %v590, %v591
    %v593 = vrot.slane %v563, 1
    %v594 = vsel %vm248, %v591, %v593
    %v595 = vrot.slane %v566, 1
    %v596 = vsel %vm248, %v593, %v595
    %v602 = vsel %vm248, %v595, %v590
    %v603 = vmul.f32 %v592, %v222
    %v604 = vmul.f32 %v594, %v223
    %v605 = vmul.f32 %v596, %v224
    %v606 = vmul.f32 %v602, %v225
    %v607 = vpack.c.bf16 %v587, %v586
    %v608 = vpack.c.bf16 %v558, %v555
    %v609 = vpack.c.bf16 %v604, %v603
    %v610 = vpack.c.bf16 %v589, %v588
    %v611 = vpack.c.bf16 %v566, %v563
    %v612 = vpack.c.bf16 %v606, %v605
    %v613 = vld [vmem:[%s7] sm:$0xf]
    %v614 = vld [vmem:[%s7 + $0x4] sm:$0xf]
    %v615 = vld [vmem:[%s7 + $0x8] sm:$0xf]
    %v616 = vld [vmem:[%s7 + $0xc] sm:$0xf]
    %v617 = vld [vmem:[%s7 + $0x10] sm:$0xf]
    %v618 = vld [vmem:[%s7 + $0x14] sm:$0xf]
    %v619 = vld [vmem:[%s7 + $0x18] sm:$0xf]
    %v620 = vld [vmem:[%s7 + $0x1c] sm:$0xf]
    %v621 = vld [vmem:[%s7 + $0x20] sm:$0xf]
    %v622 = vld [vmem:[%s7 + $0x24] sm:$0xf]
    %v623 = vld [vmem:[%s7 + $0x28] sm:$0xf]
    %v624 = vld [vmem:[%s7 + $0x2c] sm:$0xf]
    %v625 = vld [vmem:[%s7 + $0x30] sm:$0xf]
    %v626 = vld [vmem:[%s7 + $0x34] sm:$0xf]
    %v627 = vld [vmem:[%s7 + $0x38] sm:$0xf]
    %v628 = vld [vmem:[%s7 + $0x3c] sm:$0xf]
    %v629 = vld [vmem:[%s7 + $0x40] sm:$0xf]
    %v630 = vld [vmem:[%s7 + $0x44] sm:$0xf]
    %v631 = vld [vmem:[%s7 + $0x48] sm:$0xf]
    %v632 = vld [vmem:[%s7 + $0x4c] sm:$0xf]
    %v633 = vld [vmem:[%s7 + $0x50] sm:$0xf]
    %v634 = vld [vmem:[%s7 + $0x54] sm:$0xf]
    %v635 = vld [vmem:[%s7 + $0x58] sm:$0xf]
    %v636 = vld [vmem:[%s7 + $0x5c] sm:$0xf]
    %v637 = vld [vmem:[%s7 + $0x60] sm:$0xf]
    %v638 = vld [vmem:[%s7 + $0x64] sm:$0xf]
    %v639 = vld [vmem:[%s7 + $0x68] sm:$0xf]
    %v640 = vld [vmem:[%s7 + $0x6c] sm:$0xf]
    %v641 = vld [vmem:[%s7 + $0x70] sm:$0xf]
    %v642 = vld [vmem:[%s7 + $0x74] sm:$0xf]
    %v643 = vld [vmem:[%s7 + $0x78] sm:$0xf]
    %v644 = vld [vmem:[%s7 + $0x7c] sm:$0xf]
    %v645 = vld [vmem:[%s7 + $0x80] sm:$0xf]
    %v646 = vld [vmem:[%s7 + $0x84] sm:$0xf]
    %v647 = vld [vmem:[%s7 + $0x88] sm:$0xf]
    %v648 = vld [vmem:[%s7 + $0x8c] sm:$0xf]
    %v649 = vld [vmem:[%s7 + $0x90] sm:$0xf]
    %v650 = vld [vmem:[%s7 + $0x94] sm:$0xf]
    %v651 = vld [vmem:[%s7 + $0x98] sm:$0xf]
    %v652 = vld [vmem:[%s7 + $0x9c] sm:$0xf]
    %v653 = vld [vmem:[%s7 + $0xa0] sm:$0xf]
    %v654 = vld [vmem:[%s7 + $0xa4] sm:$0xf]
    %v655 = vld [vmem:[%s7 + $0xa8] sm:$0xf]
    %v656 = vld [vmem:[%s7 + $0xac] sm:$0xf]
    %v657 = vld [vmem:[%s7 + $0xb0] sm:$0xf]
    %v658 = vld [vmem:[%s7 + $0xb4] sm:$0xf]
    %v659 = vld [vmem:[%s7 + $0xb8] sm:$0xf]
    %v660 = vld [vmem:[%s7 + $0xbc] sm:$0xf]
    %v661 = vld [vmem:[%s9] sm:$0x1]
    %v663 = vlaneseq
    %v664 = vshrl.u32 %v663, 7
    %v665 = vsub.s32 0, %v664
    %v666 = vrot.slane %v661, %v665
    %v716 = vunpack.c.l.b16 %v613
    %v717 = vunpack.c.l.b16 %v614
    %v718 = vunpack.c.l.b16 %v615
    %v719 = vunpack.c.l.b16 %v616
    %v720 = vunpack.c.l.b16 %v617
    %v721 = vunpack.c.l.b16 %v618
    %v722 = vunpack.c.l.b16 %v619
    %v723 = vunpack.c.l.b16 %v620
    %v724 = vunpack.c.l.b16 %v621
    %v725 = vunpack.c.l.b16 %v622
    %v726 = vunpack.c.l.b16 %v623
    %v727 = vunpack.c.l.b16 %v624
    %v728 = vunpack.c.l.b16 %v625
    %v729 = vunpack.c.l.b16 %v626
    %v730 = vunpack.c.l.b16 %v627
    %v731 = vunpack.c.l.b16 %v628
    %v732 = vunpack.c.l.b16 %v629
    %v733 = vunpack.c.l.b16 %v630
    %v734 = vunpack.c.l.b16 %v631
    %v735 = vunpack.c.l.b16 %v632
    %v736 = vunpack.c.l.b16 %v633
    %v737 = vunpack.c.l.b16 %v634
    %v738 = vunpack.c.l.b16 %v635
    %v739 = vunpack.c.l.b16 %v636
    %v740 = vunpack.c.l.b16 %v637
    %v741 = vunpack.c.l.b16 %v638
    %v742 = vunpack.c.l.b16 %v639
    %v743 = vunpack.c.l.b16 %v640
    %v744 = vunpack.c.l.b16 %v641
    %v745 = vunpack.c.l.b16 %v642
    %v746 = vunpack.c.l.b16 %v643
    %v747 = vunpack.c.l.b16 %v644
    %v748 = vunpack.c.l.b16 %v645
    %v749 = vunpack.c.l.b16 %v646
    %v750 = vunpack.c.l.b16 %v647
    %v751 = vunpack.c.l.b16 %v648
    %v752 = vunpack.c.l.b16 %v649
    %v753 = vunpack.c.l.b16 %v650
    %v754 = vunpack.c.l.b16 %v651
    %v755 = vunpack.c.l.b16 %v652
    %v756 = vunpack.c.l.b16 %v653
    %v757 = vunpack.c.l.b16 %v654
    %v758 = vunpack.c.l.b16 %v655
    %v759 = vunpack.c.l.b16 %v656
    %v760 = vunpack.c.l.b16 %v657
    %v761 = vunpack.c.l.b16 %v658
    %v762 = vunpack.c.l.b16 %v659
    %v763 = vunpack.c.l.b16 %v660
    %v764 = vpack.c.b16 %v717, %v716
    %v765 = vpack.c.b16 %v719, %v718
    %v766 = vpack.c.b16 %v721, %v720
    %v767 = vpack.c.b16 %v723, %v722
    %v768 = vpack.c.b16 %v725, %v724
    %v769 = vpack.c.b16 %v727, %v726
    %v770 = vpack.c.b16 %v729, %v728
    %v771 = vpack.c.b16 %v731, %v730
    %v772 = vpack.c.b16 %v733, %v732
    %v773 = vpack.c.b16 %v735, %v734
    %v774 = vpack.c.b16 %v737, %v736
    %v775 = vpack.c.b16 %v739, %v738
    %v776 = vpack.c.b16 %v741, %v740
    %v777 = vpack.c.b16 %v743, %v742
    %v778 = vpack.c.b16 %v745, %v744
    %v779 = vpack.c.b16 %v747, %v746
    %v780 = vpack.c.b16 %v749, %v748
    %v781 = vpack.c.b16 %v751, %v750
    %v782 = vpack.c.b16 %v753, %v752
    %v783 = vpack.c.b16 %v755, %v754
    %v784 = vpack.c.b16 %v757, %v756
    %v785 = vpack.c.b16 %v759, %v758
    %v786 = vpack.c.b16 %v761, %v760
    %v787 = vpack.c.b16 %v763, %v762
    %812 = vmatprep.subr.bf16.mxu0 0
    %813 = vmatpush1.bf16.msra.mxu0 %v764
    %814 = vmatprep.subr.bf16.mxu0 0
    %815 = vmatpush1.bf16.msra.mxu0 %v765
    %816 = vmatprep.subr.bf16.mxu0 0
    %817 = vmatpush1.bf16.msra.mxu0 %v766
    %818 = vmatprep.subr.bf16.mxu0 0
    %819 = vmatpush1.bf16.msra.mxu0 %v767
    %820 = vmatprep.subr.bf16.mxu0 0
    %821 = vmatpush1.bf16.msra.mxu0 %v768
    %822 = vmatprep.subr.bf16.mxu0 0
    %823 = vmatpush1.bf16.msra.mxu0 %v769
    %824 = vmatprep.subr.bf16.mxu0 0
    %825 = vmatpush1.bf16.msra.mxu0 %v770
    %826 = vmatprep.subr.bf16.mxu0 0
    %827 = vmatpush1.bf16.msra.mxu0 %v771
    %828 = vmatprep.subr.bf16.mxu0 0
    %829 = vmatpush1.bf16.msra.mxu0 %v772
    %830 = vmatprep.subr.bf16.mxu0 0
    %831 = vmatpush1.bf16.msra.mxu0 %v773
    %832 = vmatprep.subr.bf16.mxu0 0
    %833 = vmatpush1.bf16.msra.mxu0 %v774
    %834 = vmatprep.subr.bf16.mxu0 0
    %835 = vmatpush1.bf16.msra.mxu0 %v775
    %836 = vmatprep.subr.bf16.mxu0 0
    %837 = vmatpush1.bf16.msra.mxu0 %v776
    %838 = vmatprep.subr.bf16.mxu0 0
    %839 = vmatpush1.bf16.msra.mxu0 %v777
    %840 = vmatprep.subr.bf16.mxu0 0
    %841 = vmatpush1.bf16.msra.mxu0 %v778
    %842 = vmatprep.subr.bf16.mxu0 0
    %843 = vmatpush1.bf16.msra.mxu0 %v779
    %844 = vmatprep.mubr.bf16.mxu0 %v608
    %845 = vmatmul.mubr.bf16.gmra.mrb[0].mxu0 %v607
    %v846 = vpop.f32.mrb[0].mxu0
    %v847 = vadd.f32 %v666, %v846
    %v848 = vpop.f32.mrb[0].mxu0
    %v849 = vpop.f32.mrb[0].mxu0
    %v850 = vadd.f32 %v666, %v849
    %v851 = vpop.f32.mrb[0].mxu0
    %852 = vmatprep.mubr.bf16.mxu0 %v611
    %853 = vmatmul.mubr.bf16.gmra.mrb[0].mxu0 %v610
    %v854 = vpop.f32.mrb[0].mxu0
    %v855 = vadd.f32 %v666, %v854
    %v856 = vpop.f32.mrb[0].mxu0
    %v857 = vpop.f32.mrb[0].mxu0
    %v858 = vadd.f32 %v666, %v857
    %v859 = vpop.f32.mrb[0].mxu0
    %860 = vdwg.mxu0
    %861 = vmatprep.subr.bf16.mxu0 0
    %862 = vmatpush1.bf16.msra.mxu0 %v780
    %863 = vmatprep.subr.bf16.mxu0 0
    %864 = vmatpush1.bf16.msra.mxu0 %v781
    %865 = vmatprep.subr.bf16.mxu0 0
    %866 = vmatpush1.bf16.msra.mxu0 %v782
    %867 = vmatprep.subr.bf16.mxu0 0
    %868 = vmatpush1.bf16.msra.mxu0 %v783
    %869 = vmatprep.subr.bf16.mxu0 0
    %870 = vmatpush1.bf16.msra.mxu0 %v784
    %871 = vmatprep.subr.bf16.mxu0 0
    %872 = vmatpush1.bf16.msra.mxu0 %v785
    %873 = vmatprep.subr.bf16.mxu0 0
    %874 = vmatpush1.bf16.msra.mxu0 %v786
    %875 = vmatprep.subr.bf16.mxu0 0
    %876 = vmatpush1.bf16.msra.mxu0 %v787
    %877 = vmatprep.subr.bf16.mxu0 0
    %878 = vmatpush1.bf16.msra.mxu0 0
    %879 = vmatprep.subr.bf16.mxu0 0
    %880 = vmatpush1.bf16.msra.mxu0 0
    %881 = vmatprep.subr.bf16.mxu0 0
    %882 = vmatpush1.bf16.msra.mxu0 0
    %883 = vmatprep.subr.bf16.mxu0 0
    %884 = vmatpush1.bf16.msra.mxu0 0
    %885 = vmatprep.subr.bf16.mxu0 0
    %886 = vmatpush1.bf16.msra.mxu0 0
    %887 = vmatprep.subr.bf16.mxu0 0
    %888 = vmatpush1.bf16.msra.mxu0 0
    %889 = vmatprep.subr.bf16.mxu0 0
    %890 = vmatpush1.bf16.msra.mxu0 0
    %891 = vmatprep.subr.bf16.mxu0 0
    %892 = vmatpush1.bf16.msra.mxu0 0
    %893 = vmatprep.mubr.bf16.mxu0 0
    %894 = vmatmul.mubr.bf16.gmra.mrb[0].mxu0 %v609
    %v895 = vpop.f32.mrb[0].mxu0
    %v896 = vadd.f32 %v847, %v895
    %v897 = vpop.f32.mrb[0].mxu0
    %v898 = vpop.f32.mrb[0].mxu0
    %v899 = vadd.f32 %v850, %v898
    %v900 = vpop.f32.mrb[0].mxu0
    %901 = vmatprep.mubr.bf16.mxu0 0
    %902 = vmatmul.mubr.bf16.gmra.mrb[0].mxu0 %v612
    %v903 = vpop.f32.mrb[0].mxu0
    %v904 = vadd.f32 %v855, %v903
    %v905 = vpop.f32.mrb[0].mxu0
    %v906 = vpop.f32.mrb[0].mxu0
    %v907 = vadd.f32 %v858, %v906
    %v908 = vpop.f32.mrb[0].mxu0
    %909 = vdwg.mxu0
    %v910 = vadd.f32 %v896, %v899
    %v911 = vadd.f32 %v910, %v904
    %v912 = vadd.f32 %v911, %v907
    %v913 = vrot.slane %v912, 4
    %v914 = vadd.f32 %v912, %v913
    %v915 = vrot.slane %v914, 2
    %v916 = vadd.f32 %v914, %v915
    %v917 = vrot.slane %v916, 1
    %v918 = vadd.f32 %v916, %v917
    %920 = vrot.lane.b32.xlu0 %v918, 8
    %v921 = vpop.permute.xlu0 %920
    %v923 = vadd.f32 %v918, %v921
    %925 = vrot.lane.b32.xlu0 %v923, 16
    %v926 = vpop.permute.xlu0 %925
    %v928 = vadd.f32 %v923, %v926
    %930 = vrot.lane.b32.xlu0 %v928, 32
    %v931 = vpop.permute.xlu0 %930
    %v933 = vadd.f32 %v928, %v931
    %935 = vrot.lane.b32.xlu0 %v933, 64
    %v936 = vpop.permute.xlu0 %935
    %v938 = vadd.f32 %v933, %v936
    %v939 = vmul.f32 %v938, 0.001953125
    %v940 = vlaneseq
    %v941 = vshrl.u32 %v940, 7
    %v942 = vsub.s32 0, %v941
    %v943 = vrot.slane %v939, %v942
    %v944 = vsub.f32 %v896, %v943
    %v945 = vsub.f32 %v899, %v943
    %v946 = vsub.f32 %v904, %v943
    %v947 = vsub.f32 %v907, %v943
    %v948 = vmul.f32 %v944, %v944
    %v949 = vmul.f32 %v945, %v945
    %v950 = vmul.f32 %v946, %v946
    %v951 = vmul.f32 %v947, %v947
    %v952 = vadd.f32 %v948, %v949
    %v953 = vadd.f32 %v952, %v950
    %v954 = vadd.f32 %v953, %v951
    %v955 = vrot.slane %v954, 4
    %v956 = vadd.f32 %v954, %v955
    %v957 = vrot.slane %v956, 2
    %v958 = vadd.f32 %v956, %v957
    %v959 = vrot.slane %v958, 1
    %v960 = vadd.f32 %v958, %v959
    %962 = vrot.lane.b32.xlu0 %v960, 8
    %v963 = vpop.permute.xlu0 %962
    %v965 = vadd.f32 %v960, %v963
    %967 = vrot.lane.b32.xlu0 %v965, 16
    %v968 = vpop.permute.xlu0 %967
    %v970 = vadd.f32 %v965, %v968
    %972 = vrot.lane.b32.xlu0 %v970, 32
    %v973 = vpop.permute.xlu0 %972
    %v975 = vadd.f32 %v970, %v973
    %977 = vrot.lane.b32.xlu0 %v975, 64
    %v978 = vpop.permute.xlu0 %977
    %v980 = vadd.f32 %v975, %v978
    %v981 = vmul.f32 %v980, 0.001953125
    %v982 = vadd.f32 %v981, 1e-05
    %v983 = vrsqrt.pop %v982
    %v984 = vlaneseq
    %v985 = vshrl.u32 %v984, 7
    %v986 = vsub.s32 0, %v985
    %v987 = vrot.slane %v983, %v986
    %v988 = vmul.f32 %v944, %v987
    %v989 = vmul.f32 %v945, %v987
    %v990 = vmul.f32 %v946, %v987
    %v991 = vmul.f32 %v947, %v987
    %v992 = vld [vmem:[%s11] sm:$0x1]
    %v994 = vlaneseq
    %v995 = vshrl.u32 %v994, 7
    %v996 = vsub.s32 0, %v995
    %v997 = vrot.slane %v992, %v996
    %v999 = vmul.f32 %v988, %v997
    %v1000 = vmul.f32 %v989, %v997
    %v1001 = vmul.f32 %v990, %v997
    %v1002 = vmul.f32 %v991, %v997
    %v1003 = vld [vmem:[%s13] sm:$0x1]
    %v1005 = vlaneseq
    %v1006 = vshrl.u32 %v1005, 7
    %v1007 = vsub.s32 0, %v1006
    %v1008 = vrot.slane %v1003, %v1007
    %v1010 = vadd.f32 %v999, %v1008
    %v1011 = vadd.f32 %v1000, %v1008
    %v1012 = vadd.f32 %v1001, %v1008
    %v1013 = vadd.f32 %v1002, %v1008
    %1014 = vst [vmem:[%s51] sm:$0xff] %v1010
    %1015 = vst [vmem:[%s51 + $0x8] sm:$0xff] %v1011
    %1016 = vst [vmem:[%s51 + $0x10] sm:$0xff] %v1012
    %1017 = vst [vmem:[%s51 + $0x18] sm:$0xff] %v1013
    %v1018 = vld [vmem:[%s51] ss:$2 sm:$0xff]
    %s1019 = scalar_lea.vmem %s51, 16
    %v1020 = vld [vmem:[%s1019] ss:$2 sm:$0xff]
    %s1021 = scalar_lea.vmem %s51, 1
    %v1022 = vld [vmem:[%s1021] ss:$2 sm:$0xff]
    %s1023 = scalar_lea.vmem %s51, 17
    %v1024 = vld [vmem:[%s1023] ss:$2 sm:$0xff]
    %v1025 = vmax.f32 %v1018, %v1022
    %v1026 = vmax.f32 %v1020, %v1024
    %1029 = vrot.lane.b32.xlu0 %v1025, 64
    %v1030 = vpop.permute.xlu0 %1029
    %1031 = vrot.lane.b32.xlu0 %v1026, 64
    %v1032 = vpop.permute.xlu0 %1031
    %v1035 = vmax.f32 %v1025, %v1030
    %v1036 = vmax.f32 %v1026, %v1032
    %vm1037 = vcmp.lt.s32.totalorder %v150, 0
    %v1038 = vsub.s32 0, %v150
    %v1039 = vsel %vm1037, %v1038, %v150
    %v1040 = vshrl.u32 %v1039, 3
    %v1041 = vand.u32 %v1039, 7
    %v1042 = vsub.s32 0, %v1041
    %v1043 = vsel %vm1037, %v1042, %v1041
    %vm1044 = vcmp.lt.s32.totalorder %v151, 0
    %v1045 = vsub.s32 0, %v151
    %v1046 = vsel %vm1044, %v1045, %v151
    %v1047 = vshrl.u32 %v1046, 3
    %v1048 = vand.u32 %v1046, 7
    %v1049 = vsub.s32 0, %v1048
    %v1050 = vsel %vm1044, %v1049, %v1048
    %vm1051 = vcmp.ne.s32.totalorder %v1043, 0
    %vm1052 = vcmp.ne.s32.totalorder %v1050, 0
    %vm1053 = vcmp.lt.s32.totalorder %v1043, 0
    %vm1054 = vcmp.lt.s32.totalorder %v1050, 0
    %vm1055 = vmand %vm1053, %vm1051
    %vm1056 = vmand %vm1054, %vm1052
    %v1057 = vadd.s32 %v1043, 8
    %v1058 = vadd.s32 %v1050, 8
    %v1059 = vsel %vm1055, %v1057, %v1043
    %v1060 = vsel %vm1056, %v1058, %v1050
    %vm1061 = vcmp.ge.s32.totalorder %v1059, 1
    %vm1062 = vcmp.ge.s32.totalorder %v1060, 1
    %v1063 = vsel %vm1061, 1, 0
    %v1064 = vsel %vm1062, 1, 0
    %v1065 = vcvt.s32.f32 %v1063
    %v1066 = vcvt.s32.f32 %v1064
    %vm1067 = vcmp.le.s32.totalorder %v1059, 6
    %vm1068 = vcmp.le.s32.totalorder %v1060, 6
    %v1069 = vsel %vm1067, 1, 0
    %v1070 = vsel %vm1068, 1, 0
    %v1071 = vcvt.s32.f32 %v1069
    %v1072 = vcvt.s32.f32 %v1070
    %v1074 = vrot.slane %v1036, 7
    %v1077 = vrot.slane %v1035, 7
    %v1078 = vsel %vm232, %v1077, %v1074
    %v1081 = vsel %vm232, %v1074, %v1077
    %v1082 = vmul.f32 %v1081, %v1065
    %v1083 = vmul.f32 %v1078, %v1066
    %v1084 = vrot.slane %v1035, 1
    %v1085 = vrot.slane %v1036, 1
    %v1086 = vsel %vm248, %v1084, %v1085
    %v1090 = vsel %vm248, %v1085, %v1084
    %v1091 = vmul.f32 %v1086, %v1071
    %v1092 = vmul.f32 %v1090, %v1072
    %v1093 = vpack.c.bf16 %v1083, %v1082
    %v1094 = vpack.c.bf16 %v1036, %v1035
    %v1095 = vpack.c.bf16 %v1092, %v1091
    %v1096 = vld [vmem:[%s15] sm:$0xf]
    %v1097 = vld [vmem:[%s15 + $0x4] sm:$0xf]
    %v1098 = vld [vmem:[%s15 + $0x8] sm:$0xf]
    %v1099 = vld [vmem:[%s15 + $0xc] sm:$0xf]
    %v1100 = vld [vmem:[%s15 + $0x10] sm:$0xf]
    %v1101 = vld [vmem:[%s15 + $0x14] sm:$0xf]
    %v1102 = vld [vmem:[%s15 + $0x18] sm:$0xf]
    %v1103 = vld [vmem:[%s15 + $0x1c] sm:$0xf]
    %v1104 = vld [vmem:[%s15 + $0x20] sm:$0xf]
    %v1105 = vld [vmem:[%s15 + $0x24] sm:$0xf]
    %v1106 = vld [vmem:[%s15 + $0x28] sm:$0xf]
    %v1107 = vld [vmem:[%s15 + $0x2c] sm:$0xf]
    %v1108 = vld [vmem:[%s15 + $0x30] sm:$0xf]
    %v1109 = vld [vmem:[%s15 + $0x34] sm:$0xf]
    %v1110 = vld [vmem:[%s15 + $0x38] sm:$0xf]
    %v1111 = vld [vmem:[%s15 + $0x3c] sm:$0xf]
    %v1112 = vld [vmem:[%s15 + $0x40] sm:$0xf]
    %v1113 = vld [vmem:[%s15 + $0x44] sm:$0xf]
    %v1114 = vld [vmem:[%s15 + $0x48] sm:$0xf]
    %v1115 = vld [vmem:[%s15 + $0x4c] sm:$0xf]
    %v1116 = vld [vmem:[%s15 + $0x50] sm:$0xf]
    %v1117 = vld [vmem:[%s15 + $0x54] sm:$0xf]
    %v1118 = vld [vmem:[%s15 + $0x58] sm:$0xf]
    %v1119 = vld [vmem:[%s15 + $0x5c] sm:$0xf]
    %v1120 = vld [vmem:[%s15 + $0x60] sm:$0xf]
    %v1121 = vld [vmem:[%s15 + $0x64] sm:$0xf]
    %v1122 = vld [vmem:[%s15 + $0x68] sm:$0xf]
    %v1123 = vld [vmem:[%s15 + $0x6c] sm:$0xf]
    %v1124 = vld [vmem:[%s15 + $0x70] sm:$0xf]
    %v1125 = vld [vmem:[%s15 + $0x74] sm:$0xf]
    %v1126 = vld [vmem:[%s15 + $0x78] sm:$0xf]
    %v1127 = vld [vmem:[%s15 + $0x7c] sm:$0xf]
    %v1128 = vld [vmem:[%s15 + $0x80] sm:$0xf]
    %v1129 = vld [vmem:[%s15 + $0x84] sm:$0xf]
    %v1130 = vld [vmem:[%s15 + $0x88] sm:$0xf]
    %v1131 = vld [vmem:[%s15 + $0x8c] sm:$0xf]
    %v1132 = vld [vmem:[%s15 + $0x90] sm:$0xf]
    %v1133 = vld [vmem:[%s15 + $0x94] sm:$0xf]
    %v1134 = vld [vmem:[%s15 + $0x98] sm:$0xf]
    %v1135 = vld [vmem:[%s15 + $0x9c] sm:$0xf]
    %v1136 = vld [vmem:[%s15 + $0xa0] sm:$0xf]
    %v1137 = vld [vmem:[%s15 + $0xa4] sm:$0xf]
    %v1138 = vld [vmem:[%s15 + $0xa8] sm:$0xf]
    %v1139 = vld [vmem:[%s15 + $0xac] sm:$0xf]
    %v1140 = vld [vmem:[%s15 + $0xb0] sm:$0xf]
    %v1141 = vld [vmem:[%s15 + $0xb4] sm:$0xf]
    %v1142 = vld [vmem:[%s15 + $0xb8] sm:$0xf]
    %v1143 = vld [vmem:[%s15 + $0xbc] sm:$0xf]
    %v1144 = vld [vmem:[%s17] sm:$0x1]
    %v1146 = vlaneseq
    %v1147 = vshrl.u32 %v1146, 7
    %v1148 = vsub.s32 0, %v1147
    %v1149 = vrot.slane %v1144, %v1148
    %v1199 = vunpack.c.l.b16 %v1096
    %v1200 = vunpack.c.l.b16 %v1097
    %v1201 = vunpack.c.l.b16 %v1098
    %v1202 = vunpack.c.l.b16 %v1099
    %v1203 = vunpack.c.l.b16 %v1100
    %v1204 = vunpack.c.l.b16 %v1101
    %v1205 = vunpack.c.l.b16 %v1102
    %v1206 = vunpack.c.l.b16 %v1103
    %v1207 = vunpack.c.l.b16 %v1104
    %v1208 = vunpack.c.l.b16 %v1105
    %v1209 = vunpack.c.l.b16 %v1106
    %v1210 = vunpack.c.l.b16 %v1107
    %v1211 = vunpack.c.l.b16 %v1108
    %v1212 = vunpack.c.l.b16 %v1109
    %v1213 = vunpack.c.l.b16 %v1110
    %v1214 = vunpack.c.l.b16 %v1111
    %v1215 = vunpack.c.l.b16 %v1112
    %v1216 = vunpack.c.l.b16 %v1113
    %v1217 = vunpack.c.l.b16 %v1114
    %v1218 = vunpack.c.l.b16 %v1115
    %v1219 = vunpack.c.l.b16 %v1116
    %v1220 = vunpack.c.l.b16 %v1117
    %v1221 = vunpack.c.l.b16 %v1118
    %v1222 = vunpack.c.l.b16 %v1119
    %v1223 = vunpack.c.l.b16 %v1120
    %v1224 = vunpack.c.l.b16 %v1121
    %v1225 = vunpack.c.l.b16 %v1122
    %v1226 = vunpack.c.l.b16 %v1123
    %v1227 = vunpack.c.l.b16 %v1124
    %v1228 = vunpack.c.l.b16 %v1125
    %v1229 = vunpack.c.l.b16 %v1126
    %v1230 = vunpack.c.l.b16 %v1127
    %v1231 = vunpack.c.l.b16 %v1128
    %v1232 = vunpack.c.l.b16 %v1129
    %v1233 = vunpack.c.l.b16 %v1130
    %v1234 = vunpack.c.l.b16 %v1131
    %v1235 = vunpack.c.l.b16 %v1132
    %v1236 = vunpack.c.l.b16 %v1133
    %v1237 = vunpack.c.l.b16 %v1134
    %v1238 = vunpack.c.l.b16 %v1135
    %v1239 = vunpack.c.l.b16 %v1136
    %v1240 = vunpack.c.l.b16 %v1137
    %v1241 = vunpack.c.l.b16 %v1138
    %v1242 = vunpack.c.l.b16 %v1139
    %v1243 = vunpack.c.l.b16 %v1140
    %v1244 = vunpack.c.l.b16 %v1141
    %v1245 = vunpack.c.l.b16 %v1142
    %v1246 = vunpack.c.l.b16 %v1143
    %v1247 = vpack.c.b16 %v1200, %v1199
    %v1248 = vpack.c.b16 %v1202, %v1201
    %v1249 = vpack.c.b16 %v1204, %v1203
    %v1250 = vpack.c.b16 %v1206, %v1205
    %v1251 = vpack.c.b16 %v1208, %v1207
    %v1252 = vpack.c.b16 %v1210, %v1209
    %v1253 = vpack.c.b16 %v1212, %v1211
    %v1254 = vpack.c.b16 %v1214, %v1213
    %v1255 = vpack.c.b16 %v1216, %v1215
    %v1256 = vpack.c.b16 %v1218, %v1217
    %v1257 = vpack.c.b16 %v1220, %v1219
    %v1258 = vpack.c.b16 %v1222, %v1221
    %v1259 = vpack.c.b16 %v1224, %v1223
    %v1260 = vpack.c.b16 %v1226, %v1225
    %v1261 = vpack.c.b16 %v1228, %v1227
    %v1262 = vpack.c.b16 %v1230, %v1229
    %v1263 = vpack.c.b16 %v1232, %v1231
    %v1264 = vpack.c.b16 %v1234, %v1233
    %v1265 = vpack.c.b16 %v1236, %v1235
    %v1266 = vpack.c.b16 %v1238, %v1237
    %v1267 = vpack.c.b16 %v1240, %v1239
    %v1268 = vpack.c.b16 %v1242, %v1241
    %v1269 = vpack.c.b16 %v1244, %v1243
    %v1270 = vpack.c.b16 %v1246, %v1245
    %1295 = vmatprep.subr.bf16.mxu0 0
    %1296 = vmatpush1.bf16.msra.mxu0 %v1247
    %1297 = vmatprep.subr.bf16.mxu0 0
    %1298 = vmatpush1.bf16.msra.mxu0 %v1248
    %1299 = vmatprep.subr.bf16.mxu0 0
    %1300 = vmatpush1.bf16.msra.mxu0 %v1249
    %1301 = vmatprep.subr.bf16.mxu0 0
    %1302 = vmatpush1.bf16.msra.mxu0 %v1250
    %1303 = vmatprep.subr.bf16.mxu0 0
    %1304 = vmatpush1.bf16.msra.mxu0 %v1251
    %1305 = vmatprep.subr.bf16.mxu0 0
    %1306 = vmatpush1.bf16.msra.mxu0 %v1252
    %1307 = vmatprep.subr.bf16.mxu0 0
    %1308 = vmatpush1.bf16.msra.mxu0 %v1253
    %1309 = vmatprep.subr.bf16.mxu0 0
    %1310 = vmatpush1.bf16.msra.mxu0 %v1254
    %1311 = vmatprep.subr.bf16.mxu0 0
    %1312 = vmatpush1.bf16.msra.mxu0 %v1255
    %1313 = vmatprep.subr.bf16.mxu0 0
    %1314 = vmatpush1.bf16.msra.mxu0 %v1256
    %1315 = vmatprep.subr.bf16.mxu0 0
    %1316 = vmatpush1.bf16.msra.mxu0 %v1257
    %1317 = vmatprep.subr.bf16.mxu0 0
    %1318 = vmatpush1.bf16.msra.mxu0 %v1258
    %1319 = vmatprep.subr.bf16.mxu0 0
    %1320 = vmatpush1.bf16.msra.mxu0 %v1259
    %1321 = vmatprep.subr.bf16.mxu0 0
    %1322 = vmatpush1.bf16.msra.mxu0 %v1260
    %1323 = vmatprep.subr.bf16.mxu0 0
    %1324 = vmatpush1.bf16.msra.mxu0 %v1261
    %1325 = vmatprep.subr.bf16.mxu0 0
    %1326 = vmatpush1.bf16.msra.mxu0 %v1262
    %1327 = vmatprep.mubr.bf16.mxu0 %v1094
    %1328 = vmatmul.mubr.bf16.gmra.mrb[0].mxu0 %v1093
    %v1329 = vpop.f32.mrb[0].mxu0
    %v1330 = vadd.f32 %v1149, %v1329
    %v1331 = vpop.f32.mrb[0].mxu0
    %v1332 = vpop.f32.mrb[0].mxu0
    %v1333 = vadd.f32 %v1149, %v1332
    %v1334 = vpop.f32.mrb[0].mxu0
    %1335 = vdwg.mxu0
    %1336 = vmatprep.subr.bf16.mxu0 0
    %1337 = vmatpush1.bf16.msra.mxu0 %v1263
    %1338 = vmatprep.subr.bf16.mxu0 0
    %1339 = vmatpush1.bf16.msra.mxu0 %v1264
    %1340 = vmatprep.subr.bf16.mxu0 0
    %1341 = vmatpush1.bf16.msra.mxu0 %v1265
    %1342 = vmatprep.subr.bf16.mxu0 0
    %1343 = vmatpush1.bf16.msra.mxu0 %v1266
    %1344 = vmatprep.subr.bf16.mxu0 0
    %1345 = vmatpush1.bf16.msra.mxu0 %v1267
    %1346 = vmatprep.subr.bf16.mxu0 0
    %1347 = vmatpush1.bf16.msra.mxu0 %v1268
    %1348 = vmatprep.subr.bf16.mxu0 0
    %1349 = vmatpush1.bf16.msra.mxu0 %v1269
    %1350 = vmatprep.subr.bf16.mxu0 0
    %1351 = vmatpush1.bf16.msra.mxu0 %v1270
    %1352 = vmatprep.subr.bf16.mxu0 0
    %1353 = vmatpush1.bf16.msra.mxu0 0
    %1354 = vmatprep.subr.bf16.mxu0 0
    %1355 = vmatpush1.bf16.msra.mxu0 0
    %1356 = vmatprep.subr.bf16.mxu0 0
    %1357 = vmatpush1.bf16.msra.mxu0 0
    %1358 = vmatprep.subr.bf16.mxu0 0
    %1359 = vmatpush1.bf16.msra.mxu0 0
    %1360 = vmatprep.subr.bf16.mxu0 0
    %1361 = vmatpush1.bf16.msra.mxu0 0
    %1362 = vmatprep.subr.bf16.mxu0 0
    %1363 = vmatpush1.bf16.msra.mxu0 0
    %1364 = vmatprep.subr.bf16.mxu0 0
    %1365 = vmatpush1.bf16.msra.mxu0 0
    %1366 = vmatprep.subr.bf16.mxu0 0
    %1367 = vmatpush1.bf16.msra.mxu0 0
    %1368 = vmatprep.mubr.bf16.mxu0 0
    %1369 = vmatmul.mubr.bf16.gmra.mrb[0].mxu0 %v1095
    %v1370 = vpop.f32.mrb[0].mxu0
    %v1371 = vadd.f32 %v1330, %v1370
    %v1372 = vpop.f32.mrb[0].mxu0
    %v1373 = vpop.f32.mrb[0].mxu0
    %v1374 = vadd.f32 %v1333, %v1373
    %v1375 = vpop.f32.mrb[0].mxu0
    %1376 = vdwg.mxu0
    %v1378 = vrot.slane %v1374, 7
    %v1381 = vrot.slane %v1371, 7
    %v1382 = vsel %vm232, %v1381, %v1378
    %v1385 = vsel %vm232, %v1378, %v1381
    %v1386 = vmul.f32 %v1385, %v1065
    %v1387 = vmul.f32 %v1382, %v1066
    %v1388 = vrot.slane %v1371, 1
    %v1389 = vrot.slane %v1374, 1
    %v1390 = vsel %vm248, %v1388, %v1389
    %v1394 = vsel %vm248, %v1389, %v1388
    %v1395 = vmul.f32 %v1390, %v1071
    %v1396 = vmul.f32 %v1394, %v1072
    %v1397 = vpack.c.bf16 %v1387, %v1386
    %v1398 = vpack.c.bf16 %v1374, %v1371
    %v1399 = vpack.c.bf16 %v1396, %v1395
    %v1400 = vld [vmem:[%s19] sm:$0xf]
    %v1401 = vld [vmem:[%s19 + $0x4] sm:$0xf]
    %v1402 = vld [vmem:[%s19 + $0x8] sm:$0xf]
    %v1403 = vld [vmem:[%s19 + $0xc] sm:$0xf]
    %v1404 = vld [vmem:[%s19 + $0x10] sm:$0xf]
    %v1405 = vld [vmem:[%s19 + $0x14] sm:$0xf]
    %v1406 = vld [vmem:[%s19 + $0x18] sm:$0xf]
    %v1407 = vld [vmem:[%s19 + $0x1c] sm:$0xf]
    %v1408 = vld [vmem:[%s19 + $0x20] sm:$0xf]
    %v1409 = vld [vmem:[%s19 + $0x24] sm:$0xf]
    %v1410 = vld [vmem:[%s19 + $0x28] sm:$0xf]
    %v1411 = vld [vmem:[%s19 + $0x2c] sm:$0xf]
    %v1412 = vld [vmem:[%s19 + $0x30] sm:$0xf]
    %v1413 = vld [vmem:[%s19 + $0x34] sm:$0xf]
    %v1414 = vld [vmem:[%s19 + $0x38] sm:$0xf]
    %v1415 = vld [vmem:[%s19 + $0x3c] sm:$0xf]
    %v1416 = vld [vmem:[%s19 + $0x40] sm:$0xf]
    %v1417 = vld [vmem:[%s19 + $0x44] sm:$0xf]
    %v1418 = vld [vmem:[%s19 + $0x48] sm:$0xf]
    %v1419 = vld [vmem:[%s19 + $0x4c] sm:$0xf]
    %v1420 = vld [vmem:[%s19 + $0x50] sm:$0xf]
    %v1421 = vld [vmem:[%s19 + $0x54] sm:$0xf]
    %v1422 = vld [vmem:[%s19 + $0x58] sm:$0xf]
    %v1423 = vld [vmem:[%s19 + $0x5c] sm:$0xf]
    %v1424 = vld [vmem:[%s19 + $0x60] sm:$0xf]
    %v1425 = vld [vmem:[%s19 + $0x64] sm:$0xf]
    %v1426 = vld [vmem:[%s19 + $0x68] sm:$0xf]
    %v1427 = vld [vmem:[%s19 + $0x6c] sm:$0xf]
    %v1428 = vld [vmem:[%s19 + $0x70] sm:$0xf]
    %v1429 = vld [vmem:[%s19 + $0x74] sm:$0xf]
    %v1430 = vld [vmem:[%s19 + $0x78] sm:$0xf]
    %v1431 = vld [vmem:[%s19 + $0x7c] sm:$0xf]
    %v1432 = vld [vmem:[%s19 + $0x80] sm:$0xf]
    %v1433 = vld [vmem:[%s19 + $0x84] sm:$0xf]
    %v1434 = vld [vmem:[%s19 + $0x88] sm:$0xf]
    %v1435 = vld [vmem:[%s19 + $0x8c] sm:$0xf]
    %v1436 = vld [vmem:[%s19 + $0x90] sm:$0xf]
    %v1437 = vld [vmem:[%s19 + $0x94] sm:$0xf]
    %v1438 = vld [vmem:[%s19 + $0x98] sm:$0xf]
    %v1439 = vld [vmem:[%s19 + $0x9c] sm:$0xf]
    %v1440 = vld [vmem:[%s19 + $0xa0] sm:$0xf]
    %v1441 = vld [vmem:[%s19 + $0xa4] sm:$0xf]
    %v1442 = vld [vmem:[%s19 + $0xa8] sm:$0xf]
    %v1443 = vld [vmem:[%s19 + $0xac] sm:$0xf]
    %v1444 = vld [vmem:[%s19 + $0xb0] sm:$0xf]
    %v1445 = vld [vmem:[%s19 + $0xb4] sm:$0xf]
    %v1446 = vld [vmem:[%s19 + $0xb8] sm:$0xf]
    %v1447 = vld [vmem:[%s19 + $0xbc] sm:$0xf]
    %v1448 = vld [vmem:[%s21] sm:$0x1]
    %v1450 = vlaneseq
    %v1451 = vshrl.u32 %v1450, 7
    %v1452 = vsub.s32 0, %v1451
    %v1453 = vrot.slane %v1448, %v1452
    %v1503 = vunpack.c.l.b16 %v1400
    %v1504 = vunpack.c.l.b16 %v1401
    %v1505 = vunpack.c.l.b16 %v1402
    %v1506 = vunpack.c.l.b16 %v1403
    %v1507 = vunpack.c.l.b16 %v1404
    %v1508 = vunpack.c.l.b16 %v1405
    %v1509 = vunpack.c.l.b16 %v1406
    %v1510 = vunpack.c.l.b16 %v1407
    %v1511 = vunpack.c.l.b16 %v1408
    %v1512 = vunpack.c.l.b16 %v1409
    %v1513 = vunpack.c.l.b16 %v1410
    %v1514 = vunpack.c.l.b16 %v1411
    %v1515 = vunpack.c.l.b16 %v1412
    %v1516 = vunpack.c.l.b16 %v1413
    %v1517 = vunpack.c.l.b16 %v1414
    %v1518 = vunpack.c.l.b16 %v1415
    %v1519 = vunpack.c.l.b16 %v1416
    %v1520 = vunpack.c.l.b16 %v1417
    %v1521 = vunpack.c.l.b16 %v1418
    %v1522 = vunpack.c.l.b16 %v1419
    %v1523 = vunpack.c.l.b16 %v1420
    %v1524 = vunpack.c.l.b16 %v1421
    %v1525 = vunpack.c.l.b16 %v1422
    %v1526 = vunpack.c.l.b16 %v1423
    %v1527 = vunpack.c.l.b16 %v1424
    %v1528 = vunpack.c.l.b16 %v1425
    %v1529 = vunpack.c.l.b16 %v1426
    %v1530 = vunpack.c.l.b16 %v1427
    %v1531 = vunpack.c.l.b16 %v1428
    %v1532 = vunpack.c.l.b16 %v1429
    %v1533 = vunpack.c.l.b16 %v1430
    %v1534 = vunpack.c.l.b16 %v1431
    %v1535 = vunpack.c.l.b16 %v1432
    %v1536 = vunpack.c.l.b16 %v1433
    %v1537 = vunpack.c.l.b16 %v1434
    %v1538 = vunpack.c.l.b16 %v1435
    %v1539 = vunpack.c.l.b16 %v1436
    %v1540 = vunpack.c.l.b16 %v1437
    %v1541 = vunpack.c.l.b16 %v1438
    %v1542 = vunpack.c.l.b16 %v1439
    %v1543 = vunpack.c.l.b16 %v1440
    %v1544 = vunpack.c.l.b16 %v1441
    %v1545 = vunpack.c.l.b16 %v1442
    %v1546 = vunpack.c.l.b16 %v1443
    %v1547 = vunpack.c.l.b16 %v1444
    %v1548 = vunpack.c.l.b16 %v1445
    %v1549 = vunpack.c.l.b16 %v1446
    %v1550 = vunpack.c.l.b16 %v1447
    %v1551 = vpack.c.b16 %v1504, %v1503
    %v1552 = vpack.c.b16 %v1506, %v1505
    %v1553 = vpack.c.b16 %v1508, %v1507
    %v1554 = vpack.c.b16 %v1510, %v1509
    %v1555 = vpack.c.b16 %v1512, %v1511
    %v1556 = vpack.c.b16 %v1514, %v1513
    %v1557 = vpack.c.b16 %v1516, %v1515
    %v1558 = vpack.c.b16 %v1518, %v1517
    %v1559 = vpack.c.b16 %v1520, %v1519
    %v1560 = vpack.c.b16 %v1522, %v1521
    %v1561 = vpack.c.b16 %v1524, %v1523
    %v1562 = vpack.c.b16 %v1526, %v1525
    %v1563 = vpack.c.b16 %v1528, %v1527
    %v1564 = vpack.c.b16 %v1530, %v1529
    %v1565 = vpack.c.b16 %v1532, %v1531
    %v1566 = vpack.c.b16 %v1534, %v1533
    %v1567 = vpack.c.b16 %v1536, %v1535
    %v1568 = vpack.c.b16 %v1538, %v1537
    %v1569 = vpack.c.b16 %v1540, %v1539
    %v1570 = vpack.c.b16 %v1542, %v1541
    %v1571 = vpack.c.b16 %v1544, %v1543
    %v1572 = vpack.c.b16 %v1546, %v1545
    %v1573 = vpack.c.b16 %v1548, %v1547
    %v1574 = vpack.c.b16 %v1550, %v1549
    %1599 = vmatprep.subr.bf16.mxu0 0
    %1600 = vmatpush1.bf16.msra.mxu0 %v1551
    %1601 = vmatprep.subr.bf16.mxu0 0
    %1602 = vmatpush1.bf16.msra.mxu0 %v1552
    %1603 = vmatprep.subr.bf16.mxu0 0
    %1604 = vmatpush1.bf16.msra.mxu0 %v1553
    %1605 = vmatprep.subr.bf16.mxu0 0
    %1606 = vmatpush1.bf16.msra.mxu0 %v1554
    %1607 = vmatprep.subr.bf16.mxu0 0
    %1608 = vmatpush1.bf16.msra.mxu0 %v1555
    %1609 = vmatprep.subr.bf16.mxu0 0
    %1610 = vmatpush1.bf16.msra.mxu0 %v1556
    %1611 = vmatprep.subr.bf16.mxu0 0
    %1612 = vmatpush1.bf16.msra.mxu0 %v1557
    %1613 = vmatprep.subr.bf16.mxu0 0
    %1614 = vmatpush1.bf16.msra.mxu0 %v1558
    %1615 = vmatprep.subr.bf16.mxu0 0
    %1616 = vmatpush1.bf16.msra.mxu0 %v1559
    %1617 = vmatprep.subr.bf16.mxu0 0
    %1618 = vmatpush1.bf16.msra.mxu0 %v1560
    %1619 = vmatprep.subr.bf16.mxu0 0
    %1620 = vmatpush1.bf16.msra.mxu0 %v1561
    %1621 = vmatprep.subr.bf16.mxu0 0
    %1622 = vmatpush1.bf16.msra.mxu0 %v1562
    %1623 = vmatprep.subr.bf16.mxu0 0
    %1624 = vmatpush1.bf16.msra.mxu0 %v1563
    %1625 = vmatprep.subr.bf16.mxu0 0
    %1626 = vmatpush1.bf16.msra.mxu0 %v1564
    %1627 = vmatprep.subr.bf16.mxu0 0
    %1628 = vmatpush1.bf16.msra.mxu0 %v1565
    %1629 = vmatprep.subr.bf16.mxu0 0
    %1630 = vmatpush1.bf16.msra.mxu0 %v1566
    %1631 = vmatprep.mubr.bf16.mxu0 %v1398
    %1632 = vmatmul.mubr.bf16.gmra.mrb[0].mxu0 %v1397
    %v1633 = vpop.f32.mrb[0].mxu0
    %v1634 = vadd.f32 %v1453, %v1633
    %v1635 = vpop.f32.mrb[0].mxu0
    %v1636 = vpop.f32.mrb[0].mxu0
    %v1637 = vadd.f32 %v1453, %v1636
    %v1638 = vpop.f32.mrb[0].mxu0
    %1639 = vdwg.mxu0
    %1640 = vmatprep.subr.bf16.mxu0 0
    %1641 = vmatpush1.bf16.msra.mxu0 %v1567
    %1642 = vmatprep.subr.bf16.mxu0 0
    %1643 = vmatpush1.bf16.msra.mxu0 %v1568
    %1644 = vmatprep.subr.bf16.mxu0 0
    %1645 = vmatpush1.bf16.msra.mxu0 %v1569
    %1646 = vmatprep.subr.bf16.mxu0 0
    %1647 = vmatpush1.bf16.msra.mxu0 %v1570
    %1648 = vmatprep.subr.bf16.mxu0 0
    %1649 = vmatpush1.bf16.msra.mxu0 %v1571
    %1650 = vmatprep.subr.bf16.mxu0 0
    %1651 = vmatpush1.bf16.msra.mxu0 %v1572
    %1652 = vmatprep.subr.bf16.mxu0 0
    %1653 = vmatpush1.bf16.msra.mxu0 %v1573
    %1654 = vmatprep.subr.bf16.mxu0 0
    %1655 = vmatpush1.bf16.msra.mxu0 %v1574
    %1656 = vmatprep.subr.bf16.mxu0 0
    %1657 = vmatpush1.bf16.msra.mxu0 0
    %1658 = vmatprep.subr.bf16.mxu0 0
    %1659 = vmatpush1.bf16.msra.mxu0 0
    %1660 = vmatprep.subr.bf16.mxu0 0
    %1661 = vmatpush1.bf16.msra.mxu0 0
    %1662 = vmatprep.subr.bf16.mxu0 0
    %1663 = vmatpush1.bf16.msra.mxu0 0
    %1664 = vmatprep.subr.bf16.mxu0 0
    %1665 = vmatpush1.bf16.msra.mxu0 0
    %1666 = vmatprep.subr.bf16.mxu0 0
    %1667 = vmatpush1.bf16.msra.mxu0 0
    %1668 = vmatprep.subr.bf16.mxu0 0
    %1669 = vmatpush1.bf16.msra.mxu0 0
    %1670 = vmatprep.subr.bf16.mxu0 0
    %1671 = vmatpush1.bf16.msra.mxu0 0
    %1672 = vmatprep.mubr.bf16.mxu0 0
    %1673 = vmatmul.mubr.bf16.gmra.mrb[0].mxu0 %v1399
    %v1674 = vpop.f32.mrb[0].mxu0
    %v1675 = vadd.f32 %v1634, %v1674
    %v1676 = vpop.f32.mrb[0].mxu0
    %v1677 = vpop.f32.mrb[0].mxu0
    %v1678 = vadd.f32 %v1637, %v1677
    %v1679 = vpop.f32.mrb[0].mxu0
    %1680 = vdwg.mxu0
    %v1681 = vadd.f32 %v1675, %v1678
    %v1682 = vrot.slane %v1681, 4
    %v1683 = vadd.f32 %v1681, %v1682
    %v1684 = vrot.slane %v1683, 2
    %v1685 = vadd.f32 %v1683, %v1684
    %v1686 = vrot.slane %v1685, 1
    %v1687 = vadd.f32 %v1685, %v1686
    %1689 = vrot.lane.b32.xlu0 %v1687, 16
    %v1690 = vpop.permute.xlu0 %1689
    %v1692 = vadd.f32 %v1687, %v1690
    %1694 = vrot.lane.b32.xlu0 %v1692, 32
    %v1695 = vpop.permute.xlu0 %1694
    %v1697 = vadd.f32 %v1692, %v1695
    %1699 = vrot.lane.b32.xlu0 %v1697, 64
    %v1700 = vpop.permute.xlu0 %1699
    %v1702 = vadd.f32 %v1697, %v1700
    %v1703 = vmul.f32 %v1702, 0.0078125
    %v1704 = vlaneseq
    %v1705 = vshrl.u32 %v1704, 7
    %v1706 = vsub.s32 0, %v1705
    %v1707 = vrot.slane %v1703, %v1706
    %v1708 = vsub.f32 %v1675, %v1707
    %v1709 = vsub.f32 %v1678, %v1707
    %v1710 = vmul.f32 %v1708, %v1708
    %v1711 = vmul.f32 %v1709, %v1709
    %v1712 = vadd.f32 %v1710, %v1711
    %v1713 = vrot.slane %v1712, 4
    %v1714 = vadd.f32 %v1712, %v1713
    %v1715 = vrot.slane %v1714, 2
    %v1716 = vadd.f32 %v1714, %v1715
    %v1717 = vrot.slane %v1716, 1
    %v1718 = vadd.f32 %v1716, %v1717
    %1720 = vrot.lane.b32.xlu0 %v1718, 16
    %v1721 = vpop.permute.xlu0 %1720
    %v1723 = vadd.f32 %v1718, %v1721
    %1725 = vrot.lane.b32.xlu0 %v1723, 32
    %v1726 = vpop.permute.xlu0 %1725
    %v1728 = vadd.f32 %v1723, %v1726
    %1730 = vrot.lane.b32.xlu0 %v1728, 64
    %v1731 = vpop.permute.xlu0 %1730
    %v1733 = vadd.f32 %v1728, %v1731
    %v1734 = vmul.f32 %v1733, 0.0078125
    %v1735 = vadd.f32 %v1734, 1e-05
    %v1736 = vrsqrt.pop %v1735
    %v1737 = vlaneseq
    %v1738 = vshrl.u32 %v1737, 7
    %v1739 = vsub.s32 0, %v1738
    %v1740 = vrot.slane %v1736, %v1739
    %v1741 = vmul.f32 %v1708, %v1740
    %v1742 = vmul.f32 %v1709, %v1740
    %v1743 = vld [vmem:[%s23] sm:$0x1]
    %v1745 = vlaneseq
    %v1746 = vshrl.u32 %v1745, 7
    %v1747 = vsub.s32 0, %v1746
    %v1748 = vrot.slane %v1743, %v1747
    %v1750 = vmul.f32 %v1741, %v1748
    %v1751 = vmul.f32 %v1742, %v1748
    %v1752 = vld [vmem:[%s25] sm:$0x1]
    %v1754 = vlaneseq
    %v1755 = vshrl.u32 %v1754, 7
    %v1756 = vsub.s32 0, %v1755
    %v1757 = vrot.slane %v1752, %v1756
    %v1759 = vadd.f32 %v1750, %v1757
    %v1760 = vadd.f32 %v1751, %v1757
    %1761 = vst [vmem:[%s53] sm:$0xff] %v1759
    %1762 = vst [vmem:[%s53 + $0x8] sm:$0xff] %v1760
    %v1763 = vld [vmem:[%s53] ss:$2 sm:$0xff]
    %s1764 = scalar_lea.vmem %s53, 1
    %v1765 = vld [vmem:[%s1764] ss:$2 sm:$0xff]
    %v1766 = vmax.f32 %v1763, %v1765
    %1768 = vrot.lane.b32.xlu0 %v1766, 64
    %v1769 = vpop.permute.xlu0 %1768
    %v1771 = vmax.f32 %v1766, %v1769
    %vm1772 = vcmp.lt.s32.totalorder %v150, 0
    %v1773 = vsub.s32 0, %v150
    %v1774 = vsel %vm1772, %v1773, %v150
    %v1775 = vshrl.u32 %v1774, 2
    %v1776 = vand.u32 %v1774, 3
    %v1777 = vsub.s32 0, %v1776
    %v1778 = vsel %vm1772, %v1777, %v1776
    %vm1779 = vcmp.ne.s32.totalorder %v1778, 0
    %vm1780 = vcmp.lt.s32.totalorder %v1778, 0
    %vm1781 = vmand %vm1780, %vm1779
    %v1782 = vadd.s32 %v1778, 4
    %v1783 = vsel %vm1781, %v1782, %v1778
    %vm1784 = vcmp.ge.s32.totalorder %v1783, 1
    %v1785 = vsel %vm1784, 1, 0
    %v1786 = vcvt.s32.f32 %v1785
    %vm1787 = vcmp.le.s32.totalorder %v1783, 2
    %v1788 = vsel %vm1787, 1, 0
    %v1789 = vcvt.s32.f32 %v1788
    %v1791 = vrot.slane %v1771, 7
    %v1793 = vsel %vm232, %v1791, %v1791
    %v1794 = vmul.f32 %v1793, %v1786
    %v1795 = vrot.slane %v1771, 1
    %v1797 = vsel %vm248, %v1795, %v1795
    %v1798 = vmul.f32 %v1797, %v1789
    %v1799 = vpack.c.bf16 %v1794, %v1794
    %v1800 = vpack.c.bf16 %v1771, %v1771
    %v1801 = vpack.c.bf16 %v1798, %v1798
    %v1802 = vld [vmem:[%s27] sm:$0xf]
    %v1803 = vld [vmem:[%s27 + $0x4] sm:$0xf]
    %v1804 = vld [vmem:[%s27 + $0x8] sm:$0xf]
    %v1805 = vld [vmem:[%s27 + $0xc] sm:$0xf]
    %v1806 = vld [vmem:[%s27 + $0x10] sm:$0xf]
    %v1807 = vld [vmem:[%s27 + $0x14] sm:$0xf]
    %v1808 = vld [vmem:[%s27 + $0x18] sm:$0xf]
    %v1809 = vld [vmem:[%s27 + $0x1c] sm:$0xf]
    %v1810 = vld [vmem:[%s27 + $0x20] sm:$0xf]
    %v1811 = vld [vmem:[%s27 + $0x24] sm:$0xf]
    %v1812 = vld [vmem:[%s27 + $0x28] sm:$0xf]
    %v1813 = vld [vmem:[%s27 + $0x2c] sm:$0xf]
    %v1814 = vld [vmem:[%s27 + $0x30] sm:$0xf]
    %v1815 = vld [vmem:[%s27 + $0x34] sm:$0xf]
    %v1816 = vld [vmem:[%s27 + $0x38] sm:$0xf]
    %v1817 = vld [vmem:[%s27 + $0x3c] sm:$0xf]
    %v1818 = vld [vmem:[%s27 + $0x40] sm:$0xf]
    %v1819 = vld [vmem:[%s27 + $0x44] sm:$0xf]
    %v1820 = vld [vmem:[%s27 + $0x48] sm:$0xf]
    %v1821 = vld [vmem:[%s27 + $0x4c] sm:$0xf]
    %v1822 = vld [vmem:[%s27 + $0x50] sm:$0xf]
    %v1823 = vld [vmem:[%s27 + $0x54] sm:$0xf]
    %v1824 = vld [vmem:[%s27 + $0x58] sm:$0xf]
    %v1825 = vld [vmem:[%s27 + $0x5c] sm:$0xf]
    %v1826 = vld [vmem:[%s27 + $0x60] sm:$0xf]
    %v1827 = vld [vmem:[%s27 + $0x64] sm:$0xf]
    %v1828 = vld [vmem:[%s27 + $0x68] sm:$0xf]
    %v1829 = vld [vmem:[%s27 + $0x6c] sm:$0xf]
    %v1830 = vld [vmem:[%s27 + $0x70] sm:$0xf]
    %v1831 = vld [vmem:[%s27 + $0x74] sm:$0xf]
    %v1832 = vld [vmem:[%s27 + $0x78] sm:$0xf]
    %v1833 = vld [vmem:[%s27 + $0x7c] sm:$0xf]
    %v1834 = vld [vmem:[%s27 + $0x80] sm:$0xf]
    %v1835 = vld [vmem:[%s27 + $0x84] sm:$0xf]
    %v1836 = vld [vmem:[%s27 + $0x88] sm:$0xf]
    %v1837 = vld [vmem:[%s27 + $0x8c] sm:$0xf]
    %v1838 = vld [vmem:[%s27 + $0x90] sm:$0xf]
    %v1839 = vld [vmem:[%s27 + $0x94] sm:$0xf]
    %v1840 = vld [vmem:[%s27 + $0x98] sm:$0xf]
    %v1841 = vld [vmem:[%s27 + $0x9c] sm:$0xf]
    %v1842 = vld [vmem:[%s27 + $0xa0] sm:$0xf]
    %v1843 = vld [vmem:[%s27 + $0xa4] sm:$0xf]
    %v1844 = vld [vmem:[%s27 + $0xa8] sm:$0xf]
    %v1845 = vld [vmem:[%s27 + $0xac] sm:$0xf]
    %v1846 = vld [vmem:[%s27 + $0xb0] sm:$0xf]
    %v1847 = vld [vmem:[%s27 + $0xb4] sm:$0xf]
    %v1848 = vld [vmem:[%s27 + $0xb8] sm:$0xf]
    %v1849 = vld [vmem:[%s27 + $0xbc] sm:$0xf]
    %v1850 = vld [vmem:[%s29] sm:$0x1]
    %v1852 = vlaneseq
    %v1853 = vshrl.u32 %v1852, 7
    %v1854 = vsub.s32 0, %v1853
    %v1855 = vrot.slane %v1850, %v1854
    %v1905 = vunpack.c.l.b16 %v1802
    %v1906 = vunpack.c.l.b16 %v1803
    %v1907 = vunpack.c.l.b16 %v1804
    %v1908 = vunpack.c.l.b16 %v1805
    %v1909 = vunpack.c.l.b16 %v1806
    %v1910 = vunpack.c.l.b16 %v1807
    %v1911 = vunpack.c.l.b16 %v1808
    %v1912 = vunpack.c.l.b16 %v1809
    %v1913 = vunpack.c.l.b16 %v1810
    %v1914 = vunpack.c.l.b16 %v1811
    %v1915 = vunpack.c.l.b16 %v1812
    %v1916 = vunpack.c.l.b16 %v1813
    %v1917 = vunpack.c.l.b16 %v1814
    %v1918 = vunpack.c.l.b16 %v1815
    %v1919 = vunpack.c.l.b16 %v1816
    %v1920 = vunpack.c.l.b16 %v1817
    %v1921 = vunpack.c.l.b16 %v1818
    %v1922 = vunpack.c.l.b16 %v1819
    %v1923 = vunpack.c.l.b16 %v1820
    %v1924 = vunpack.c.l.b16 %v1821
    %v1925 = vunpack.c.l.b16 %v1822
    %v1926 = vunpack.c.l.b16 %v1823
    %v1927 = vunpack.c.l.b16 %v1824
    %v1928 = vunpack.c.l.b16 %v1825
    %v1929 = vunpack.c.l.b16 %v1826
    %v1930 = vunpack.c.l.b16 %v1827
    %v1931 = vunpack.c.l.b16 %v1828
    %v1932 = vunpack.c.l.b16 %v1829
    %v1933 = vunpack.c.l.b16 %v1830
    %v1934 = vunpack.c.l.b16 %v1831
    %v1935 = vunpack.c.l.b16 %v1832
    %v1936 = vunpack.c.l.b16 %v1833
    %v1937 = vunpack.c.l.b16 %v1834
    %v1938 = vunpack.c.l.b16 %v1835
    %v1939 = vunpack.c.l.b16 %v1836
    %v1940 = vunpack.c.l.b16 %v1837
    %v1941 = vunpack.c.l.b16 %v1838
    %v1942 = vunpack.c.l.b16 %v1839
    %v1943 = vunpack.c.l.b16 %v1840
    %v1944 = vunpack.c.l.b16 %v1841
    %v1945 = vunpack.c.l.b16 %v1842
    %v1946 = vunpack.c.l.b16 %v1843
    %v1947 = vunpack.c.l.b16 %v1844
    %v1948 = vunpack.c.l.b16 %v1845
    %v1949 = vunpack.c.l.b16 %v1846
    %v1950 = vunpack.c.l.b16 %v1847
    %v1951 = vunpack.c.l.b16 %v1848
    %v1952 = vunpack.c.l.b16 %v1849
    %v1953 = vpack.c.b16 %v1906, %v1905
    %v1954 = vpack.c.b16 %v1908, %v1907
    %v1955 = vpack.c.b16 %v1910, %v1909
    %v1956 = vpack.c.b16 %v1912, %v1911
    %v1957 = vpack.c.b16 %v1914, %v1913
    %v1958 = vpack.c.b16 %v1916, %v1915
    %v1959 = vpack.c.b16 %v1918, %v1917
    %v1960 = vpack.c.b16 %v1920, %v1919
    %v1961 = vpack.c.b16 %v1922, %v1921
    %v1962 = vpack.c.b16 %v1924, %v1923
    %v1963 = vpack.c.b16 %v1926, %v1925
    %v1964 = vpack.c.b16 %v1928, %v1927
    %v1965 = vpack.c.b16 %v1930, %v1929
    %v1966 = vpack.c.b16 %v1932, %v1931
    %v1967 = vpack.c.b16 %v1934, %v1933
    %v1968 = vpack.c.b16 %v1936, %v1935
    %v1969 = vpack.c.b16 %v1938, %v1937
    %v1970 = vpack.c.b16 %v1940, %v1939
    %v1971 = vpack.c.b16 %v1942, %v1941
    %v1972 = vpack.c.b16 %v1944, %v1943
    %v1973 = vpack.c.b16 %v1946, %v1945
    %v1974 = vpack.c.b16 %v1948, %v1947
    %v1975 = vpack.c.b16 %v1950, %v1949
    %v1976 = vpack.c.b16 %v1952, %v1951
    %2001 = vmatprep.subr.bf16.mxu0 0
    %2002 = vmatpush1.bf16.msra.mxu0 %v1953
    %2003 = vmatprep.subr.bf16.mxu0 0
    %2004 = vmatpush1.bf16.msra.mxu0 %v1954
    %2005 = vmatprep.subr.bf16.mxu0 0
    %2006 = vmatpush1.bf16.msra.mxu0 %v1955
    %2007 = vmatprep.subr.bf16.mxu0 0
    %2008 = vmatpush1.bf16.msra.mxu0 %v1956
    %2009 = vmatprep.subr.bf16.mxu0 0
    %2010 = vmatpush1.bf16.msra.mxu0 %v1957
    %2011 = vmatprep.subr.bf16.mxu0 0
    %2012 = vmatpush1.bf16.msra.mxu0 %v1958
    %2013 = vmatprep.subr.bf16.mxu0 0
    %2014 = vmatpush1.bf16.msra.mxu0 %v1959
    %2015 = vmatprep.subr.bf16.mxu0 0
    %2016 = vmatpush1.bf16.msra.mxu0 %v1960
    %2017 = vmatprep.subr.bf16.mxu0 0
    %2018 = vmatpush1.bf16.msra.mxu0 %v1961
    %2019 = vmatprep.subr.bf16.mxu0 0
    %2020 = vmatpush1.bf16.msra.mxu0 %v1962
    %2021 = vmatprep.subr.bf16.mxu0 0
    %2022 = vmatpush1.bf16.msra.mxu0 %v1963
    %2023 = vmatprep.subr.bf16.mxu0 0
    %2024 = vmatpush1.bf16.msra.mxu0 %v1964
    %2025 = vmatprep.subr.bf16.mxu0 0
    %2026 = vmatpush1.bf16.msra.mxu0 %v1965
    %2027 = vmatprep.subr.bf16.mxu0 0
    %2028 = vmatpush1.bf16.msra.mxu0 %v1966
    %2029 = vmatprep.subr.bf16.mxu0 0
    %2030 = vmatpush1.bf16.msra.mxu0 %v1967
    %2031 = vmatprep.subr.bf16.mxu0 0
    %2032 = vmatpush1.bf16.msra.mxu0 %v1968
    %2033 = vmatprep.mubr.bf16.mxu0 %v1800
    %2034 = vmatmul.mubr.bf16.gmra.mrb[0].mxu0 %v1799
    %v2035 = vpop.f32.mrb[0].mxu0
    %v2036 = vadd.f32 %v1855, %v2035
    %v2037 = vpop.f32.mrb[0].mxu0
    %v2038 = vpop.f32.mrb[0].mxu0
    %v2039 = vpop.f32.mrb[0].mxu0
    %2040 = vdwg.mxu0
    %2041 = vmatprep.subr.bf16.mxu0 0
    %2042 = vmatpush1.bf16.msra.mxu0 %v1969
    %2043 = vmatprep.subr.bf16.mxu0 0
    %2044 = vmatpush1.bf16.msra.mxu0 %v1970
    %2045 = vmatprep.subr.bf16.mxu0 0
    %2046 = vmatpush1.bf16.msra.mxu0 %v1971
    %2047 = vmatprep.subr.bf16.mxu0 0
    %2048 = vmatpush1.bf16.msra.mxu0 %v1972
    %2049 = vmatprep.subr.bf16.mxu0 0
    %2050 = vmatpush1.bf16.msra.mxu0 %v1973
    %2051 = vmatprep.subr.bf16.mxu0 0
    %2052 = vmatpush1.bf16.msra.mxu0 %v1974
    %2053 = vmatprep.subr.bf16.mxu0 0
    %2054 = vmatpush1.bf16.msra.mxu0 %v1975
    %2055 = vmatprep.subr.bf16.mxu0 0
    %2056 = vmatpush1.bf16.msra.mxu0 %v1976
    %2057 = vmatprep.subr.bf16.mxu0 0
    %2058 = vmatpush1.bf16.msra.mxu0 0
    %2059 = vmatprep.subr.bf16.mxu0 0
    %2060 = vmatpush1.bf16.msra.mxu0 0
    %2061 = vmatprep.subr.bf16.mxu0 0
    %2062 = vmatpush1.bf16.msra.mxu0 0
    %2063 = vmatprep.subr.bf16.mxu0 0
    %2064 = vmatpush1.bf16.msra.mxu0 0
    %2065 = vmatprep.subr.bf16.mxu0 0
    %2066 = vmatpush1.bf16.msra.mxu0 0
    %2067 = vmatprep.subr.bf16.mxu0 0
    %2068 = vmatpush1.bf16.msra.mxu0 0
    %2069 = vmatprep.subr.bf16.mxu0 0
    %2070 = vmatpush1.bf16.msra.mxu0 0
    %2071 = vmatprep.subr.bf16.mxu0 0
    %2072 = vmatpush1.bf16.msra.mxu0 0
    %2073 = vmatprep.mubr.bf16.mxu0 0
    %2074 = vmatmul.mubr.bf16.gmra.mrb[0].mxu0 %v1801
    %v2075 = vpop.f32.mrb[0].mxu0
    %v2076 = vadd.f32 %v2036, %v2075
    %v2077 = vpop.f32.mrb[0].mxu0
    %v2078 = vpop.f32.mrb[0].mxu0
    %v2079 = vpop.f32.mrb[0].mxu0
    %2080 = vdwg.mxu0
    %v2082 = vrot.slane %v2076, 7
    %v2084 = vsel %vm232, %v2082, %v2082
    %v2085 = vmul.f32 %v2084, %v1786
    %v2086 = vrot.slane %v2076, 1
    %v2088 = vsel %vm248, %v2086, %v2086
    %v2089 = vmul.f32 %v2088, %v1789
    %v2090 = vpack.c.bf16 %v2085, %v2085
    %v2091 = vpack.c.bf16 %v2076, %v2076
    %v2092 = vpack.c.bf16 %v2089, %v2089
    %v2093 = vld [vmem:[%s31] sm:$0xf]
    %v2094 = vld [vmem:[%s31 + $0x4] sm:$0xf]
    %v2095 = vld [vmem:[%s31 + $0x8] sm:$0xf]
    %v2096 = vld [vmem:[%s31 + $0xc] sm:$0xf]
    %v2097 = vld [vmem:[%s31 + $0x10] sm:$0xf]
    %v2098 = vld [vmem:[%s31 + $0x14] sm:$0xf]
    %v2099 = vld [vmem:[%s31 + $0x18] sm:$0xf]
    %v2100 = vld [vmem:[%s31 + $0x1c] sm:$0xf]
    %v2101 = vld [vmem:[%s31 + $0x20] sm:$0xf]
    %v2102 = vld [vmem:[%s31 + $0x24] sm:$0xf]
    %v2103 = vld [vmem:[%s31 + $0x28] sm:$0xf]
    %v2104 = vld [vmem:[%s31 + $0x2c] sm:$0xf]
    %v2105 = vld [vmem:[%s31 + $0x30] sm:$0xf]
    %v2106 = vld [vmem:[%s31 + $0x34] sm:$0xf]
    %v2107 = vld [vmem:[%s31 + $0x38] sm:$0xf]
    %v2108 = vld [vmem:[%s31 + $0x3c] sm:$0xf]
    %v2109 = vld [vmem:[%s31 + $0x40] sm:$0xf]
    %v2110 = vld [vmem:[%s31 + $0x44] sm:$0xf]
    %v2111 = vld [vmem:[%s31 + $0x48] sm:$0xf]
    %v2112 = vld [vmem:[%s31 + $0x4c] sm:$0xf]
    %v2113 = vld [vmem:[%s31 + $0x50] sm:$0xf]
    %v2114 = vld [vmem:[%s31 + $0x54] sm:$0xf]
    %v2115 = vld [vmem:[%s31 + $0x58] sm:$0xf]
    %v2116 = vld [vmem:[%s31 + $0x5c] sm:$0xf]
    %v2117 = vld [vmem:[%s31 + $0x60] sm:$0xf]
    %v2118 = vld [vmem:[%s31 + $0x64] sm:$0xf]
    %v2119 = vld [vmem:[%s31 + $0x68] sm:$0xf]
    %v2120 = vld [vmem:[%s31 + $0x6c] sm:$0xf]
    %v2121 = vld [vmem:[%s31 + $0x70] sm:$0xf]
    %v2122 = vld [vmem:[%s31 + $0x74] sm:$0xf]
    %v2123 = vld [vmem:[%s31 + $0x78] sm:$0xf]
    %v2124 = vld [vmem:[%s31 + $0x7c] sm:$0xf]
    %v2125 = vld [vmem:[%s31 + $0x80] sm:$0xf]
    %v2126 = vld [vmem:[%s31 + $0x84] sm:$0xf]
    %v2127 = vld [vmem:[%s31 + $0x88] sm:$0xf]
    %v2128 = vld [vmem:[%s31 + $0x8c] sm:$0xf]
    %v2129 = vld [vmem:[%s31 + $0x90] sm:$0xf]
    %v2130 = vld [vmem:[%s31 + $0x94] sm:$0xf]
    %v2131 = vld [vmem:[%s31 + $0x98] sm:$0xf]
    %v2132 = vld [vmem:[%s31 + $0x9c] sm:$0xf]
    %v2133 = vld [vmem:[%s31 + $0xa0] sm:$0xf]
    %v2134 = vld [vmem:[%s31 + $0xa4] sm:$0xf]
    %v2135 = vld [vmem:[%s31 + $0xa8] sm:$0xf]
    %v2136 = vld [vmem:[%s31 + $0xac] sm:$0xf]
    %v2137 = vld [vmem:[%s31 + $0xb0] sm:$0xf]
    %v2138 = vld [vmem:[%s31 + $0xb4] sm:$0xf]
    %v2139 = vld [vmem:[%s31 + $0xb8] sm:$0xf]
    %v2140 = vld [vmem:[%s31 + $0xbc] sm:$0xf]
    %v2141 = vld [vmem:[%s33] sm:$0x1]
    %v2143 = vlaneseq
    %v2144 = vshrl.u32 %v2143, 7
    %v2145 = vsub.s32 0, %v2144
    %v2146 = vrot.slane %v2141, %v2145
    %v2196 = vunpack.c.l.b16 %v2093
    %v2197 = vunpack.c.l.b16 %v2094
    %v2198 = vunpack.c.l.b16 %v2095
    %v2199 = vunpack.c.l.b16 %v2096
    %v2200 = vunpack.c.l.b16 %v2097
    %v2201 = vunpack.c.l.b16 %v2098
    %v2202 = vunpack.c.l.b16 %v2099
    %v2203 = vunpack.c.l.b16 %v2100
    %v2204 = vunpack.c.l.b16 %v2101
    %v2205 = vunpack.c.l.b16 %v2102
    %v2206 = vunpack.c.l.b16 %v2103
    %v2207 = vunpack.c.l.b16 %v2104
    %v2208 = vunpack.c.l.b16 %v2105
    %v2209 = vunpack.c.l.b16 %v2106
    %v2210 = vunpack.c.l.b16 %v2107
    %v2211 = vunpack.c.l.b16 %v2108
    %v2212 = vunpack.c.l.b16 %v2109
    %v2213 = vunpack.c.l.b16 %v2110
    %v2214 = vunpack.c.l.b16 %v2111
    %v2215 = vunpack.c.l.b16 %v2112
    %v2216 = vunpack.c.l.b16 %v2113
    %v2217 = vunpack.c.l.b16 %v2114
    %v2218 = vunpack.c.l.b16 %v2115
    %v2219 = vunpack.c.l.b16 %v2116
    %v2220 = vunpack.c.l.b16 %v2117
    %v2221 = vunpack.c.l.b16 %v2118
    %v2222 = vunpack.c.l.b16 %v2119
    %v2223 = vunpack.c.l.b16 %v2120
    %v2224 = vunpack.c.l.b16 %v2121
    %v2225 = vunpack.c.l.b16 %v2122
    %v2226 = vunpack.c.l.b16 %v2123
    %v2227 = vunpack.c.l.b16 %v2124
    %v2228 = vunpack.c.l.b16 %v2125
    %v2229 = vunpack.c.l.b16 %v2126
    %v2230 = vunpack.c.l.b16 %v2127
    %v2231 = vunpack.c.l.b16 %v2128
    %v2232 = vunpack.c.l.b16 %v2129
    %v2233 = vunpack.c.l.b16 %v2130
    %v2234 = vunpack.c.l.b16 %v2131
    %v2235 = vunpack.c.l.b16 %v2132
    %v2236 = vunpack.c.l.b16 %v2133
    %v2237 = vunpack.c.l.b16 %v2134
    %v2238 = vunpack.c.l.b16 %v2135
    %v2239 = vunpack.c.l.b16 %v2136
    %v2240 = vunpack.c.l.b16 %v2137
    %v2241 = vunpack.c.l.b16 %v2138
    %v2242 = vunpack.c.l.b16 %v2139
    %v2243 = vunpack.c.l.b16 %v2140
    %v2244 = vpack.c.b16 %v2197, %v2196
    %v2245 = vpack.c.b16 %v2199, %v2198
    %v2246 = vpack.c.b16 %v2201, %v2200
    %v2247 = vpack.c.b16 %v2203, %v2202
    %v2248 = vpack.c.b16 %v2205, %v2204
    %v2249 = vpack.c.b16 %v2207, %v2206
    %v2250 = vpack.c.b16 %v2209, %v2208
    %v2251 = vpack.c.b16 %v2211, %v2210
    %v2252 = vpack.c.b16 %v2213, %v2212
    %v2253 = vpack.c.b16 %v2215, %v2214
    %v2254 = vpack.c.b16 %v2217, %v2216
    %v2255 = vpack.c.b16 %v2219, %v2218
    %v2256 = vpack.c.b16 %v2221, %v2220
    %v2257 = vpack.c.b16 %v2223, %v2222
    %v2258 = vpack.c.b16 %v2225, %v2224
    %v2259 = vpack.c.b16 %v2227, %v2226
    %v2260 = vpack.c.b16 %v2229, %v2228
    %v2261 = vpack.c.b16 %v2231, %v2230
    %v2262 = vpack.c.b16 %v2233, %v2232
    %v2263 = vpack.c.b16 %v2235, %v2234
    %v2264 = vpack.c.b16 %v2237, %v2236
    %v2265 = vpack.c.b16 %v2239, %v2238
    %v2266 = vpack.c.b16 %v2241, %v2240
    %v2267 = vpack.c.b16 %v2243, %v2242
    %2292 = vmatprep.subr.bf16.mxu0 0
    %2293 = vmatpush1.bf16.msra.mxu0 %v2244
    %2294 = vmatprep.subr.bf16.mxu0 0
    %2295 = vmatpush1.bf16.msra.mxu0 %v2245
    %2296 = vmatprep.subr.bf16.mxu0 0
    %2297 = vmatpush1.bf16.msra.mxu0 %v2246
    %2298 = vmatprep.subr.bf16.mxu0 0
    %2299 = vmatpush1.bf16.msra.mxu0 %v2247
    %2300 = vmatprep.subr.bf16.mxu0 0
    %2301 = vmatpush1.bf16.msra.mxu0 %v2248
    %2302 = vmatprep.subr.bf16.mxu0 0
    %2303 = vmatpush1.bf16.msra.mxu0 %v2249
    %2304 = vmatprep.subr.bf16.mxu0 0
    %2305 = vmatpush1.bf16.msra.mxu0 %v2250
    %2306 = vmatprep.subr.bf16.mxu0 0
    %2307 = vmatpush1.bf16.msra.mxu0 %v2251
    %2308 = vmatprep.subr.bf16.mxu0 0
    %2309 = vmatpush1.bf16.msra.mxu0 %v2252
    %2310 = vmatprep.subr.bf16.mxu0 0
    %2311 = vmatpush1.bf16.msra.mxu0 %v2253
    %2312 = vmatprep.subr.bf16.mxu0 0
    %2313 = vmatpush1.bf16.msra.mxu0 %v2254
    %2314 = vmatprep.subr.bf16.mxu0 0
    %2315 = vmatpush1.bf16.msra.mxu0 %v2255
    %2316 = vmatprep.subr.bf16.mxu0 0
    %2317 = vmatpush1.bf16.msra.mxu0 %v2256
    %2318 = vmatprep.subr.bf16.mxu0 0
    %2319 = vmatpush1.bf16.msra.mxu0 %v2257
    %2320 = vmatprep.subr.bf16.mxu0 0
    %2321 = vmatpush1.bf16.msra.mxu0 %v2258
    %2322 = vmatprep.subr.bf16.mxu0 0
    %2323 = vmatpush1.bf16.msra.mxu0 %v2259
    %2324 = vmatprep.mubr.bf16.mxu0 %v2091
    %2325 = vmatmul.mubr.bf16.gmra.mrb[0].mxu0 %v2090
    %v2326 = vpop.f32.mrb[0].mxu0
    %v2327 = vadd.f32 %v2146, %v2326
    %v2328 = vpop.f32.mrb[0].mxu0
    %v2329 = vpop.f32.mrb[0].mxu0
    %v2330 = vpop.f32.mrb[0].mxu0
    %2331 = vdwg.mxu0
    %2332 = vmatprep.subr.bf16.mxu0 0
    %2333 = vmatpush1.bf16.msra.mxu0 %v2260
    %2334 = vmatprep.subr.bf16.mxu0 0
    %2335 = vmatpush1.bf16.msra.mxu0 %v2261
    %2336 = vmatprep.subr.bf16.mxu0 0
    %2337 = vmatpush1.bf16.msra.mxu0 %v2262
    %2338 = vmatprep.subr.bf16.mxu0 0
    %2339 = vmatpush1.bf16.msra.mxu0 %v2263
    %2340 = vmatprep.subr.bf16.mxu0 0
    %2341 = vmatpush1.bf16.msra.mxu0 %v2264
    %2342 = vmatprep.subr.bf16.mxu0 0
    %2343 = vmatpush1.bf16.msra.mxu0 %v2265
    %2344 = vmatprep.subr.bf16.mxu0 0
    %2345 = vmatpush1.bf16.msra.mxu0 %v2266
    %2346 = vmatprep.subr.bf16.mxu0 0
    %2347 = vmatpush1.bf16.msra.mxu0 %v2267
    %2348 = vmatprep.subr.bf16.mxu0 0
    %2349 = vmatpush1.bf16.msra.mxu0 0
    %2350 = vmatprep.subr.bf16.mxu0 0
    %2351 = vmatpush1.bf16.msra.mxu0 0
    %2352 = vmatprep.subr.bf16.mxu0 0
    %2353 = vmatpush1.bf16.msra.mxu0 0
    %2354 = vmatprep.subr.bf16.mxu0 0
    %2355 = vmatpush1.bf16.msra.mxu0 0
    %2356 = vmatprep.subr.bf16.mxu0 0
    %2357 = vmatpush1.bf16.msra.mxu0 0
    %2358 = vmatprep.subr.bf16.mxu0 0
    %2359 = vmatpush1.bf16.msra.mxu0 0
    %2360 = vmatprep.subr.bf16.mxu0 0
    %2361 = vmatpush1.bf16.msra.mxu0 0
    %2362 = vmatprep.subr.bf16.mxu0 0
    %2363 = vmatpush1.bf16.msra.mxu0 0
    %2364 = vmatprep.mubr.bf16.mxu0 0
    %2365 = vmatmul.mubr.bf16.gmra.mrb[0].mxu0 %v2092
    %v2366 = vpop.f32.mrb[0].mxu0
    %v2367 = vadd.f32 %v2327, %v2366
    %v2368 = vpop.f32.mrb[0].mxu0
    %v2369 = vpop.f32.mrb[0].mxu0
    %v2370 = vpop.f32.mrb[0].mxu0
    %2371 = vdwg.mxu0
    %v2372 = vrot.slane %v2367, 4
    %v2373 = vadd.f32 %v2367, %v2372
    %v2374 = vrot.slane %v2373, 2
    %v2375 = vadd.f32 %v2373, %v2374
    %v2376 = vrot.slane %v2375, 1
    %v2377 = vadd.f32 %v2375, %v2376
    %2379 = vrot.lane.b32.xlu0 %v2377, 32
    %v2380 = vpop.permute.xlu0 %2379
    %v2382 = vadd.f32 %v2377, %v2380
    %2384 = vrot.lane.b32.xlu0 %v2382, 64
    %v2385 = vpop.permute.xlu0 %2384
    %v2387 = vadd.f32 %v2382, %v2385
    %v2388 = vmul.f32 %v2387, 0.03125
    %v2389 = vlaneseq
    %v2390 = vshrl.u32 %v2389, 7
    %v2391 = vsub.s32 0, %v2390
    %v2392 = vrot.slane %v2388, %v2391
    %v2393 = vsub.f32 %v2367, %v2392
    %v2394 = vmul.f32 %v2393, %v2393
    %v2395 = vrot.slane %v2394, 4
    %v2396 = vadd.f32 %v2394, %v2395
    %v2397 = vrot.slane %v2396, 2
    %v2398 = vadd.f32 %v2396, %v2397
    %v2399 = vrot.slane %v2398, 1
    %v2400 = vadd.f32 %v2398, %v2399
    %2402 = vrot.lane.b32.xlu0 %v2400, 32
    %v2403 = vpop.permute.xlu0 %2402
    %v2405 = vadd.f32 %v2400, %v2403
    %2407 = vrot.lane.b32.xlu0 %v2405, 64
    %v2408 = vpop.permute.xlu0 %2407
    %v2410 = vadd.f32 %v2405, %v2408
    %v2411 = vmul.f32 %v2410, 0.03125
    %v2412 = vadd.f32 %v2411, 1e-05
    %v2413 = vrsqrt.pop %v2412
    %v2414 = vlaneseq
    %v2415 = vshrl.u32 %v2414, 7
    %v2416 = vsub.s32 0, %v2415
    %v2417 = vrot.slane %v2413, %v2416
    %v2418 = vmul.f32 %v2393, %v2417
    %v2419 = vld [vmem:[%s35] sm:$0x1]
    %v2421 = vlaneseq
    %v2422 = vshrl.u32 %v2421, 7
    %v2423 = vsub.s32 0, %v2422
    %v2424 = vrot.slane %v2419, %v2423
    %v2426 = vmul.f32 %v2418, %v2424
    %v2427 = vld [vmem:[%s37] sm:$0x1]
    %v2429 = vlaneseq
    %v2430 = vshrl.u32 %v2429, 7
    %v2431 = vsub.s32 0, %v2430
    %v2432 = vrot.slane %v2427, %v2431
    %v2434 = vadd.f32 %v2426, %v2432
    %2435 = vst [vmem:[%s55] sm:$0xff] %v2434
    %v2436 = vld [vmem:[%s55] ss:$2 sm:$0xf]
    %s2437 = scalar_lea.vmem %s55, 1
    %v2438 = vld [vmem:[%s2437] ss:$2 sm:$0xf]
    %v2439 = vmax.f32 %v2436, %v2438
    %2441 = vrot.lane.b32.xlu0 %v2439, 64
    %v2442 = vpop.permute.xlu0 %2441
    %v2444 = vmax.f32 %v2439, %v2442
    %vm2445 = vcmp.lt.s32.totalorder %v150, 0
    %v2446 = vsub.s32 0, %v150
    %v2447 = vsel %vm2445, %v2446, %v150
    %v2448 = vshrl.u32 %v2447, 1
    %v2449 = vand.u32 %v2447, 1
    %v2450 = vsub.s32 0, %v2449
    %v2451 = vsel %vm2445, %v2450, %v2449
    %vm2452 = vcmp.ne.s32.totalorder %v2451, 0
    %vm2453 = vcmp.lt.s32.totalorder %v2451, 0
    %vm2454 = vmand %vm2453, %vm2452
    %v2455 = vadd.s32 %v2451, 2
    %v2456 = vsel %vm2454, %v2455, %v2451
    %vm2457 = vcmp.ge.s32.totalorder %v2456, 1
    %v2458 = vsel %vm2457, 1, 0
    %v2459 = vcvt.s32.f32 %v2458
    %vm2460 = vcmp.le.s32.totalorder %v2456, 0
    %v2461 = vsel %vm2460, 1, 0
    %v2462 = vcvt.s32.f32 %v2461
    %v2464 = vrot.slane %v2444, 3
    %v2466 = vrot.slane %v2444, 7
    %v2468 = vsel %vm232, %v2464, %v2466
    %v2469 = vmul.f32 %v2468, %v2459
    %v2470 = vrot.slane %v2444, 1
    %v2472 = vrot.slane %v2444, 5
    %vm2474 = vcmask 1042432
    %v2475 = vsel %vm2474, %v2470, %v2472
    %v2476 = vmul.f32 %v2475, %v2462
    %v2477 = vpack.c.bf16 %v2469, %v2469
    %v2478 = vpack.c.bf16 %v2444, %v2444
    %v2479 = vpack.c.bf16 %v2476, %v2476
    %v2480 = vld [vmem:[#allocation2] sm:$0xf]
    %v2481 = vld [vmem:[#allocation2 + $0x4] sm:$0xf]
    %v2482 = vld [vmem:[#allocation2 + $0x8] sm:$0xf]
    %v2483 = vld [vmem:[#allocation2 + $0xc] sm:$0xf]
    %v2484 = vld [vmem:[#allocation2 + $0x10] sm:$0xf]
    %v2485 = vld [vmem:[#allocation2 + $0x14] sm:$0xf]
    %v2486 = vld [vmem:[#allocation2 + $0x18] sm:$0xf]
    %v2487 = vld [vmem:[#allocation2 + $0x1c] sm:$0xf]
    %v2488 = vld [vmem:[#allocation2 + $0x20] sm:$0xf]
    %v2489 = vld [vmem:[#allocation2 + $0x24] sm:$0xf]
    %v2490 = vld [vmem:[#allocation2 + $0x28] sm:$0xf]
    %v2491 = vld [vmem:[#allocation2 + $0x2c] sm:$0xf]
    %v2492 = vld [vmem:[#allocation2 + $0x30] sm:$0xf]
    %v2493 = vld [vmem:[#allocation2 + $0x34] sm:$0xf]
    %v2494 = vld [vmem:[#allocation2 + $0x38] sm:$0xf]
    %v2495 = vld [vmem:[#allocation2 + $0x3c] sm:$0xf]
    %v2496 = vld [vmem:[#allocation2 + $0x40] sm:$0xf]
    %v2497 = vld [vmem:[#allocation2 + $0x44] sm:$0xf]
    %v2498 = vld [vmem:[#allocation2 + $0x48] sm:$0xf]
    %v2499 = vld [vmem:[#allocation2 + $0x4c] sm:$0xf]
    %v2500 = vld [vmem:[#allocation2 + $0x50] sm:$0xf]
    %v2501 = vld [vmem:[#allocation2 + $0x54] sm:$0xf]
    %v2502 = vld [vmem:[#allocation2 + $0x58] sm:$0xf]
    %v2503 = vld [vmem:[#allocation2 + $0x5c] sm:$0xf]
    %v2504 = vld [vmem:[#allocation2 + $0x60] sm:$0xf]
    %v2505 = vld [vmem:[#allocation2 + $0x64] sm:$0xf]
    %v2506 = vld [vmem:[#allocation2 + $0x68] sm:$0xf]
    %v2507 = vld [vmem:[#allocation2 + $0x6c] sm:$0xf]
    %v2508 = vld [vmem:[#allocation2 + $0x70] sm:$0xf]
    %v2509 = vld [vmem:[#allocation2 + $0x74] sm:$0xf]
    %v2510 = vld [vmem:[#allocation2 + $0x78] sm:$0xf]
    %v2511 = vld [vmem:[#allocation2 + $0x7c] sm:$0xf]
    %v2512 = vld [vmem:[#allocation2 + $0x80] sm:$0xf]
    %v2513 = vld [vmem:[#allocation2 + $0x84] sm:$0xf]
    %v2514 = vld [vmem:[#allocation2 + $0x88] sm:$0xf]
    %v2515 = vld [vmem:[#allocation2 + $0x8c] sm:$0xf]
    %v2516 = vld [vmem:[#allocation2 + $0x90] sm:$0xf]
    %v2517 = vld [vmem:[#allocation2 + $0x94] sm:$0xf]
    %v2518 = vld [vmem:[#allocation2 + $0x98] sm:$0xf]
    %v2519 = vld [vmem:[#allocation2 + $0x9c] sm:$0xf]
    %v2520 = vld [vmem:[#allocation2 + $0xa0] sm:$0xf]
    %v2521 = vld [vmem:[#allocation2 + $0xa4] sm:$0xf]
    %v2522 = vld [vmem:[#allocation2 + $0xa8] sm:$0xf]
    %v2523 = vld [vmem:[#allocation2 + $0xac] sm:$0xf]
    %v2524 = vld [vmem:[#allocation2 + $0xb0] sm:$0xf]
    %v2525 = vld [vmem:[#allocation2 + $0xb4] sm:$0xf]
    %v2526 = vld [vmem:[#allocation2 + $0xb8] sm:$0xf]
    %v2527 = vld [vmem:[#allocation2 + $0xbc] sm:$0xf]
    %v2528 = vld [vmem:[%s41] sm:$0x1]
    %v2530 = vlaneseq
    %v2531 = vshrl.u32 %v2530, 7
    %v2532 = vsub.s32 0, %v2531
    %v2533 = vrot.slane %v2528, %v2532
    %v2583 = vunpack.c.l.b16 %v2480
    %v2584 = vunpack.c.l.b16 %v2481
    %v2585 = vunpack.c.l.b16 %v2482
    %v2586 = vunpack.c.l.b16 %v2483
    %v2587 = vunpack.c.l.b16 %v2484
    %v2588 = vunpack.c.l.b16 %v2485
    %v2589 = vunpack.c.l.b16 %v2486
    %v2590 = vunpack.c.l.b16 %v2487
    %v2591 = vunpack.c.l.b16 %v2488
    %v2592 = vunpack.c.l.b16 %v2489
    %v2593 = vunpack.c.l.b16 %v2490
    %v2594 = vunpack.c.l.b16 %v2491
    %v2595 = vunpack.c.l.b16 %v2492
    %v2596 = vunpack.c.l.b16 %v2493
    %v2597 = vunpack.c.l.b16 %v2494
    %v2598 = vunpack.c.l.b16 %v2495
    %v2599 = vunpack.c.l.b16 %v2496
    %v2600 = vunpack.c.l.b16 %v2497
    %v2601 = vunpack.c.l.b16 %v2498
    %v2602 = vunpack.c.l.b16 %v2499
    %v2603 = vunpack.c.l.b16 %v2500
    %v2604 = vunpack.c.l.b16 %v2501
    %v2605 = vunpack.c.l.b16 %v2502
    %v2606 = vunpack.c.l.b16 %v2503
    %v2607 = vunpack.c.l.b16 %v2504
    %v2608 = vunpack.c.l.b16 %v2505
    %v2609 = vunpack.c.l.b16 %v2506
    %v2610 = vunpack.c.l.b16 %v2507
    %v2611 = vunpack.c.l.b16 %v2508
    %v2612 = vunpack.c.l.b16 %v2509
    %v2613 = vunpack.c.l.b16 %v2510
    %v2614 = vunpack.c.l.b16 %v2511
    %v2615 = vunpack.c.l.b16 %v2512
    %v2616 = vunpack.c.l.b16 %v2513
    %v2617 = vunpack.c.l.b16 %v2514
    %v2618 = vunpack.c.l.b16 %v2515
    %v2619 = vunpack.c.l.b16 %v2516
    %v2620 = vunpack.c.l.b16 %v2517
    %v2621 = vunpack.c.l.b16 %v2518
    %v2622 = vunpack.c.l.b16 %v2519
    %v2623 = vunpack.c.l.b16 %v2520
    %v2624 = vunpack.c.l.b16 %v2521
    %v2625 = vunpack.c.l.b16 %v2522
    %v2626 = vunpack.c.l.b16 %v2523
    %v2627 = vunpack.c.l.b16 %v2524
    %v2628 = vunpack.c.l.b16 %v2525
    %v2629 = vunpack.c.l.b16 %v2526
    %v2630 = vunpack.c.l.b16 %v2527
    %v2631 = vpack.c.b16 %v2584, %v2583
    %v2632 = vpack.c.b16 %v2586, %v2585
    %v2633 = vpack.c.b16 %v2588, %v2587
    %v2634 = vpack.c.b16 %v2590, %v2589
    %v2635 = vpack.c.b16 %v2592, %v2591
    %v2636 = vpack.c.b16 %v2594, %v2593
    %v2637 = vpack.c.b16 %v2596, %v2595
    %v2638 = vpack.c.b16 %v2598, %v2597
    %v2639 = vpack.c.b16 %v2600, %v2599
    %v2640 = vpack.c.b16 %v2602, %v2601
    %v2641 = vpack.c.b16 %v2604, %v2603
    %v2642 = vpack.c.b16 %v2606, %v2605
    %v2643 = vpack.c.b16 %v2608, %v2607
    %v2644 = vpack.c.b16 %v2610, %v2609
    %v2645 = vpack.c.b16 %v2612, %v2611
    %v2646 = vpack.c.b16 %v2614, %v2613
    %v2647 = vpack.c.b16 %v2616, %v2615
    %v2648 = vpack.c.b16 %v2618, %v2617
    %v2649 = vpack.c.b16 %v2620, %v2619
    %v2650 = vpack.c.b16 %v2622, %v2621
    %v2651 = vpack.c.b16 %v2624, %v2623
    %v2652 = vpack.c.b16 %v2626, %v2625
    %v2653 = vpack.c.b16 %v2628, %v2627
    %v2654 = vpack.c.b16 %v2630, %v2629
    %2679 = vmatprep.subr.bf16.mxu0 0
    %2680 = vmatpush1.bf16.msra.mxu0 %v2631
    %2681 = vmatprep.subr.bf16.mxu0 0
    %2682 = vmatpush1.bf16.msra.mxu0 %v2632
    %2683 = vmatprep.subr.bf16.mxu0 0
    %2684 = vmatpush1.bf16.msra.mxu0 %v2633
    %2685 = vmatprep.subr.bf16.mxu0 0
    %2686 = vmatpush1.bf16.msra.mxu0 %v2634
    %2687 = vmatprep.subr.bf16.mxu0 0
    %2688 = vmatpush1.bf16.msra.mxu0 %v2635
    %2689 = vmatprep.subr.bf16.mxu0 0
    %2690 = vmatpush1.bf16.msra.mxu0 %v2636
    %2691 = vmatprep.subr.bf16.mxu0 0
    %2692 = vmatpush1.bf16.msra.mxu0 %v2637
    %2693 = vmatprep.subr.bf16.mxu0 0
    %2694 = vmatpush1.bf16.msra.mxu0 %v2638
    %2695 = vmatprep.subr.bf16.mxu0 0
    %2696 = vmatpush1.bf16.msra.mxu0 %v2639
    %2697 = vmatprep.subr.bf16.mxu0 0
    %2698 = vmatpush1.bf16.msra.mxu0 %v2640
    %2699 = vmatprep.subr.bf16.mxu0 0
    %2700 = vmatpush1.bf16.msra.mxu0 %v2641
    %2701 = vmatprep.subr.bf16.mxu0 0
    %2702 = vmatpush1.bf16.msra.mxu0 %v2642
    %2703 = vmatprep.subr.bf16.mxu0 0
    %2704 = vmatpush1.bf16.msra.mxu0 %v2643
    %2705 = vmatprep.subr.bf16.mxu0 0
    %2706 = vmatpush1.bf16.msra.mxu0 %v2644
    %2707 = vmatprep.subr.bf16.mxu0 0
    %2708 = vmatpush1.bf16.msra.mxu0 %v2645
    %2709 = vmatprep.subr.bf16.mxu0 0
    %2710 = vmatpush1.bf16.msra.mxu0 %v2646
    %2711 = vmatprep.mubr.bf16.mxu0 %v2478
    %2712 = vmatmul.mubr.bf16.gmra.mrb[0].mxu0 %v2477
    %v2713 = vpop.f32.mrb[0].mxu0
    %v2714 = vadd.f32 %v2533, %v2713
    %v2715 = vpop.f32.mrb[0].mxu0
    %v2716 = vpop.f32.mrb[0].mxu0
    %v2717 = vpop.f32.mrb[0].mxu0
    %2718 = vdwg.mxu0
    %2719 = vmatprep.subr.bf16.mxu0 0
    %2720 = vmatpush1.bf16.msra.mxu0 %v2647
    %2721 = vmatprep.subr.bf16.mxu0 0
    %2722 = vmatpush1.bf16.msra.mxu0 %v2648
    %2723 = vmatprep.subr.bf16.mxu0 0
    %2724 = vmatpush1.bf16.msra.mxu0 %v2649
    %2725 = vmatprep.subr.bf16.mxu0 0
    %2726 = vmatpush1.bf16.msra.mxu0 %v2650
    %2727 = vmatprep.subr.bf16.mxu0 0
    %2728 = vmatpush1.bf16.msra.mxu0 %v2651
    %2729 = vmatprep.subr.bf16.mxu0 0
    %2730 = vmatpush1.bf16.msra.mxu0 %v2652
    %2731 = vmatprep.subr.bf16.mxu0 0
    %2732 = vmatpush1.bf16.msra.mxu0 %v2653
    %2733 = vmatprep.subr.bf16.mxu0 0
    %2734 = vmatpush1.bf16.msra.mxu0 %v2654
    %2735 = vmatprep.subr.bf16.mxu0 0
    %2736 = vmatpush1.bf16.msra.mxu0 0
    %2737 = vmatprep.subr.bf16.mxu0 0
    %2738 = vmatpush1.bf16.msra.mxu0 0
    %2739 = vmatprep.subr.bf16.mxu0 0
    %2740 = vmatpush1.bf16.msra.mxu0 0
    %2741 = vmatprep.subr.bf16.mxu0 0
    %2742 = vmatpush1.bf16.msra.mxu0 0
    %2743 = vmatprep.subr.bf16.mxu0 0
    %2744 = vmatpush1.bf16.msra.mxu0 0
    %2745 = vmatprep.subr.bf16.mxu0 0
    %2746 = vmatpush1.bf16.msra.mxu0 0
    %2747 = vmatprep.subr.bf16.mxu0 0
    %2748 = vmatpush1.bf16.msra.mxu0 0
    %2749 = vmatprep.subr.bf16.mxu0 0
    %2750 = vmatpush1.bf16.msra.mxu0 0
    %2751 = vmatprep.mubr.bf16.mxu0 0
    %2752 = vmatmul.mubr.bf16.gmra.mrb[0].mxu0 %v2479
    %v2753 = vpop.f32.mrb[0].mxu0
    %v2754 = vadd.f32 %v2714, %v2753
    %v2755 = vpop.f32.mrb[0].mxu0
    %v2756 = vpop.f32.mrb[0].mxu0
    %v2757 = vpop.f32.mrb[0].mxu0
    %2758 = vdwg.mxu0
    %v2760 = vrot.slane %v2754, 3
    %v2762 = vrot.slane %v2754, 7
    %v2764 = vsel %vm232, %v2760, %v2762
    %v2765 = vmul.f32 %v2764, %v2459
    %v2766 = vrot.slane %v2754, 1
    %v2768 = vrot.slane %v2754, 5
    %v2770 = vsel %vm2474, %v2766, %v2768
    %v2771 = vmul.f32 %v2770, %v2462
    %v2772 = vpack.c.bf16 %v2765, %v2765
    %v2773 = vpack.c.bf16 %v2754, %v2754
    %v2774 = vpack.c.bf16 %v2771, %v2771
    %v2775 = vld [vmem:[#allocation5] sm:$0xf]
    %v2776 = vld [vmem:[#allocation5 + $0x4] sm:$0xf]
    %v2777 = vld [vmem:[#allocation5 + $0x8] sm:$0xf]
    %v2778 = vld [vmem:[#allocation5 + $0xc] sm:$0xf]
    %v2779 = vld [vmem:[#allocation5 + $0x10] sm:$0xf]
    %v2780 = vld [vmem:[#allocation5 + $0x14] sm:$0xf]
    %v2781 = vld [vmem:[#allocation5 + $0x18] sm:$0xf]
    %v2782 = vld [vmem:[#allocation5 + $0x1c] sm:$0xf]
    %v2783 = vld [vmem:[#allocation5 + $0x20] sm:$0xf]
    %v2784 = vld [vmem:[#allocation5 + $0x24] sm:$0xf]
    %v2785 = vld [vmem:[#allocation5 + $0x28] sm:$0xf]
    %v2786 = vld [vmem:[#allocation5 + $0x2c] sm:$0xf]
    %v2787 = vld [vmem:[#allocation5 + $0x30] sm:$0xf]
    %v2788 = vld [vmem:[#allocation5 + $0x34] sm:$0xf]
    %v2789 = vld [vmem:[#allocation5 + $0x38] sm:$0xf]
    %v2790 = vld [vmem:[#allocation5 + $0x3c] sm:$0xf]
    %v2791 = vld [vmem:[#allocation5 + $0x40] sm:$0xf]
    %v2792 = vld [vmem:[#allocation5 + $0x44] sm:$0xf]
    %v2793 = vld [vmem:[#allocation5 + $0x48] sm:$0xf]
    %v2794 = vld [vmem:[#allocation5 + $0x4c] sm:$0xf]
    %v2795 = vld [vmem:[#allocation5 + $0x50] sm:$0xf]
    %v2796 = vld [vmem:[#allocation5 + $0x54] sm:$0xf]
    %v2797 = vld [vmem:[#allocation5 + $0x58] sm:$0xf]
    %v2798 = vld [vmem:[#allocation5 + $0x5c] sm:$0xf]
    %v2799 = vld [vmem:[#allocation5 + $0x60] sm:$0xf]
    %v2800 = vld [vmem:[#allocation5 + $0x64] sm:$0xf]
    %v2801 = vld [vmem:[#allocation5 + $0x68] sm:$0xf]
    %v2802 = vld [vmem:[#allocation5 + $0x6c] sm:$0xf]
    %v2803 = vld [vmem:[#allocation5 + $0x70] sm:$0xf]
    %v2804 = vld [vmem:[#allocation5 + $0x74] sm:$0xf]
    %v2805 = vld [vmem:[#allocation5 + $0x78] sm:$0xf]
    %v2806 = vld [vmem:[#allocation5 + $0x7c] sm:$0xf]
    %v2807 = vld [vmem:[#allocation5 + $0x80] sm:$0xf]
    %v2808 = vld [vmem:[#allocation5 + $0x84] sm:$0xf]
    %v2809 = vld [vmem:[#allocation5 + $0x88] sm:$0xf]
    %v2810 = vld [vmem:[#allocation5 + $0x8c] sm:$0xf]
    %v2811 = vld [vmem:[#allocation5 + $0x90] sm:$0xf]
    %v2812 = vld [vmem:[#allocation5 + $0x94] sm:$0xf]
    %v2813 = vld [vmem:[#allocation5 + $0x98] sm:$0xf]
    %v2814 = vld [vmem:[#allocation5 + $0x9c] sm:$0xf]
    %v2815 = vld [vmem:[#allocation5 + $0xa0] sm:$0xf]
    %v2816 = vld [vmem:[#allocation5 + $0xa4] sm:$0xf]
    %v2817 = vld [vmem:[#allocation5 + $0xa8] sm:$0xf]
    %v2818 = vld [vmem:[#allocation5 + $0xac] sm:$0xf]
    %v2819 = vld [vmem:[#allocation5 + $0xb0] sm:$0xf]
    %v2820 = vld [vmem:[#allocation5 + $0xb4] sm:$0xf]
    %v2821 = vld [vmem:[#allocation5 + $0xb8] sm:$0xf]
    %v2822 = vld [vmem:[#allocation5 + $0xbc] sm:$0xf]
    %v2823 = vld [vmem:[%s45] sm:$0x1]
    %v2825 = vlaneseq
    %v2826 = vshrl.u32 %v2825, 7
    %v2827 = vsub.s32 0, %v2826
    %v2828 = vrot.slane %v2823, %v2827
    %v2878 = vunpack.c.l.b16 %v2775
    %v2879 = vunpack.c.l.b16 %v2776
    %v2880 = vunpack.c.l.b16 %v2777
    %v2881 = vunpack.c.l.b16 %v2778
    %v2882 = vunpack.c.l.b16 %v2779
    %v2883 = vunpack.c.l.b16 %v2780
    %v2884 = vunpack.c.l.b16 %v2781
    %v2885 = vunpack.c.l.b16 %v2782
    %v2886 = vunpack.c.l.b16 %v2783
    %v2887 = vunpack.c.l.b16 %v2784
    %v2888 = vunpack.c.l.b16 %v2785
    %v2889 = vunpack.c.l.b16 %v2786
    %v2890 = vunpack.c.l.b16 %v2787
    %v2891 = vunpack.c.l.b16 %v2788
    %v2892 = vunpack.c.l.b16 %v2789
    %v2893 = vunpack.c.l.b16 %v2790
    %v2894 = vunpack.c.l.b16 %v2791
    %v2895 = vunpack.c.l.b16 %v2792
    %v2896 = vunpack.c.l.b16 %v2793
    %v2897 = vunpack.c.l.b16 %v2794
    %v2898 = vunpack.c.l.b16 %v2795
    %v2899 = vunpack.c.l.b16 %v2796
    %v2900 = vunpack.c.l.b16 %v2797
    %v2901 = vunpack.c.l.b16 %v2798
    %v2902 = vunpack.c.l.b16 %v2799
    %v2903 = vunpack.c.l.b16 %v2800
    %v2904 = vunpack.c.l.b16 %v2801
    %v2905 = vunpack.c.l.b16 %v2802
    %v2906 = vunpack.c.l.b16 %v2803
    %v2907 = vunpack.c.l.b16 %v2804
    %v2908 = vunpack.c.l.b16 %v2805
    %v2909 = vunpack.c.l.b16 %v2806
    %v2910 = vunpack.c.l.b16 %v2807
    %v2911 = vunpack.c.l.b16 %v2808
    %v2912 = vunpack.c.l.b16 %v2809
    %v2913 = vunpack.c.l.b16 %v2810
    %v2914 = vunpack.c.l.b16 %v2811
    %v2915 = vunpack.c.l.b16 %v2812
    %v2916 = vunpack.c.l.b16 %v2813
    %v2917 = vunpack.c.l.b16 %v2814
    %v2918 = vunpack.c.l.b16 %v2815
    %v2919 = vunpack.c.l.b16 %v2816
    %v2920 = vunpack.c.l.b16 %v2817
    %v2921 = vunpack.c.l.b16 %v2818
    %v2922 = vunpack.c.l.b16 %v2819
    %v2923 = vunpack.c.l.b16 %v2820
    %v2924 = vunpack.c.l.b16 %v2821
    %v2925 = vunpack.c.l.b16 %v2822
    %v2926 = vpack.c.b16 %v2879, %v2878
    %v2927 = vpack.c.b16 %v2881, %v2880
    %v2928 = vpack.c.b16 %v2883, %v2882
    %v2929 = vpack.c.b16 %v2885, %v2884
    %v2930 = vpack.c.b16 %v2887, %v2886
    %v2931 = vpack.c.b16 %v2889, %v2888
    %v2932 = vpack.c.b16 %v2891, %v2890
    %v2933 = vpack.c.b16 %v2893, %v2892
    %v2934 = vpack.c.b16 %v2895, %v2894
    %v2935 = vpack.c.b16 %v2897, %v2896
    %v2936 = vpack.c.b16 %v2899, %v2898
    %v2937 = vpack.c.b16 %v2901, %v2900
    %v2938 = vpack.c.b16 %v2903, %v2902
    %v2939 = vpack.c.b16 %v2905, %v2904
    %v2940 = vpack.c.b16 %v2907, %v2906
    %v2941 = vpack.c.b16 %v2909, %v2908
    %v2942 = vpack.c.b16 %v2911, %v2910
    %v2943 = vpack.c.b16 %v2913, %v2912
    %v2944 = vpack.c.b16 %v2915, %v2914
    %v2945 = vpack.c.b16 %v2917, %v2916
    %v2946 = vpack.c.b16 %v2919, %v2918
    %v2947 = vpack.c.b16 %v2921, %v2920
    %v2948 = vpack.c.b16 %v2923, %v2922
    %v2949 = vpack.c.b16 %v2925, %v2924
    %2974 = vmatprep.subr.bf16.mxu0 0
    %2975 = vmatpush1.bf16.msra.mxu0 %v2926
    %2976 = vmatprep.subr.bf16.mxu0 0
    %2977 = vmatpush1.bf16.msra.mxu0 %v2927
    %2978 = vmatprep.subr.bf16.mxu0 0
    %2979 = vmatpush1.bf16.msra.mxu0 %v2928
    %2980 = vmatprep.subr.bf16.mxu0 0
    %2981 = vmatpush1.bf16.msra.mxu0 %v2929
    %2982 = vmatprep.subr.bf16.mxu0 0
    %2983 = vmatpush1.bf16.msra.mxu0 %v2930
    %2984 = vmatprep.subr.bf16.mxu0 0
    %2985 = vmatpush1.bf16.msra.mxu0 %v2931
    %2986 = vmatprep.subr.bf16.mxu0 0
    %2987 = vmatpush1.bf16.msra.mxu0 %v2932
    %2988 = vmatprep.subr.bf16.mxu0 0
    %2989 = vmatpush1.bf16.msra.mxu0 %v2933
    %2990 = vmatprep.subr.bf16.mxu0 0
    %2991 = vmatpush1.bf16.msra.mxu0 %v2934
    %2992 = vmatprep.subr.bf16.mxu0 0
    %2993 = vmatpush1.bf16.msra.mxu0 %v2935
    %2994 = vmatprep.subr.bf16.mxu0 0
    %2995 = vmatpush1.bf16.msra.mxu0 %v2936
    %2996 = vmatprep.subr.bf16.mxu0 0
    %2997 = vmatpush1.bf16.msra.mxu0 %v2937
    %2998 = vmatprep.subr.bf16.mxu0 0
    %2999 = vmatpush1.bf16.msra.mxu0 %v2938
    %3000 = vmatprep.subr.bf16.mxu0 0
    %3001 = vmatpush1.bf16.msra.mxu0 %v2939
    %3002 = vmatprep.subr.bf16.mxu0 0
    %3003 = vmatpush1.bf16.msra.mxu0 %v2940
    %3004 = vmatprep.subr.bf16.mxu0 0
    %3005 = vmatpush1.bf16.msra.mxu0 %v2941
    %3006 = vmatprep.mubr.bf16.mxu0 %v2773
    %3007 = vmatmul.mubr.bf16.gmra.mrb[0].mxu0 %v2772
    %v3008 = vpop.f32.mrb[0].mxu0
    %v3009 = vadd.f32 %v2828, %v3008
    %v3010 = vpop.f32.mrb[0].mxu0
    %v3011 = vpop.f32.mrb[0].mxu0
    %v3012 = vpop.f32.mrb[0].mxu0
    %3013 = vdwg.mxu0
    %3014 = vmatprep.subr.bf16.mxu0 0
    %3015 = vmatpush1.bf16.msra.mxu0 %v2942
    %3016 = vmatprep.subr.bf16.mxu0 0
    %3017 = vmatpush1.bf16.msra.mxu0 %v2943
    %3018 = vmatprep.subr.bf16.mxu0 0
    %3019 = vmatpush1.bf16.msra.mxu0 %v2944
    %3020 = vmatprep.subr.bf16.mxu0 0
    %3021 = vmatpush1.bf16.msra.mxu0 %v2945
    %3022 = vmatprep.subr.bf16.mxu0 0
    %3023 = vmatpush1.bf16.msra.mxu0 %v2946
    %3024 = vmatprep.subr.bf16.mxu0 0
    %3025 = vmatpush1.bf16.msra.mxu0 %v2947
    %3026 = vmatprep.subr.bf16.mxu0 0
    %3027 = vmatpush1.bf16.msra.mxu0 %v2948
    %3028 = vmatprep.subr.bf16.mxu0 0
    %3029 = vmatpush1.bf16.msra.mxu0 %v2949
    %3030 = vmatprep.subr.bf16.mxu0 0
    %3031 = vmatpush1.bf16.msra.mxu0 0
    %3032 = vmatprep.subr.bf16.mxu0 0
    %3033 = vmatpush1.bf16.msra.mxu0 0
    %3034 = vmatprep.subr.bf16.mxu0 0
    %3035 = vmatpush1.bf16.msra.mxu0 0
    %3036 = vmatprep.subr.bf16.mxu0 0
    %3037 = vmatpush1.bf16.msra.mxu0 0
    %3038 = vmatprep.subr.bf16.mxu0 0
    %3039 = vmatpush1.bf16.msra.mxu0 0
    %3040 = vmatprep.subr.bf16.mxu0 0
    %3041 = vmatpush1.bf16.msra.mxu0 0
    %3042 = vmatprep.subr.bf16.mxu0 0
    %3043 = vmatpush1.bf16.msra.mxu0 0
    %3044 = vmatprep.subr.bf16.mxu0 0
    %3045 = vmatpush1.bf16.msra.mxu0 0
    %3046 = vmatprep.mubr.bf16.mxu0 0
    %3047 = vmatmul.mubr.bf16.gmra.mrb[0].mxu0 %v2774
    %v3048 = vpop.f32.mrb[0].mxu0
    %v3049 = vadd.f32 %v3009, %v3048
    %v3050 = vpop.f32.mrb[0].mxu0
    %v3051 = vpop.f32.mrb[0].mxu0
    %v3052 = vpop.f32.mrb[0].mxu0
    %3053 = vdwg.mxu0
    %vm3054 = vcmask 1043456
    %v3055 = vsel %vm3054, %v3049, 0.0
    %v3056 = vrot.slane %v3055, 4
    %v3057 = vadd.f32 %v3055, %v3056
    %v3058 = vrot.slane %v3057, 2
    %v3059 = vadd.f32 %v3057, %v3058
    %v3060 = vrot.slane %v3059, 1
    %v3061 = vadd.f32 %v3059, %v3060
    %3063 = vrot.lane.b32.xlu0 %v3061, 64
    %v3064 = vpop.permute.xlu0 %3063
    %v3066 = vadd.f32 %v3061, %v3064
    %v3067 = vmul.f32 %v3066, 0.125
    %v3068 = vlaneseq
    %v3069 = vshrl.u32 %v3068, 7
    %v3070 = vsub.s32 0, %v3069
    %v3071 = vrot.slane %v3067, %v3070
    %v3072 = vsub.f32 %v3049, %v3071
    %v3073 = vmul.f32 %v3072, %v3072
    %v3074 = vsel %vm3054, %v3073, 0.0
    %v3075 = vrot.slane %v3074, 4
    %v3076 = vadd.f32 %v3074, %v3075
    %v3077 = vrot.slane %v3076, 2
    %v3078 = vadd.f32 %v3076, %v3077
    %v3079 = vrot.slane %v3078, 1
    %v3080 = vadd.f32 %v3078, %v3079
    %3082 = vrot.lane.b32.xlu0 %v3080, 64
    %v3083 = vpop.permute.xlu0 %3082
    %v3085 = vadd.f32 %v3080, %v3083
    %v3086 = vmul.f32 %v3085, 0.125
    %v3087 = vadd.f32 %v3086, 1e-05
    %v3088 = vrsqrt.pop %v3087
    %v3089 = vlaneseq
    %v3090 = vshrl.u32 %v3089, 7
    %v3091 = vsub.s32 0, %v3090
    %v3092 = vrot.slane %v3088, %v3091
    %v3093 = vmul.f32 %v3072, %v3092
    %v3094 = vld [vmem:[%s47] sm:$0x1]
    %v3096 = vlaneseq
    %v3097 = vshrl.u32 %v3096, 7
    %v3098 = vsub.s32 0, %v3097
    %v3099 = vrot.slane %v3094, %v3098
    %v3101 = vmul.f32 %v3093, %v3099
    %v3102 = vld [vmem:[%s49] sm:$0x1]
    %v3104 = vlaneseq
    %v3105 = vshrl.u32 %v3104, 7
    %v3106 = vsub.s32 0, %v3105
    %v3107 = vrot.slane %v3102, %v3106
    %v3109 = vadd.f32 %v3101, %v3107
    %3110 = vst [vmem:[%s57] sm:$0xf] %v3109
    %v3111 = vld [vmem:[%s57] ss:$2 sm:$0x3]
    %s3112 = scalar_lea.vmem %s57, 1
    %v3113 = vld [vmem:[%s3112] ss:$2 sm:$0x3]
    %v3114 = vmax.f32 %v3111, %v3113
    %3116 = vrot.lane.b32.xlu0 %v3114, 64
    %v3117 = vpop.permute.xlu0 %3116
    %v3119 = vmax.f32 %v3114, %v3117
    %vm3120 = vcmask 517120
    %3121 = vst.msk [vmem:[#allocation7] sm:$0x3] %vm3120, %v3119
    // Predicated region
    $region110: #{encoder_forward.1} parent=1 // pred_check
      _
    $region111: #{encoder_forward.1} parent=1 // pred_check_branch
      %3123 = sbr.rel (0) target = $region113
    $region112: #{encoder_forward.1} parent=1 // pred_region
      _
    $region113: #{encoder_forward.1} parent=1 // pred_fallthru
      _
    // Predicated region
    $region114: #{encoder_forward.1} parent=1 // pred_check
      _
    $region115: #{encoder_forward.1} parent=1 // pred_check_branch
      %3125 = sbr.rel (0) target = $region117
    $region116: #{encoder_forward.1} parent=1 // pred_region
      _
    $region117: #{encoder_forward.1} parent=1 // pred_fallthru
      _
    // Predicated region
    $region118: #{encoder_forward.1} parent=1 // pred_check
      _
    $region119: #{encoder_forward.1} parent=1 // pred_check_branch
      %3127 = sbr.rel (0) target = $region121
    $region120: #{encoder_forward.1} parent=1 // pred_region
      _
    $region121: #{encoder_forward.1} parent=1 // pred_fallthru
      _
    // Predicated region
    $region122: #{encoder_forward.1} parent=1 // pred_check
      _
    $region123: #{encoder_forward.1} parent=1 // pred_check_branch
      %3129 = sbr.rel (0) target = $region125
    $region124: #{encoder_forward.1} parent=1 // pred_region
      _
    $region125: #{encoder_forward.1} parent=1 // pred_fallthru
      _
    // Predicated region
    $region126: #{encoder_forward.1} parent=1 // pred_check
      _
    $region127: #{encoder_forward.1} parent=1 // pred_check_branch
      %3131 = sbr.rel (0) target = $region129
    $region128: #{encoder_forward.1} parent=1 // pred_region
      %s3133 = ssub.s32 32, 32
      %3134 = vsyncadd [#allocation4], %s3133
      %s3136 = sshll.u32 [#allocation7], 4
      %s3137 = int_to_ptr.vmem [resolvable:$true] %s3136
      %3139 = dma.vmem_to_hbm [thread:$0]  %s3137, 32, %s59, [#allocation4]
    $region129: #{encoder_forward.1} parent=1 // pred_fallthru
      _
    // Predicated region
    $region130: #{encoder_forward.1} parent=1 // pred_check
      _
    $region131: #{encoder_forward.1} parent=1 // pred_check_branch
      %3141 = sbr.rel (0) target = $region133
    $region132: #{encoder_forward.1} parent=1 // pred_region
      _
    $region133: #{encoder_forward.1} parent=1 // pred_fallthru
      _
    // Predicated region
    $region134: #{encoder_forward.1} parent=1 // pred_check
      _
    $region135: #{encoder_forward.1} parent=1 // pred_check_branch
      %3143 = sbr.rel (0) target = $region137
    $region136: #{encoder_forward.1} parent=1 // pred_region
      _
    $region137: #{encoder_forward.1} parent=1 // pred_fallthru
      _
    // Predicated region
    $region138: #{encoder_forward.1} parent=1 // pred_check
      _
    $region139: #{encoder_forward.1} parent=1 // pred_check_branch
      %3145 = sbr.rel (0) target = $region141
    $region140: #{encoder_forward.1} parent=1 // pred_region
      _
    $region141: #{encoder_forward.1} parent=1 // pred_fallthru
      _
    // Predicated region
    $region142: #{encoder_forward.1} parent=1 // pred_check
      _
    $region143: #{encoder_forward.1} parent=1 // pred_check_branch
      %3147 = sbr.rel (0) target = $region145
    $region144: #{encoder_forward.1} parent=1 // pred_region
      _
    $region145: #{encoder_forward.1} parent=1 // pred_fallthru
      _
    // Predicated region
    $region146: #{encoder_forward.1} parent=1 // pred_check
      _
    $region147: #{encoder_forward.1} parent=1 // pred_check_branch
      %3149 = sbr.rel (0) target = $region149
    $region148: #{encoder_forward.1} parent=1 // pred_region
      %3150 = dma.done [#allocation4], 32
    $region149: #{encoder_forward.1} parent=1 // pred_fallthru
      _
    %3151 = vsyncpa [#allocation3], 1
    %3152 = vsyncpa [#allocation6], 1
    %3153 = vsyncpa [#allocation4], 1

</llo_original>
